<compile_context>
chip_gen: v7x
topology: tpu7x:2x2x1
jax: 0.10.0
libtpu: 0.0.40
codegen_flags: <defaults>
</compile_context>

<pallas_src>
import numpy as np

import jax
import jax.numpy as jnp
from jax import lax
from jax.experimental import pallas as pl
from jax.experimental.pallas import tpu as pltpu


_WHOLE = pl.BlockSpec(memory_space=pltpu.MemorySpace.VMEM)  # full array resident in VMEM

# layer-1 padded grid: 30 rows x 32 cols = 960 flat positions (valid rows/cols 1..28)
_P1W, _P1N = 32, 960
_L1 = 892           # conv1 output span (flat-padded positions 33 .. 924)
_M1 = 859           # pool1 window-max span
# layer-2 padded grid: 16 x 16 = 256 flat positions (valid rows/cols 1..14)
_P2W, _P2N = 16, 256
_L2 = 222           # conv2 output span (flat-padded positions 17 .. 238)
_M2 = 205           # pool2 window-max span
_FPAD = 128         # per-channel padded feature width (49 real + 79 zeros)
_FLAT = 32 * _FPAD  # 4096


def _smallcnn_kernel(x_ref, w1_ref, b1_ref, w2_ref, b2_ref, s1_ref, s2_ref,
                     wfc1_ref, bfc1_ref, wfc2_ref, bfc2_ref, out_ref, fscr):
    f32 = jnp.float32

    # ---- conv1 (1 -> 16): 9 shifted VPU multiply-adds, channels on sublanes ----
    w1 = w1_ref[...]                                     # (16, 9)
    acc1 = jnp.zeros((16, _L1), f32)
    for k in range(9):
        kh, kw = k // 3, k % 3
        s = kh * _P1W + kw                               # shift in the flat-padded grid
        acc1 = acc1 + w1[:, k:k + 1] * x_ref[0, :, s:s + _L1]   # (16,1)*(1,892)
    y1 = acc1 + b1_ref[...]                              # (16, 892)

    # ---- pool1: 2x2 window max + (downsample, reorder, zero-pad) selection matmul ----
    m1 = jnp.maximum(jnp.maximum(y1[:, 0:_M1], y1[:, 1:1 + _M1]),
                     jnp.maximum(y1[:, _P1W:_P1W + _M1], y1[:, _P1W + 1:_P1W + 1 + _M1]))
    q1p = jnp.maximum(
        jnp.dot(m1, s1_ref[...], preferred_element_type=f32), 0.0)      # (16, 256)

    # ---- conv2 (16 -> 32): 9 accumulated MXU matmuls over shifted slices ----
    acc2 = jnp.zeros((32, _L2), f32)
    for k in range(9):
        kh, kw = k // 3, k % 3
        s = kh * _P2W + kw
        acc2 = acc2 + jnp.dot(w2_ref[k], q1p[:, s:s + _L2],
                              preferred_element_type=f32)                # (32, 222)
    y2 = acc2 + b2_ref[...]                              # (32, 222)

    # ---- pool2: window max + selection matmul into CHW feature layout (128-padded) ----
    m2 = jnp.maximum(jnp.maximum(y2[:, 0:_M2], y2[:, 1:1 + _M2]),
                     jnp.maximum(y2[:, _P2W:_P2W + _M2], y2[:, _P2W + 1:_P2W + 1 + _M2]))
    feat = jnp.maximum(
        jnp.dot(m2, s2_ref[...], preferred_element_type=f32), 0.0)      # (32, 128)

    # flatten channel-major into a lane-aligned (1, 4096) scratch (32 full-vreg stores)
    for c in range(32):
        fscr[:, _FPAD * c:_FPAD * (c + 1)] = feat[c:c + 1, :]

    # ---- fc1 + relu + fc2 ----
    h = jnp.maximum(
        jnp.dot(fscr[...], wfc1_ref[...], preferred_element_type=f32) + bfc1_ref[...],
        0.0)                                             # (1, 128)
    out = jnp.dot(h, wfc2_ref[...], preferred_element_type=f32) + bfc2_ref[...]  # (1, 10)
    out_ref[0] = out


# --------------------------- parameter preparation ---------------------------- #

def prepare_params(p):
    """One-time (outside jit) weight re-layouts + constant selection matrices."""
    f32 = jnp.float32
    w1c = p["w1"].reshape(16, 9).astype(f32)                       # [c, kh*3+kw]
    b1c = p["b1"].reshape(16, 1).astype(f32)
    w2m = jnp.transpose(p["w2"], (2, 3, 0, 1)).reshape(9, 32, 16).astype(f32)  # [k, co, ci]
    b2c = p["b2"].reshape(32, 1).astype(f32)

    # pool1 selection: window-max index 64i+2j -> padded-16x16-grid column (i+1)*16+(j+1)
    s1 = np.zeros((_M1, _P2N), np.float32)
    for i in range(14):
        for j in range(14):
            s1[64 * i + 2 * j, (i + 1) * 16 + (j + 1)] = 1.0

    # pool2 selection: window-max index 32i+2j -> per-channel feature column 7i+j
    s2 = np.zeros((_M2, _FPAD), np.float32)
    for i in range(7):
        for j in range(7):
            s2[32 * i + 2 * j, 7 * i + j] = 1.0

    # fc1 weights with torch's CHW flatten and the 128-lane channel padding folded in
    wfc1 = np.asarray(p["wfc1"], np.float32).reshape(128, 32, 49)   # [n, c, s]
    wfc1e = np.zeros((32, _FPAD, 128), np.float32)
    wfc1e[:, :49, :] = np.transpose(wfc1, (1, 2, 0))                # [c, s, n]
    wfc1e = wfc1e.reshape(_FLAT, 128)

    bfc1r = p["bfc1"].reshape(1, 128).astype(f32)
    wfc2t = jnp.transpose(p["wfc2"]).astype(f32)                    # (128, 10)
    bfc2r = p["bfc2"].reshape(1, 10).astype(f32)

    return (w1c, b1c, w2m, b2c, jnp.asarray(s1), jnp.asarray(s2),
            jnp.asarray(wfc1e), bfc1r, wfc2t, bfc2r)


# --------------------------------- forward ------------------------------------ #

@jax.jit
def small_cnn_forward(x_nchw, prep):
    B = x_nchw.shape[0]
    # flat-padded input: (B, 28, 28) -> pad to (B, 30, 32) -> (B, 1, 960)
    x = x_nchw.reshape(B, 28, 28)
    xp = jnp.pad(x, ((0, 0), (1, 1), (1, 3))).reshape(B, 1, _P1N)

    out = pl.pallas_call(
        _smallcnn_kernel,
        grid=(B,),
        in_specs=[pl.BlockSpec((1, 1, _P1N), lambda b: (b, 0, 0))] + [_WHOLE] * 10,
        out_specs=pl.BlockSpec((1, 1, 10), lambda b: (b, 0, 0)),
        out_shape=jax.ShapeDtypeStruct((B, 1, 10), jnp.float32),
        scratch_shapes=[pltpu.VMEM((1, _FLAT), jnp.float32)],
        compiler_params=pltpu.CompilerParams(dimension_semantics=("parallel",)),
    )(xp, *prep)
    return out.reshape(B, 10)


# ---------------------------- pure-JAX reference ------------------------------ #

def reference_forward(x_nchw, p):
    x = jnp.transpose(x_nchw, (0, 2, 3, 1))
    dn = ("NHWC", "HWIO", "NHWC")

    def conv_relu(z, w, b):
        y = lax.conv_general_dilated(z, jnp.transpose(w, (2, 3, 1, 0)),
                                     (1, 1), "SAME", dimension_numbers=dn)
        return jnp.maximum(y + b, 0.0)

    def pool(z):
        return lax.reduce_window(z, -jnp.inf, lax.max,
                                 (1, 2, 2, 1), (1, 2, 2, 1), "VALID")

    z = pool(conv_relu(x, p["w1"], p["b1"]))
    z = pool(conv_relu(z, p["w2"], p["b2"]))
    B = z.shape[0]
    feat = jnp.transpose(z, (0, 3, 1, 2)).reshape(B, -1)
    h = jnp.maximum(feat @ p["wfc1"].T + p["bfc1"], 0.0)
    return h @ p["wfc2"].T + p["bfc2"]


# ----------------------------------- main -------------------------------------- #

def make_params(key):
    ks = jax.random.split(key, 8)
    f32 = jnp.float32
    return {
        # torch conventions: conv (Cout, Cin, KH, KW), linear (out, in)
        "w1": 0.10 * jax.random.normal(ks[0], (16, 1, 3, 3), f32),
        "b1": 0.10 * jax.random.normal(ks[1], (16,), f32),
        "w2": 0.05 * jax.random.normal(ks[2], (32, 16, 3, 3), f32),
        "b2": 0.05 * jax.random.normal(ks[3], (32,), f32),
        "wfc1": 0.02 * jax.random.normal(ks[4], (128, 32 * 7 * 7), f32),
        "bfc1": 0.02 * jax.random.normal(ks[5], (128,), f32),
        "wfc2": 0.05 * jax.random.normal(ks[6], (10, 128), f32),
        "bfc2": 0.05 * jax.random.normal(ks[7], (10,), f32),
    }


if __name__ == "__main__":
    key = jax.random.PRNGKey(0)
    kp, kx = jax.random.split(key)
    params = make_params(kp)
    # Module requires 28x28 single-channel input (fc1 expects 32*7*7 features).
    x = jax.random.normal(kx, (2, 1, 28, 28), jnp.float32)

    prep = prepare_params(params)          # one-time weight re-layout, outside jit

    out = jax.block_until_ready(small_cnn_forward(x, prep))
    assert out.shape == (2, 10) and out.dtype == jnp.float32

    ref = jax.block_until_ready(jax.jit(reference_forward)(x, params))
    assert jnp.allclose(out, ref, rtol=1e-2, atol=1e-2), \
        f"max abs err {float(jnp.max(jnp.abs(out - ref)))}"

    print("KERNEL_OK")
</pallas_src>

<mosaic_0001>
module attributes {stable_mosaic.version = 11 : i64} {
  func.func @_smallcnn_kernel(%arg0: i32, %arg1: memref<1x1x960xf32, #tpu.memory_space<vmem>>, %arg2: memref<16x9xf32, #tpu.memory_space<vmem>>, %arg3: memref<16x1xf32, #tpu.memory_space<vmem>>, %arg4: memref<9x32x16xf32, #tpu.memory_space<vmem>>, %arg5: memref<32x1xf32, #tpu.memory_space<vmem>>, %arg6: memref<859x256xf32, #tpu.memory_space<vmem>>, %arg7: memref<205x128xf32, #tpu.memory_space<vmem>>, %arg8: memref<4096x128xf32, #tpu.memory_space<vmem>>, %arg9: memref<1x128xf32, #tpu.memory_space<vmem>>, %arg10: memref<128x10xf32, #tpu.memory_space<vmem>>, %arg11: memref<1x10xf32, #tpu.memory_space<vmem>>, %arg12: memref<1x1x10xf32, #tpu.memory_space<vmem>>, %arg13: memref<1x4096xf32, #tpu.memory_space<vmem>>) attributes {dimension_semantics = [#tpu.dimension_semantics<parallel>], iteration_bounds = array<i64: 2>, scalar_prefetch = 0 : i64, scratch_operands = 1 : i64, tpu.core_type = #tpu.core_type<tc>, window_params = [{transform_indices = @transform_0, window_bounds = array<i64: 1, 1, 960>}, {pipeline_mode = #tpu.pipeline_mode<synchronous>, transform_indices = @transform_1, window_bounds = array<i64: 16, 9>}, {pipeline_mode = #tpu.pipeline_mode<synchronous>, transform_indices = @transform_2, window_bounds = array<i64: 16, 1>}, {pipeline_mode = #tpu.pipeline_mode<synchronous>, transform_indices = @transform_3, window_bounds = array<i64: 9, 32, 16>}, {pipeline_mode = #tpu.pipeline_mode<synchronous>, transform_indices = @transform_4, window_bounds = array<i64: 32, 1>}, {pipeline_mode = #tpu.pipeline_mode<synchronous>, transform_indices = @transform_5, window_bounds = array<i64: 859, 256>}, {pipeline_mode = #tpu.pipeline_mode<synchronous>, transform_indices = @transform_6, window_bounds = array<i64: 205, 128>}, {pipeline_mode = #tpu.pipeline_mode<synchronous>, transform_indices = @transform_7, window_bounds = array<i64: 4096, 128>}, {pipeline_mode = #tpu.pipeline_mode<synchronous>, transform_indices = @transform_8, window_bounds = array<i64: 1, 128>}, {pipeline_mode = #tpu.pipeline_mode<synchronous>, transform_indices = @transform_9, window_bounds = array<i64: 128, 10>}, {pipeline_mode = #tpu.pipeline_mode<synchronous>, transform_indices = @transform_10, window_bounds = array<i64: 1, 10>}, {transform_indices = @transform_11, window_bounds = array<i64: 1, 1, 10>}]} {
    %c0 = arith.constant 0 : index
    %c0_0 = arith.constant 0 : index
    %0 = vector.load %arg2[%c0, %c0_0] : memref<16x9xf32, #tpu.memory_space<vmem>>, vector<16x9xf32>
    %cst = arith.constant 0.000000e+00 : f32
    %1 = vector.broadcast %cst : f32 to vector<16x892xf32>
    %2 = vector.extract_strided_slice %0 {offsets = [0, 0], sizes = [16, 1], strides = [1, 1]} : vector<16x9xf32> to vector<16x1xf32>
    %c0_1 = arith.constant 0 : index
    %c0_2 = arith.constant 0 : index
    %c0_3 = arith.constant 0 : index
    %3 = vector.load %arg1[%c0_1, %c0_2, %c0_3] : memref<1x1x960xf32, #tpu.memory_space<vmem>>, vector<1x1x892xf32>
    %4 = vector.shape_cast %3 : vector<1x1x892xf32> to vector<1x892xf32>
    %5 = vector.broadcast %2 : vector<16x1xf32> to vector<16x892xf32>
    %6 = vector.broadcast %4 : vector<1x892xf32> to vector<16x892xf32>
    %7 = arith.mulf %5, %6 : vector<16x892xf32>
    %8 = arith.addf %1, %7 : vector<16x892xf32>
    %9 = vector.extract_strided_slice %0 {offsets = [0, 1], sizes = [16, 1], strides = [1, 1]} : vector<16x9xf32> to vector<16x1xf32>
    %c0_4 = arith.constant 0 : index
    %c0_5 = arith.constant 0 : index
    %c1 = arith.constant 1 : index
    %10 = vector.load %arg1[%c0_4, %c0_5, %c1] : memref<1x1x960xf32, #tpu.memory_space<vmem>>, vector<1x1x892xf32>
    %11 = vector.shape_cast %10 : vector<1x1x892xf32> to vector<1x892xf32>
    %12 = vector.broadcast %9 : vector<16x1xf32> to vector<16x892xf32>
    %13 = vector.broadcast %11 : vector<1x892xf32> to vector<16x892xf32>
    %14 = arith.mulf %12, %13 : vector<16x892xf32>
    %15 = arith.addf %8, %14 : vector<16x892xf32>
    %16 = vector.extract_strided_slice %0 {offsets = [0, 2], sizes = [16, 1], strides = [1, 1]} : vector<16x9xf32> to vector<16x1xf32>
    %c0_6 = arith.constant 0 : index
    %c0_7 = arith.constant 0 : index
    %c2 = arith.constant 2 : index
    %17 = vector.load %arg1[%c0_6, %c0_7, %c2] : memref<1x1x960xf32, #tpu.memory_space<vmem>>, vector<1x1x892xf32>
    %18 = vector.shape_cast %17 : vector<1x1x892xf32> to vector<1x892xf32>
    %19 = vector.broadcast %16 : vector<16x1xf32> to vector<16x892xf32>
    %20 = vector.broadcast %18 : vector<1x892xf32> to vector<16x892xf32>
    %21 = arith.mulf %19, %20 : vector<16x892xf32>
    %22 = arith.addf %15, %21 : vector<16x892xf32>
    %23 = vector.extract_strided_slice %0 {offsets = [0, 3], sizes = [16, 1], strides = [1, 1]} : vector<16x9xf32> to vector<16x1xf32>
    %c0_8 = arith.constant 0 : index
    %c0_9 = arith.constant 0 : index
    %c32 = arith.constant 32 : index
    %24 = vector.load %arg1[%c0_8, %c0_9, %c32] : memref<1x1x960xf32, #tpu.memory_space<vmem>>, vector<1x1x892xf32>
    %25 = vector.shape_cast %24 : vector<1x1x892xf32> to vector<1x892xf32>
    %26 = vector.broadcast %23 : vector<16x1xf32> to vector<16x892xf32>
    %27 = vector.broadcast %25 : vector<1x892xf32> to vector<16x892xf32>
    %28 = arith.mulf %26, %27 : vector<16x892xf32>
    %29 = arith.addf %22, %28 : vector<16x892xf32>
    %30 = vector.extract_strided_slice %0 {offsets = [0, 4], sizes = [16, 1], strides = [1, 1]} : vector<16x9xf32> to vector<16x1xf32>
    %c0_10 = arith.constant 0 : index
    %c0_11 = arith.constant 0 : index
    %c33 = arith.constant 33 : index
    %31 = vector.load %arg1[%c0_10, %c0_11, %c33] : memref<1x1x960xf32, #tpu.memory_space<vmem>>, vector<1x1x892xf32>
    %32 = vector.shape_cast %31 : vector<1x1x892xf32> to vector<1x892xf32>
    %33 = vector.broadcast %30 : vector<16x1xf32> to vector<16x892xf32>
    %34 = vector.broadcast %32 : vector<1x892xf32> to vector<16x892xf32>
    %35 = arith.mulf %33, %34 : vector<16x892xf32>
    %36 = arith.addf %29, %35 : vector<16x892xf32>
    %37 = vector.extract_strided_slice %0 {offsets = [0, 5], sizes = [16, 1], strides = [1, 1]} : vector<16x9xf32> to vector<16x1xf32>
    %c0_12 = arith.constant 0 : index
    %c0_13 = arith.constant 0 : index
    %c34 = arith.constant 34 : index
    %38 = vector.load %arg1[%c0_12, %c0_13, %c34] : memref<1x1x960xf32, #tpu.memory_space<vmem>>, vector<1x1x892xf32>
    %39 = vector.shape_cast %38 : vector<1x1x892xf32> to vector<1x892xf32>
    %40 = vector.broadcast %37 : vector<16x1xf32> to vector<16x892xf32>
    %41 = vector.broadcast %39 : vector<1x892xf32> to vector<16x892xf32>
    %42 = arith.mulf %40, %41 : vector<16x892xf32>
    %43 = arith.addf %36, %42 : vector<16x892xf32>
    %44 = vector.extract_strided_slice %0 {offsets = [0, 6], sizes = [16, 1], strides = [1, 1]} : vector<16x9xf32> to vector<16x1xf32>
    %c0_14 = arith.constant 0 : index
    %c0_15 = arith.constant 0 : index
    %c64 = arith.constant 64 : index
    %45 = vector.load %arg1[%c0_14, %c0_15, %c64] : memref<1x1x960xf32, #tpu.memory_space<vmem>>, vector<1x1x892xf32>
    %46 = vector.shape_cast %45 : vector<1x1x892xf32> to vector<1x892xf32>
    %47 = vector.broadcast %44 : vector<16x1xf32> to vector<16x892xf32>
    %48 = vector.broadcast %46 : vector<1x892xf32> to vector<16x892xf32>
    %49 = arith.mulf %47, %48 : vector<16x892xf32>
    %50 = arith.addf %43, %49 : vector<16x892xf32>
    %51 = vector.extract_strided_slice %0 {offsets = [0, 7], sizes = [16, 1], strides = [1, 1]} : vector<16x9xf32> to vector<16x1xf32>
    %c0_16 = arith.constant 0 : index
    %c0_17 = arith.constant 0 : index
    %c65 = arith.constant 65 : index
    %52 = vector.load %arg1[%c0_16, %c0_17, %c65] : memref<1x1x960xf32, #tpu.memory_space<vmem>>, vector<1x1x892xf32>
    %53 = vector.shape_cast %52 : vector<1x1x892xf32> to vector<1x892xf32>
    %54 = vector.broadcast %51 : vector<16x1xf32> to vector<16x892xf32>
    %55 = vector.broadcast %53 : vector<1x892xf32> to vector<16x892xf32>
    %56 = arith.mulf %54, %55 : vector<16x892xf32>
    %57 = arith.addf %50, %56 : vector<16x892xf32>
    %58 = vector.extract_strided_slice %0 {offsets = [0, 8], sizes = [16, 1], strides = [1, 1]} : vector<16x9xf32> to vector<16x1xf32>
    %c0_18 = arith.constant 0 : index
    %c0_19 = arith.constant 0 : index
    %c66 = arith.constant 66 : index
    %59 = vector.load %arg1[%c0_18, %c0_19, %c66] : memref<1x1x960xf32, #tpu.memory_space<vmem>>, vector<1x1x892xf32>
    %60 = vector.shape_cast %59 : vector<1x1x892xf32> to vector<1x892xf32>
    %61 = vector.broadcast %58 : vector<16x1xf32> to vector<16x892xf32>
    %62 = vector.broadcast %60 : vector<1x892xf32> to vector<16x892xf32>
    %63 = arith.mulf %61, %62 : vector<16x892xf32>
    %64 = arith.addf %57, %63 : vector<16x892xf32>
    %c0_20 = arith.constant 0 : index
    %c0_21 = arith.constant 0 : index
    %65 = vector.load %arg3[%c0_20, %c0_21] : memref<16x1xf32, #tpu.memory_space<vmem>>, vector<16x1xf32>
    %66 = vector.broadcast %65 : vector<16x1xf32> to vector<16x892xf32>
    %67 = arith.addf %64, %66 : vector<16x892xf32>
    %68 = vector.extract_strided_slice %67 {offsets = [0, 0], sizes = [16, 859], strides = [1, 1]} : vector<16x892xf32> to vector<16x859xf32>
    %69 = vector.extract_strided_slice %67 {offsets = [0, 1], sizes = [16, 859], strides = [1, 1]} : vector<16x892xf32> to vector<16x859xf32>
    %70 = arith.maximumf %68, %69 : vector<16x859xf32>
    %71 = vector.extract_strided_slice %67 {offsets = [0, 32], sizes = [16, 859], strides = [1, 1]} : vector<16x892xf32> to vector<16x859xf32>
    %72 = vector.extract_strided_slice %67 {offsets = [0, 33], sizes = [16, 859], strides = [1, 1]} : vector<16x892xf32> to vector<16x859xf32>
    %73 = arith.maximumf %71, %72 : vector<16x859xf32>
    %74 = arith.maximumf %70, %73 : vector<16x859xf32>
    %c0_22 = arith.constant 0 : index
    %c0_23 = arith.constant 0 : index
    %75 = vector.load %arg6[%c0_22, %c0_23] : memref<859x256xf32, #tpu.memory_space<vmem>>, vector<859x256xf32>
    %cst_24 = arith.constant dense<0.000000e+00> : vector<16x256xf32>
    %76 = tpu.matmul %74, %75, %cst_24 {dimension_numbers = #tpu.dot_dimension_numbers<[1], [0], [0], [1], [0, 0, 1, 1], [], []>} : vector<16x859xf32>, vector<859x256xf32>, vector<16x256xf32> -> vector<16x256xf32>
    %cst_25 = arith.constant 0.000000e+00 : f32
    %77 = vector.broadcast %cst_25 : f32 to vector<16x256xf32>
    %78 = arith.maximumf %76, %77 : vector<16x256xf32>
    %cst_26 = arith.constant 0.000000e+00 : f32
    %79 = vector.broadcast %cst_26 : f32 to vector<32x222xf32>
    %c0_27 = arith.constant 0 : index
    %c0_28 = arith.constant 0 : index
    %c0_29 = arith.constant 0 : index
    %80 = vector.load %arg4[%c0_27, %c0_28, %c0_29] : memref<9x32x16xf32, #tpu.memory_space<vmem>>, vector<1x32x16xf32>
    %81 = vector.shape_cast %80 : vector<1x32x16xf32> to vector<32x16xf32>
    %82 = vector.extract_strided_slice %78 {offsets = [0, 0], sizes = [16, 222], strides = [1, 1]} : vector<16x256xf32> to vector<16x222xf32>
    %cst_30 = arith.constant dense<0.000000e+00> : vector<32x222xf32>
    %83 = tpu.matmul %81, %82, %cst_30 {dimension_numbers = #tpu.dot_dimension_numbers<[1], [0], [0], [1], [0, 0, 1, 1], [], []>} : vector<32x16xf32>, vector<16x222xf32>, vector<32x222xf32> -> vector<32x222xf32>
    %84 = arith.addf %79, %83 : vector<32x222xf32>
    %c1_31 = arith.constant 1 : index
    %c0_32 = arith.constant 0 : index
    %c0_33 = arith.constant 0 : index
    %85 = vector.load %arg4[%c1_31, %c0_32, %c0_33] : memref<9x32x16xf32, #tpu.memory_space<vmem>>, vector<1x32x16xf32>
    %86 = vector.shape_cast %85 : vector<1x32x16xf32> to vector<32x16xf32>
    %87 = vector.extract_strided_slice %78 {offsets = [0, 1], sizes = [16, 222], strides = [1, 1]} : vector<16x256xf32> to vector<16x222xf32>
    %cst_34 = arith.constant dense<0.000000e+00> : vector<32x222xf32>
    %88 = tpu.matmul %86, %87, %cst_34 {dimension_numbers = #tpu.dot_dimension_numbers<[1], [0], [0], [1], [0, 0, 1, 1], [], []>} : vector<32x16xf32>, vector<16x222xf32>, vector<32x222xf32> -> vector<32x222xf32>
    %89 = arith.addf %84, %88 : vector<32x222xf32>
    %c2_35 = arith.constant 2 : index
    %c0_36 = arith.constant 0 : index
    %c0_37 = arith.constant 0 : index
    %90 = vector.load %arg4[%c2_35, %c0_36, %c0_37] : memref<9x32x16xf32, #tpu.memory_space<vmem>>, vector<1x32x16xf32>
    %91 = vector.shape_cast %90 : vector<1x32x16xf32> to vector<32x16xf32>
    %92 = vector.extract_strided_slice %78 {offsets = [0, 2], sizes = [16, 222], strides = [1, 1]} : vector<16x256xf32> to vector<16x222xf32>
    %cst_38 = arith.constant dense<0.000000e+00> : vector<32x222xf32>
    %93 = tpu.matmul %91, %92, %cst_38 {dimension_numbers = #tpu.dot_dimension_numbers<[1], [0], [0], [1], [0, 0, 1, 1], [], []>} : vector<32x16xf32>, vector<16x222xf32>, vector<32x222xf32> -> vector<32x222xf32>
    %94 = arith.addf %89, %93 : vector<32x222xf32>
    %c3 = arith.constant 3 : index
    %c0_39 = arith.constant 0 : index
    %c0_40 = arith.constant 0 : index
    %95 = vector.load %arg4[%c3, %c0_39, %c0_40] : memref<9x32x16xf32, #tpu.memory_space<vmem>>, vector<1x32x16xf32>
    %96 = vector.shape_cast %95 : vector<1x32x16xf32> to vector<32x16xf32>
    %97 = vector.extract_strided_slice %78 {offsets = [0, 16], sizes = [16, 222], strides = [1, 1]} : vector<16x256xf32> to vector<16x222xf32>
    %cst_41 = arith.constant dense<0.000000e+00> : vector<32x222xf32>
    %98 = tpu.matmul %96, %97, %cst_41 {dimension_numbers = #tpu.dot_dimension_numbers<[1], [0], [0], [1], [0, 0, 1, 1], [], []>} : vector<32x16xf32>, vector<16x222xf32>, vector<32x222xf32> -> vector<32x222xf32>
    %99 = arith.addf %94, %98 : vector<32x222xf32>
    %c4 = arith.constant 4 : index
    %c0_42 = arith.constant 0 : index
    %c0_43 = arith.constant 0 : index
    %100 = vector.load %arg4[%c4, %c0_42, %c0_43] : memref<9x32x16xf32, #tpu.memory_space<vmem>>, vector<1x32x16xf32>
    %101 = vector.shape_cast %100 : vector<1x32x16xf32> to vector<32x16xf32>
    %102 = vector.extract_strided_slice %78 {offsets = [0, 17], sizes = [16, 222], strides = [1, 1]} : vector<16x256xf32> to vector<16x222xf32>
    %cst_44 = arith.constant dense<0.000000e+00> : vector<32x222xf32>
    %103 = tpu.matmul %101, %102, %cst_44 {dimension_numbers = #tpu.dot_dimension_numbers<[1], [0], [0], [1], [0, 0, 1, 1], [], []>} : vector<32x16xf32>, vector<16x222xf32>, vector<32x222xf32> -> vector<32x222xf32>
    %104 = arith.addf %99, %103 : vector<32x222xf32>
    %c5 = arith.constant 5 : index
    %c0_45 = arith.constant 0 : index
    %c0_46 = arith.constant 0 : index
    %105 = vector.load %arg4[%c5, %c0_45, %c0_46] : memref<9x32x16xf32, #tpu.memory_space<vmem>>, vector<1x32x16xf32>
    %106 = vector.shape_cast %105 : vector<1x32x16xf32> to vector<32x16xf32>
    %107 = vector.extract_strided_slice %78 {offsets = [0, 18], sizes = [16, 222], strides = [1, 1]} : vector<16x256xf32> to vector<16x222xf32>
    %cst_47 = arith.constant dense<0.000000e+00> : vector<32x222xf32>
    %108 = tpu.matmul %106, %107, %cst_47 {dimension_numbers = #tpu.dot_dimension_numbers<[1], [0], [0], [1], [0, 0, 1, 1], [], []>} : vector<32x16xf32>, vector<16x222xf32>, vector<32x222xf32> -> vector<32x222xf32>
    %109 = arith.addf %104, %108 : vector<32x222xf32>
    %c6 = arith.constant 6 : index
    %c0_48 = arith.constant 0 : index
    %c0_49 = arith.constant 0 : index
    %110 = vector.load %arg4[%c6, %c0_48, %c0_49] : memref<9x32x16xf32, #tpu.memory_space<vmem>>, vector<1x32x16xf32>
    %111 = vector.shape_cast %110 : vector<1x32x16xf32> to vector<32x16xf32>
    %112 = vector.extract_strided_slice %78 {offsets = [0, 32], sizes = [16, 222], strides = [1, 1]} : vector<16x256xf32> to vector<16x222xf32>
    %cst_50 = arith.constant dense<0.000000e+00> : vector<32x222xf32>
    %113 = tpu.matmul %111, %112, %cst_50 {dimension_numbers = #tpu.dot_dimension_numbers<[1], [0], [0], [1], [0, 0, 1, 1], [], []>} : vector<32x16xf32>, vector<16x222xf32>, vector<32x222xf32> -> vector<32x222xf32>
    %114 = arith.addf %109, %113 : vector<32x222xf32>
    %c7 = arith.constant 7 : index
    %c0_51 = arith.constant 0 : index
    %c0_52 = arith.constant 0 : index
    %115 = vector.load %arg4[%c7, %c0_51, %c0_52] : memref<9x32x16xf32, #tpu.memory_space<vmem>>, vector<1x32x16xf32>
    %116 = vector.shape_cast %115 : vector<1x32x16xf32> to vector<32x16xf32>
    %117 = vector.extract_strided_slice %78 {offsets = [0, 33], sizes = [16, 222], strides = [1, 1]} : vector<16x256xf32> to vector<16x222xf32>
    %cst_53 = arith.constant dense<0.000000e+00> : vector<32x222xf32>
    %118 = tpu.matmul %116, %117, %cst_53 {dimension_numbers = #tpu.dot_dimension_numbers<[1], [0], [0], [1], [0, 0, 1, 1], [], []>} : vector<32x16xf32>, vector<16x222xf32>, vector<32x222xf32> -> vector<32x222xf32>
    %119 = arith.addf %114, %118 : vector<32x222xf32>
    %c8 = arith.constant 8 : index
    %c0_54 = arith.constant 0 : index
    %c0_55 = arith.constant 0 : index
    %120 = vector.load %arg4[%c8, %c0_54, %c0_55] : memref<9x32x16xf32, #tpu.memory_space<vmem>>, vector<1x32x16xf32>
    %121 = vector.shape_cast %120 : vector<1x32x16xf32> to vector<32x16xf32>
    %122 = vector.extract_strided_slice %78 {offsets = [0, 34], sizes = [16, 222], strides = [1, 1]} : vector<16x256xf32> to vector<16x222xf32>
    %cst_56 = arith.constant dense<0.000000e+00> : vector<32x222xf32>
    %123 = tpu.matmul %121, %122, %cst_56 {dimension_numbers = #tpu.dot_dimension_numbers<[1], [0], [0], [1], [0, 0, 1, 1], [], []>} : vector<32x16xf32>, vector<16x222xf32>, vector<32x222xf32> -> vector<32x222xf32>
    %124 = arith.addf %119, %123 : vector<32x222xf32>
    %c0_57 = arith.constant 0 : index
    %c0_58 = arith.constant 0 : index
    %125 = vector.load %arg5[%c0_57, %c0_58] : memref<32x1xf32, #tpu.memory_space<vmem>>, vector<32x1xf32>
    %126 = vector.broadcast %125 : vector<32x1xf32> to vector<32x222xf32>
    %127 = arith.addf %124, %126 : vector<32x222xf32>
    %128 = vector.extract_strided_slice %127 {offsets = [0, 0], sizes = [32, 205], strides = [1, 1]} : vector<32x222xf32> to vector<32x205xf32>
    %129 = vector.extract_strided_slice %127 {offsets = [0, 1], sizes = [32, 205], strides = [1, 1]} : vector<32x222xf32> to vector<32x205xf32>
    %130 = arith.maximumf %128, %129 : vector<32x205xf32>
    %131 = vector.extract_strided_slice %127 {offsets = [0, 16], sizes = [32, 205], strides = [1, 1]} : vector<32x222xf32> to vector<32x205xf32>
    %132 = vector.extract_strided_slice %127 {offsets = [0, 17], sizes = [32, 205], strides = [1, 1]} : vector<32x222xf32> to vector<32x205xf32>
    %133 = arith.maximumf %131, %132 : vector<32x205xf32>
    %134 = arith.maximumf %130, %133 : vector<32x205xf32>
    %c0_59 = arith.constant 0 : index
    %c0_60 = arith.constant 0 : index
    %135 = vector.load %arg7[%c0_59, %c0_60] : memref<205x128xf32, #tpu.memory_space<vmem>>, vector<205x128xf32>
    %cst_61 = arith.constant dense<0.000000e+00> : vector<32x128xf32>
    %136 = tpu.matmul %134, %135, %cst_61 {dimension_numbers = #tpu.dot_dimension_numbers<[1], [0], [0], [1], [0, 0, 1, 1], [], []>} : vector<32x205xf32>, vector<205x128xf32>, vector<32x128xf32> -> vector<32x128xf32>
    %cst_62 = arith.constant 0.000000e+00 : f32
    %137 = vector.broadcast %cst_62 : f32 to vector<32x128xf32>
    %138 = arith.maximumf %136, %137 : vector<32x128xf32>
    %139 = vector.extract_strided_slice %138 {offsets = [0, 0], sizes = [1, 128], strides = [1, 1]} : vector<32x128xf32> to vector<1x128xf32>
    %c0_63 = arith.constant 0 : index
    %c0_64 = arith.constant 0 : index
    %140 = vector.load %arg13[%c0_63, %c0_64] : memref<1x4096xf32, #tpu.memory_space<vmem>>, vector<1x128xf32>
    tpu.vector_store %arg13[%c0_63, %c0_64], %139 {strides = array<i32>} : memref<1x4096xf32, #tpu.memory_space<vmem>>, vector<1x128xf32>,
    %141 = vector.extract_strided_slice %138 {offsets = [1, 0], sizes = [1, 128], strides = [1, 1]} : vector<32x128xf32> to vector<1x128xf32>
    %c0_65 = arith.constant 0 : index
    %c128 = arith.constant 128 : index
    %142 = vector.load %arg13[%c0_65, %c128] : memref<1x4096xf32, #tpu.memory_space<vmem>>, vector<1x128xf32>
    tpu.vector_store %arg13[%c0_65, %c128], %141 {strides = array<i32>} : memref<1x4096xf32, #tpu.memory_space<vmem>>, vector<1x128xf32>,
    %143 = vector.extract_strided_slice %138 {offsets = [2, 0], sizes = [1, 128], strides = [1, 1]} : vector<32x128xf32> to vector<1x128xf32>
    %c0_66 = arith.constant 0 : index
    %c256 = arith.constant 256 : index
    %144 = vector.load %arg13[%c0_66, %c256] : memref<1x4096xf32, #tpu.memory_space<vmem>>, vector<1x128xf32>
    tpu.vector_store %arg13[%c0_66, %c256], %143 {strides = array<i32>} : memref<1x4096xf32, #tpu.memory_space<vmem>>, vector<1x128xf32>,
    %145 = vector.extract_strided_slice %138 {offsets = [3, 0], sizes = [1, 128], strides = [1, 1]} : vector<32x128xf32> to vector<1x128xf32>
    %c0_67 = arith.constant 0 : index
    %c384 = arith.constant 384 : index
    %146 = vector.load %arg13[%c0_67, %c384] : memref<1x4096xf32, #tpu.memory_space<vmem>>, vector<1x128xf32>
    tpu.vector_store %arg13[%c0_67, %c384], %145 {strides = array<i32>} : memref<1x4096xf32, #tpu.memory_space<vmem>>, vector<1x128xf32>,
    %147 = vector.extract_strided_slice %138 {offsets = [4, 0], sizes = [1, 128], strides = [1, 1]} : vector<32x128xf32> to vector<1x128xf32>
    %c0_68 = arith.constant 0 : index
    %c512 = arith.constant 512 : index
    %148 = vector.load %arg13[%c0_68, %c512] : memref<1x4096xf32, #tpu.memory_space<vmem>>, vector<1x128xf32>
    tpu.vector_store %arg13[%c0_68, %c512], %147 {strides = array<i32>} : memref<1x4096xf32, #tpu.memory_space<vmem>>, vector<1x128xf32>,
    %149 = vector.extract_strided_slice %138 {offsets = [5, 0], sizes = [1, 128], strides = [1, 1]} : vector<32x128xf32> to vector<1x128xf32>
    %c0_69 = arith.constant 0 : index
    %c640 = arith.constant 640 : index
    %150 = vector.load %arg13[%c0_69, %c640] : memref<1x4096xf32, #tpu.memory_space<vmem>>, vector<1x128xf32>
    tpu.vector_store %arg13[%c0_69, %c640], %149 {strides = array<i32>} : memref<1x4096xf32, #tpu.memory_space<vmem>>, vector<1x128xf32>,
    %151 = vector.extract_strided_slice %138 {offsets = [6, 0], sizes = [1, 128], strides = [1, 1]} : vector<32x128xf32> to vector<1x128xf32>
    %c0_70 = arith.constant 0 : index
    %c768 = arith.constant 768 : index
    %152 = vector.load %arg13[%c0_70, %c768] : memref<1x4096xf32, #tpu.memory_space<vmem>>, vector<1x128xf32>
    tpu.vector_store %arg13[%c0_70, %c768], %151 {strides = array<i32>} : memref<1x4096xf32, #tpu.memory_space<vmem>>, vector<1x128xf32>,
    %153 = vector.extract_strided_slice %138 {offsets = [7, 0], sizes = [1, 128], strides = [1, 1]} : vector<32x128xf32> to vector<1x128xf32>
    %c0_71 = arith.constant 0 : index
    %c896 = arith.constant 896 : index
    %154 = vector.load %arg13[%c0_71, %c896] : memref<1x4096xf32, #tpu.memory_space<vmem>>, vector<1x128xf32>
    tpu.vector_store %arg13[%c0_71, %c896], %153 {strides = array<i32>} : memref<1x4096xf32, #tpu.memory_space<vmem>>, vector<1x128xf32>,
    %155 = vector.extract_strided_slice %138 {offsets = [8, 0], sizes = [1, 128], strides = [1, 1]} : vector<32x128xf32> to vector<1x128xf32>
    %c0_72 = arith.constant 0 : index
    %c1024 = arith.constant 1024 : index
    %156 = vector.load %arg13[%c0_72, %c1024] : memref<1x4096xf32, #tpu.memory_space<vmem>>, vector<1x128xf32>
    tpu.vector_store %arg13[%c0_72, %c1024], %155 {strides = array<i32>} : memref<1x4096xf32, #tpu.memory_space<vmem>>, vector<1x128xf32>,
    %157 = vector.extract_strided_slice %138 {offsets = [9, 0], sizes = [1, 128], strides = [1, 1]} : vector<32x128xf32> to vector<1x128xf32>
    %c0_73 = arith.constant 0 : index
    %c1152 = arith.constant 1152 : index
    %158 = vector.load %arg13[%c0_73, %c1152] : memref<1x4096xf32, #tpu.memory_space<vmem>>, vector<1x128xf32>
    tpu.vector_store %arg13[%c0_73, %c1152], %157 {strides = array<i32>} : memref<1x4096xf32, #tpu.memory_space<vmem>>, vector<1x128xf32>,
    %159 = vector.extract_strided_slice %138 {offsets = [10, 0], sizes = [1, 128], strides = [1, 1]} : vector<32x128xf32> to vector<1x128xf32>
    %c0_74 = arith.constant 0 : index
    %c1280 = arith.constant 1280 : index
    %160 = vector.load %arg13[%c0_74, %c1280] : memref<1x4096xf32, #tpu.memory_space<vmem>>, vector<1x128xf32>
    tpu.vector_store %arg13[%c0_74, %c1280], %159 {strides = array<i32>} : memref<1x4096xf32, #tpu.memory_space<vmem>>, vector<1x128xf32>,
    %161 = vector.extract_strided_slice %138 {offsets = [11, 0], sizes = [1, 128], strides = [1, 1]} : vector<32x128xf32> to vector<1x128xf32>
    %c0_75 = arith.constant 0 : index
    %c1408 = arith.constant 1408 : index
    %162 = vector.load %arg13[%c0_75, %c1408] : memref<1x4096xf32, #tpu.memory_space<vmem>>, vector<1x128xf32>
    tpu.vector_store %arg13[%c0_75, %c1408], %161 {strides = array<i32>} : memref<1x4096xf32, #tpu.memory_space<vmem>>, vector<1x128xf32>,
    %163 = vector.extract_strided_slice %138 {offsets = [12, 0], sizes = [1, 128], strides = [1, 1]} : vector<32x128xf32> to vector<1x128xf32>
    %c0_76 = arith.constant 0 : index
    %c1536 = arith.constant 1536 : index
    %164 = vector.load %arg13[%c0_76, %c1536] : memref<1x4096xf32, #tpu.memory_space<vmem>>, vector<1x128xf32>
    tpu.vector_store %arg13[%c0_76, %c1536], %163 {strides = array<i32>} : memref<1x4096xf32, #tpu.memory_space<vmem>>, vector<1x128xf32>,
    %165 = vector.extract_strided_slice %138 {offsets = [13, 0], sizes = [1, 128], strides = [1, 1]} : vector<32x128xf32> to vector<1x128xf32>
    %c0_77 = arith.constant 0 : index
    %c1664 = arith.constant 1664 : index
    %166 = vector.load %arg13[%c0_77, %c1664] : memref<1x4096xf32, #tpu.memory_space<vmem>>, vector<1x128xf32>
    tpu.vector_store %arg13[%c0_77, %c1664], %165 {strides = array<i32>} : memref<1x4096xf32, #tpu.memory_space<vmem>>, vector<1x128xf32>,
    %167 = vector.extract_strided_slice %138 {offsets = [14, 0], sizes = [1, 128], strides = [1, 1]} : vector<32x128xf32> to vector<1x128xf32>
    %c0_78 = arith.constant 0 : index
    %c1792 = arith.constant 1792 : index
    %168 = vector.load %arg13[%c0_78, %c1792] : memref<1x4096xf32, #tpu.memory_space<vmem>>, vector<1x128xf32>
    tpu.vector_store %arg13[%c0_78, %c1792], %167 {strides = array<i32>} : memref<1x4096xf32, #tpu.memory_space<vmem>>, vector<1x128xf32>,
    %169 = vector.extract_strided_slice %138 {offsets = [15, 0], sizes = [1, 128], strides = [1, 1]} : vector<32x128xf32> to vector<1x128xf32>
    %c0_79 = arith.constant 0 : index
    %c1920 = arith.constant 1920 : index
    %170 = vector.load %arg13[%c0_79, %c1920] : memref<1x4096xf32, #tpu.memory_space<vmem>>, vector<1x128xf32>
    tpu.vector_store %arg13[%c0_79, %c1920], %169 {strides = array<i32>} : memref<1x4096xf32, #tpu.memory_space<vmem>>, vector<1x128xf32>,
    %171 = vector.extract_strided_slice %138 {offsets = [16, 0], sizes = [1, 128], strides = [1, 1]} : vector<32x128xf32> to vector<1x128xf32>
    %c0_80 = arith.constant 0 : index
    %c2048 = arith.constant 2048 : index
    %172 = vector.load %arg13[%c0_80, %c2048] : memref<1x4096xf32, #tpu.memory_space<vmem>>, vector<1x128xf32>
    tpu.vector_store %arg13[%c0_80, %c2048], %171 {strides = array<i32>} : memref<1x4096xf32, #tpu.memory_space<vmem>>, vector<1x128xf32>,
    %173 = vector.extract_strided_slice %138 {offsets = [17, 0], sizes = [1, 128], strides = [1, 1]} : vector<32x128xf32> to vector<1x128xf32>
    %c0_81 = arith.constant 0 : index
    %c2176 = arith.constant 2176 : index
    %174 = vector.load %arg13[%c0_81, %c2176] : memref<1x4096xf32, #tpu.memory_space<vmem>>, vector<1x128xf32>
    tpu.vector_store %arg13[%c0_81, %c2176], %173 {strides = array<i32>} : memref<1x4096xf32, #tpu.memory_space<vmem>>, vector<1x128xf32>,
    %175 = vector.extract_strided_slice %138 {offsets = [18, 0], sizes = [1, 128], strides = [1, 1]} : vector<32x128xf32> to vector<1x128xf32>
    %c0_82 = arith.constant 0 : index
    %c2304 = arith.constant 2304 : index
    %176 = vector.load %arg13[%c0_82, %c2304] : memref<1x4096xf32, #tpu.memory_space<vmem>>, vector<1x128xf32>
    tpu.vector_store %arg13[%c0_82, %c2304], %175 {strides = array<i32>} : memref<1x4096xf32, #tpu.memory_space<vmem>>, vector<1x128xf32>,
    %177 = vector.extract_strided_slice %138 {offsets = [19, 0], sizes = [1, 128], strides = [1, 1]} : vector<32x128xf32> to vector<1x128xf32>
    %c0_83 = arith.constant 0 : index
    %c2432 = arith.constant 2432 : index
    %178 = vector.load %arg13[%c0_83, %c2432] : memref<1x4096xf32, #tpu.memory_space<vmem>>, vector<1x128xf32>
    tpu.vector_store %arg13[%c0_83, %c2432], %177 {strides = array<i32>} : memref<1x4096xf32, #tpu.memory_space<vmem>>, vector<1x128xf32>,
    %179 = vector.extract_strided_slice %138 {offsets = [20, 0], sizes = [1, 128], strides = [1, 1]} : vector<32x128xf32> to vector<1x128xf32>
    %c0_84 = arith.constant 0 : index
    %c2560 = arith.constant 2560 : index
    %180 = vector.load %arg13[%c0_84, %c2560] : memref<1x4096xf32, #tpu.memory_space<vmem>>, vector<1x128xf32>
    tpu.vector_store %arg13[%c0_84, %c2560], %179 {strides = array<i32>} : memref<1x4096xf32, #tpu.memory_space<vmem>>, vector<1x128xf32>,
    %181 = vector.extract_strided_slice %138 {offsets = [21, 0], sizes = [1, 128], strides = [1, 1]} : vector<32x128xf32> to vector<1x128xf32>
    %c0_85 = arith.constant 0 : index
    %c2688 = arith.constant 2688 : index
    %182 = vector.load %arg13[%c0_85, %c2688] : memref<1x4096xf32, #tpu.memory_space<vmem>>, vector<1x128xf32>
    tpu.vector_store %arg13[%c0_85, %c2688], %181 {strides = array<i32>} : memref<1x4096xf32, #tpu.memory_space<vmem>>, vector<1x128xf32>,
    %183 = vector.extract_strided_slice %138 {offsets = [22, 0], sizes = [1, 128], strides = [1, 1]} : vector<32x128xf32> to vector<1x128xf32>
    %c0_86 = arith.constant 0 : index
    %c2816 = arith.constant 2816 : index
    %184 = vector.load %arg13[%c0_86, %c2816] : memref<1x4096xf32, #tpu.memory_space<vmem>>, vector<1x128xf32>
    tpu.vector_store %arg13[%c0_86, %c2816], %183 {strides = array<i32>} : memref<1x4096xf32, #tpu.memory_space<vmem>>, vector<1x128xf32>,
    %185 = vector.extract_strided_slice %138 {offsets = [23, 0], sizes = [1, 128], strides = [1, 1]} : vector<32x128xf32> to vector<1x128xf32>
    %c0_87 = arith.constant 0 : index
    %c2944 = arith.constant 2944 : index
    %186 = vector.load %arg13[%c0_87, %c2944] : memref<1x4096xf32, #tpu.memory_space<vmem>>, vector<1x128xf32>
    tpu.vector_store %arg13[%c0_87, %c2944], %185 {strides = array<i32>} : memref<1x4096xf32, #tpu.memory_space<vmem>>, vector<1x128xf32>,
    %187 = vector.extract_strided_slice %138 {offsets = [24, 0], sizes = [1, 128], strides = [1, 1]} : vector<32x128xf32> to vector<1x128xf32>
    %c0_88 = arith.constant 0 : index
    %c3072 = arith.constant 3072 : index
    %188 = vector.load %arg13[%c0_88, %c3072] : memref<1x4096xf32, #tpu.memory_space<vmem>>, vector<1x128xf32>
    tpu.vector_store %arg13[%c0_88, %c3072], %187 {strides = array<i32>} : memref<1x4096xf32, #tpu.memory_space<vmem>>, vector<1x128xf32>,
    %189 = vector.extract_strided_slice %138 {offsets = [25, 0], sizes = [1, 128], strides = [1, 1]} : vector<32x128xf32> to vector<1x128xf32>
    %c0_89 = arith.constant 0 : index
    %c3200 = arith.constant 3200 : index
    %190 = vector.load %arg13[%c0_89, %c3200] : memref<1x4096xf32, #tpu.memory_space<vmem>>, vector<1x128xf32>
    tpu.vector_store %arg13[%c0_89, %c3200], %189 {strides = array<i32>} : memref<1x4096xf32, #tpu.memory_space<vmem>>, vector<1x128xf32>,
    %191 = vector.extract_strided_slice %138 {offsets = [26, 0], sizes = [1, 128], strides = [1, 1]} : vector<32x128xf32> to vector<1x128xf32>
    %c0_90 = arith.constant 0 : index
    %c3328 = arith.constant 3328 : index
    %192 = vector.load %arg13[%c0_90, %c3328] : memref<1x4096xf32, #tpu.memory_space<vmem>>, vector<1x128xf32>
    tpu.vector_store %arg13[%c0_90, %c3328], %191 {strides = array<i32>} : memref<1x4096xf32, #tpu.memory_space<vmem>>, vector<1x128xf32>,
    %193 = vector.extract_strided_slice %138 {offsets = [27, 0], sizes = [1, 128], strides = [1, 1]} : vector<32x128xf32> to vector<1x128xf32>
    %c0_91 = arith.constant 0 : index
    %c3456 = arith.constant 3456 : index
    %194 = vector.load %arg13[%c0_91, %c3456] : memref<1x4096xf32, #tpu.memory_space<vmem>>, vector<1x128xf32>
    tpu.vector_store %arg13[%c0_91, %c3456], %193 {strides = array<i32>} : memref<1x4096xf32, #tpu.memory_space<vmem>>, vector<1x128xf32>,
    %195 = vector.extract_strided_slice %138 {offsets = [28, 0], sizes = [1, 128], strides = [1, 1]} : vector<32x128xf32> to vector<1x128xf32>
    %c0_92 = arith.constant 0 : index
    %c3584 = arith.constant 3584 : index
    %196 = vector.load %arg13[%c0_92, %c3584] : memref<1x4096xf32, #tpu.memory_space<vmem>>, vector<1x128xf32>
    tpu.vector_store %arg13[%c0_92, %c3584], %195 {strides = array<i32>} : memref<1x4096xf32, #tpu.memory_space<vmem>>, vector<1x128xf32>,
    %197 = vector.extract_strided_slice %138 {offsets = [29, 0], sizes = [1, 128], strides = [1, 1]} : vector<32x128xf32> to vector<1x128xf32>
    %c0_93 = arith.constant 0 : index
    %c3712 = arith.constant 3712 : index
    %198 = vector.load %arg13[%c0_93, %c3712] : memref<1x4096xf32, #tpu.memory_space<vmem>>, vector<1x128xf32>
    tpu.vector_store %arg13[%c0_93, %c3712], %197 {strides = array<i32>} : memref<1x4096xf32, #tpu.memory_space<vmem>>, vector<1x128xf32>,
    %199 = vector.extract_strided_slice %138 {offsets = [30, 0], sizes = [1, 128], strides = [1, 1]} : vector<32x128xf32> to vector<1x128xf32>
    %c0_94 = arith.constant 0 : index
    %c3840 = arith.constant 3840 : index
    %200 = vector.load %arg13[%c0_94, %c3840] : memref<1x4096xf32, #tpu.memory_space<vmem>>, vector<1x128xf32>
    tpu.vector_store %arg13[%c0_94, %c3840], %199 {strides = array<i32>} : memref<1x4096xf32, #tpu.memory_space<vmem>>, vector<1x128xf32>,
    %201 = vector.extract_strided_slice %138 {offsets = [31, 0], sizes = [1, 128], strides = [1, 1]} : vector<32x128xf32> to vector<1x128xf32>
    %c0_95 = arith.constant 0 : index
    %c3968 = arith.constant 3968 : index
    %202 = vector.load %arg13[%c0_95, %c3968] : memref<1x4096xf32, #tpu.memory_space<vmem>>, vector<1x128xf32>
    tpu.vector_store %arg13[%c0_95, %c3968], %201 {strides = array<i32>} : memref<1x4096xf32, #tpu.memory_space<vmem>>, vector<1x128xf32>,
    %c0_96 = arith.constant 0 : index
    %c0_97 = arith.constant 0 : index
    %203 = vector.load %arg13[%c0_96, %c0_97] : memref<1x4096xf32, #tpu.memory_space<vmem>>, vector<1x4096xf32>
    %c0_98 = arith.constant 0 : index
    %c0_99 = arith.constant 0 : index
    %204 = vector.load %arg8[%c0_98, %c0_99] : memref<4096x128xf32, #tpu.memory_space<vmem>>, vector<4096x128xf32>
    %cst_100 = arith.constant dense<0.000000e+00> : vector<1x128xf32>
    %205 = tpu.matmul %203, %204, %cst_100 {dimension_numbers = #tpu.dot_dimension_numbers<[1], [0], [0], [1], [0, 0, 1, 1], [], []>} : vector<1x4096xf32>, vector<4096x128xf32>, vector<1x128xf32> -> vector<1x128xf32>
    %c0_101 = arith.constant 0 : index
    %c0_102 = arith.constant 0 : index
    %206 = vector.load %arg9[%c0_101, %c0_102] : memref<1x128xf32, #tpu.memory_space<vmem>>, vector<1x128xf32>
    %207 = arith.addf %205, %206 : vector<1x128xf32>
    %cst_103 = arith.constant 0.000000e+00 : f32
    %208 = vector.broadcast %cst_103 : f32 to vector<1x128xf32>
    %209 = arith.maximumf %207, %208 : vector<1x128xf32>
    %c0_104 = arith.constant 0 : index
    %c0_105 = arith.constant 0 : index
    %210 = vector.load %arg10[%c0_104, %c0_105] : memref<128x10xf32, #tpu.memory_space<vmem>>, vector<128x10xf32>
    %cst_106 = arith.constant dense<0.000000e+00> : vector<1x10xf32>
    %211 = tpu.matmul %209, %210, %cst_106 {dimension_numbers = #tpu.dot_dimension_numbers<[1], [0], [0], [1], [0, 0, 1, 1], [], []>} : vector<1x128xf32>, vector<128x10xf32>, vector<1x10xf32> -> vector<1x10xf32>
    %c0_107 = arith.constant 0 : index
    %c0_108 = arith.constant 0 : index
    %212 = vector.load %arg11[%c0_107, %c0_108] : memref<1x10xf32, #tpu.memory_space<vmem>>, vector<1x10xf32>
    %213 = arith.addf %211, %212 : vector<1x10xf32>
    %c0_109 = arith.constant 0 : index
    %c0_110 = arith.constant 0 : index
    %c0_111 = arith.constant 0 : index
    %214 = vector.load %arg12[%c0_109, %c0_110, %c0_111] : memref<1x1x10xf32, #tpu.memory_space<vmem>>, vector<1x1x10xf32>
    %215 = vector.shape_cast %214 : vector<1x1x10xf32> to vector<1x10xf32>
    %216 = vector.shape_cast %213 : vector<1x10xf32> to vector<1x1x10xf32>
    tpu.vector_store %arg12[%c0_109, %c0_110, %c0_111], %216 {strides = array<i32>} : memref<1x1x10xf32, #tpu.memory_space<vmem>>, vector<1x1x10xf32>,
    return
  }
  func.func @transform_0(%arg0: i32) -> (i32, i32, i32) {
    %c0_i32 = arith.constant 0 : i32
    %c0_i32_0 = arith.constant 0 : i32
    %c0_i32_1 = arith.constant 0 : i32
    return %arg0, %c0_i32, %c0_i32_0 : i32, i32, i32
  }
  func.func @transform_1(%arg0: i32) -> (i32, i32) {
    %c0_i32 = arith.constant 0 : i32
    %c0_i32_0 = arith.constant 0 : i32
    %c0_i32_1 = arith.constant 0 : i32
    return %c0_i32, %c0_i32_0 : i32, i32
  }
  func.func @transform_2(%arg0: i32) -> (i32, i32) {
    %c0_i32 = arith.constant 0 : i32
    %c0_i32_0 = arith.constant 0 : i32
    %c0_i32_1 = arith.constant 0 : i32
    return %c0_i32, %c0_i32_0 : i32, i32
  }
  func.func @transform_3(%arg0: i32) -> (i32, i32, i32) {
    %c0_i32 = arith.constant 0 : i32
    %c0_i32_0 = arith.constant 0 : i32
    %c0_i32_1 = arith.constant 0 : i32
    %c0_i32_2 = arith.constant 0 : i32
    return %c0_i32, %c0_i32_0, %c0_i32_1 : i32, i32, i32
  }
  func.func @transform_4(%arg0: i32) -> (i32, i32) {
    %c0_i32 = arith.constant 0 : i32
    %c0_i32_0 = arith.constant 0 : i32
    %c0_i32_1 = arith.constant 0 : i32
    return %c0_i32, %c0_i32_0 : i32, i32
  }
  func.func @transform_5(%arg0: i32) -> (i32, i32) {
    %c0_i32 = arith.constant 0 : i32
    %c0_i32_0 = arith.constant 0 : i32
    %c0_i32_1 = arith.constant 0 : i32
    return %c0_i32, %c0_i32_0 : i32, i32
  }
  func.func @transform_6(%arg0: i32) -> (i32, i32) {
    %c0_i32 = arith.constant 0 : i32
    %c0_i32_0 = arith.constant 0 : i32
    %c0_i32_1 = arith.constant 0 : i32
    return %c0_i32, %c0_i32_0 : i32, i32
  }
  func.func @transform_7(%arg0: i32) -> (i32, i32) {
    %c0_i32 = arith.constant 0 : i32
    %c0_i32_0 = arith.constant 0 : i32
    %c0_i32_1 = arith.constant 0 : i32
    return %c0_i32, %c0_i32_0 : i32, i32
  }
  func.func @transform_8(%arg0: i32) -> (i32, i32) {
    %c0_i32 = arith.constant 0 : i32
    %c0_i32_0 = arith.constant 0 : i32
    %c0_i32_1 = arith.constant 0 : i32
    return %c0_i32, %c0_i32_0 : i32, i32
  }
  func.func @transform_9(%arg0: i32) -> (i32, i32) {
    %c0_i32 = arith.constant 0 : i32
    %c0_i32_0 = arith.constant 0 : i32
    %c0_i32_1 = arith.constant 0 : i32
    return %c0_i32, %c0_i32_0 : i32, i32
  }
  func.func @transform_10(%arg0: i32) -> (i32, i32) {
    %c0_i32 = arith.constant 0 : i32
    %c0_i32_0 = arith.constant 0 : i32
    %c0_i32_1 = arith.constant 0 : i32
    return %c0_i32, %c0_i32_0 : i32, i32
  }
  func.func @transform_11(%arg0: i32) -> (i32, i32, i32) {
    %c0_i32 = arith.constant 0 : i32
    %c0_i32_0 = arith.constant 0 : i32
    %c0_i32_1 = arith.constant 0 : i32
    return %arg0, %c0_i32, %c0_i32_0 : i32, i32, i32
  }
}

</mosaic_0001>

<llo_original>
// kernel: small_cnn_forward.1
$region0: #{small_cnn_forward.1}
  #allocation0 [shape = 'u32[]', space=smem, size = 0x4, offset = 0x4, fixed_abs, tag = 'smem constant byte address 0x4 - core index']
  #allocation1 [shape = 'u32[144,128]{1,0:T(1,128)}', space=vmem, size = 0x12000, scoped, tag = 'internal scratch']
  #allocation2 [shape = 'f32[1,4096]{1,0:T(1,128)}', space=vmem, size = 0x4000, scoped, tag = 'scratch operand']
  %s0 = inlined_call_operand.vmem [shape: f32[2,1,960], index: 0, kind: input, shape index: {}]
  %s1 = inlined_call_operand.hbm [shape: f32[16,9], index: 1, kind: input, shape index: {}]
  %s2 = inlined_call_operand.vmem [shape: f32[16,1], index: 2, kind: input, shape index: {}]
  %s3 = inlined_call_operand.vmem [shape: f32[9,32,16], index: 3, kind: input, shape index: {}]
  %s4 = inlined_call_operand.vmem [shape: f32[32,1], index: 4, kind: input, shape index: {}]
  %s5 = inlined_call_operand.hbm [shape: f32[859,256], index: 5, kind: input, shape index: {}]
  %s6 = inlined_call_operand.hbm [shape: f32[205,128], index: 6, kind: input, shape index: {}]
  %s7 = inlined_call_operand.hbm [shape: f32[4096,128], index: 7, kind: input, shape index: {}]
  %s8 = inlined_call_operand.hbm [shape: f32[1,128], index: 8, kind: input, shape index: {}]
  %s9 = inlined_call_operand.vmem [shape: f32[128,10], index: 9, kind: input, shape index: {}]
  %s10 = inlined_call_operand.hbm [shape: f32[1,10], index: 10, kind: input, shape index: {}]
  %s11 = inlined_call_operand.hbm [shape: f32[2,1,10], index: 11, kind: output, shape index: {}]
  %s12 = sld [smem:[#allocation0]]
  $region101: #{small_cnn_forward.1} parent=0
    _
  %s14 = ssub.s32 1, %s12
  %s15 = scalar_select 0, %s14, %s12
  $region1: #{small_cnn_forward.1} parent=0
    #allocation3 [shape = 'u8[8192]{0}', space=vmem, size = 0x2000, scoped, tag = 'input window, operand 1, single buffered']
    #allocation4 [shape = 's32[2]{0}', space=sflag, size = 0x8, scoped, tag = 'scoped memory for small_cnn_forward.1']
    #allocation5 [shape = 's32[2]{0}', space=sflag, size = 0x8, scoped, tag = 'scoped memory for small_cnn_forward.1']
    #allocation6 [shape = 'u8[884736]{0}', space=vmem, size = 0xd8000, scoped, tag = 'input window, operand 5, single buffered']
    #allocation7 [shape = 's32[1]{0}', space=sflag, size = 0x4, scoped, tag = 'scoped memory for small_cnn_forward.1']
    #allocation8 [shape = 'u8[106496]{0}', space=vmem, size = 0x1a000, scoped, tag = 'input window, operand 6, single buffered']
    #allocation9 [shape = 'u8[2097152]{0}', space=vmem, size = 0x200000, scoped, tag = 'input window, operand 7, single buffered']
    #allocation10 [shape = 's32[1]{0}', space=sflag, size = 0x4, scoped, tag = 'scoped memory for small_cnn_forward.1']
    #allocation11 [shape = 'u8[512]{0}', space=vmem, size = 0x400, scoped, tag = 'input window, operand 8, single buffered']
    #allocation12 [shape = 'u8[512]{0}', space=vmem, size = 0x400, scoped, tag = 'input window, operand 10, single buffered']
    #allocation13 [shape = 's32[1]{0}', space=sflag, size = 0x4, scoped, tag = 'scoped memory for small_cnn_forward.1']
    #allocation14 [shape = 'u8[1024]{0}', space=vmem, size = 0x400, scoped, tag = 'output window, operand 0']
    %16 = vsyncpa [#allocation4], 0
    %17 = vsyncpa [#allocation7], 0
    %18 = vsyncpa [#allocation10], 0
    %19 = vsyncpa [#allocation13], 0
    %20 = vsyncpa [#allocation5], 0
    %s21 = scalar_lea.sflag [#allocation5], 1
    %22 = vsyncpa %s21, 0
    loop: start=0, step=1, limit=4
    $region2: #{small_cnn_forward.1} parent=1 // loop_pre_header
      _
    $region3: #{small_cnn_forward.1} parent=1 // loop_header
      %s24 = sphi 0, %s28
      %p25 = scmp.ge.s32.totalorder %s24, 4
      %s34 = sphi 0, %s36
      %s37 = sphi 0, %s34
      %s38 = sphi 0, %s37
      %s54 = sphi 0, %s38
      %s58 = sphi 0, %s58
      %s60 = sphi 0, %s58
      %s61 = sphi 0, %s60
      %s75 = sphi 0, %s61
      %s79 = sphi 0, %s79
      %s81 = sphi 0, %s79
      %s82 = sphi 0, %s81
      %s96 = sphi 0, %s82
      %s100 = sphi 0, %s100
      %s102 = sphi 0, %s100
      %s103 = sphi 0, %s102
      %s117 = sphi 0, %s103
      %s121 = sphi 0, %s121
      %s123 = sphi 0, %s121
      %s124 = sphi 0, %s123
      %s138 = sphi 0, %s124
      %s142 = sphi 0, %s142
      %s144 = sphi 0, %s142
      %s145 = sphi 0, %s144
      %s159 = sphi 0, %s145
      %s163 = sphi 0, %s163
      %s165 = sphi 0, %s163
      %s166 = sphi 0, %s165
      %s180 = sphi 0, %s166
      %s184 = sphi 0, %s184
      %s186 = sphi 0, %s184
      %s187 = sphi 0, %s186
      %s201 = sphi 0, %s187
      %s205 = sphi 0, %s205
      %s207 = sphi 0, %s205
      %s208 = sphi 0, %s207
      %s222 = sphi 0, %s208
      %s226 = sphi 0, %s226
      %s228 = sphi 0, %s226
      %s229 = sphi 0, %s228
      %s243 = sphi 0, %s229
      %s247 = sphi 0, %s247
      %s249 = sphi 0, %s247
      %s250 = sphi 0, %s249
      %s264 = sphi 0, %s250
      %s270 = sphi 0, %s272
      %s273 = sphi 0, %s270
      %s274 = sphi 0, %s273
      %s290 = sphi 0, %s274
    $region4: #{small_cnn_forward.1} parent=1 // loop_header_branch
      %27 = sbr.rel (%p25) target = $region8
    $region5: #{small_cnn_forward.1} parent=1 // loop_body
      %s29 = ssub.s32 %s24, 1
      %s30 = ssub.s32 %s24, 2
      %s31 = sadd.s32 %s24, 1
      %s32 = ssub.s32 %s24, %s31
      %p33 = scmp.eq.s32.totalorder %s32, 0
      %s35 = sadd.s32 %s34, 1
      %s36 = scalar_select %p33, %s34, %s35
      %p39 = pneg %p33
      %p40 = scmp.eq.s32.totalorder %s24, 1
      %p41 = por %p39, %p40
      %p42 = scmp.ne.s32.totalorder %s34, %s37
      %p43 = scmp.eq.s32.totalorder %s24, 0
      %p44 = por %p42, %p43
      %p45 = scmp.ne.s32.totalorder %s34, %s37
      %p46 = scmp.eq.s32.totalorder %s29, 1
      %p47 = por %p45, %p46
      %p48 = scmp.ne.s32.totalorder %s37, %s38
      %p49 = scmp.eq.s32.totalorder %s29, 0
      %p50 = por %p48, %p49
      %p51 = scmp.ne.s32.totalorder %s37, %s38
      %p52 = scmp.eq.s32.totalorder %s30, 1
      %p53 = por %p51, %p52
      %p55 = scmp.ne.s32.totalorder %s38, %s54
      %p56 = scmp.eq.s32.totalorder %s30, 0
      %p57 = por %p55, %p56
      %s59 = sadd.s32 %s58, 1
      %p62 = scmp.eq.s32.totalorder %s24, 1
      %p63 = scmp.ne.s32.totalorder %s58, %s60
      %p64 = scmp.eq.s32.totalorder %s24, 0
      %p65 = por %p63, %p64
      %p66 = scmp.ne.s32.totalorder %s58, %s60
      %p67 = scmp.eq.s32.totalorder %s29, 1
      %p68 = por %p66, %p67
      %p69 = scmp.ne.s32.totalorder %s60, %s61
      %p70 = scmp.eq.s32.totalorder %s29, 0
      %p71 = por %p69, %p70
      %p72 = scmp.ne.s32.totalorder %s60, %s61
      %p73 = scmp.eq.s32.totalorder %s30, 1
      %p74 = por %p72, %p73
      %p76 = scmp.ne.s32.totalorder %s61, %s75
      %p77 = scmp.eq.s32.totalorder %s30, 0
      %p78 = por %p76, %p77
      %s80 = sadd.s32 %s79, 1
      %p83 = scmp.eq.s32.totalorder %s24, 1
      %p84 = scmp.ne.s32.totalorder %s79, %s81
      %p85 = scmp.eq.s32.totalorder %s24, 0
      %p86 = por %p84, %p85
      %p87 = scmp.ne.s32.totalorder %s79, %s81
      %p88 = scmp.eq.s32.totalorder %s29, 1
      %p89 = por %p87, %p88
      %p90 = scmp.ne.s32.totalorder %s81, %s82
      %p91 = scmp.eq.s32.totalorder %s29, 0
      %p92 = por %p90, %p91
      %p93 = scmp.ne.s32.totalorder %s81, %s82
      %p94 = scmp.eq.s32.totalorder %s30, 1
      %p95 = por %p93, %p94
      %p97 = scmp.ne.s32.totalorder %s82, %s96
      %p98 = scmp.eq.s32.totalorder %s30, 0
      %p99 = por %p97, %p98
      %s101 = sadd.s32 %s100, 1
      %p104 = scmp.eq.s32.totalorder %s24, 1
      %p105 = scmp.ne.s32.totalorder %s100, %s102
      %p106 = scmp.eq.s32.totalorder %s24, 0
      %p107 = por %p105, %p106
      %p108 = scmp.ne.s32.totalorder %s100, %s102
      %p109 = scmp.eq.s32.totalorder %s29, 1
      %p110 = por %p108, %p109
      %p111 = scmp.ne.s32.totalorder %s102, %s103
      %p112 = scmp.eq.s32.totalorder %s29, 0
      %p113 = por %p111, %p112
      %p114 = scmp.ne.s32.totalorder %s102, %s103
      %p115 = scmp.eq.s32.totalorder %s30, 1
      %p116 = por %p114, %p115
      %p118 = scmp.ne.s32.totalorder %s103, %s117
      %p119 = scmp.eq.s32.totalorder %s30, 0
      %p120 = por %p118, %p119
      %s122 = sadd.s32 %s121, 1
      %p125 = scmp.eq.s32.totalorder %s24, 1
      %p126 = scmp.ne.s32.totalorder %s121, %s123
      %p127 = scmp.eq.s32.totalorder %s24, 0
      %p128 = por %p126, %p127
      %p129 = scmp.ne.s32.totalorder %s121, %s123
      %p130 = scmp.eq.s32.totalorder %s29, 1
      %p131 = por %p129, %p130
      %p132 = scmp.ne.s32.totalorder %s123, %s124
      %p133 = scmp.eq.s32.totalorder %s29, 0
      %p134 = por %p132, %p133
      %p135 = scmp.ne.s32.totalorder %s123, %s124
      %p136 = scmp.eq.s32.totalorder %s30, 1
      %p137 = por %p135, %p136
      %p139 = scmp.ne.s32.totalorder %s124, %s138
      %p140 = scmp.eq.s32.totalorder %s30, 0
      %p141 = por %p139, %p140
      %s143 = sadd.s32 %s142, 1
      %p146 = scmp.eq.s32.totalorder %s24, 1
      %p147 = scmp.ne.s32.totalorder %s142, %s144
      %p148 = scmp.eq.s32.totalorder %s24, 0
      %p149 = por %p147, %p148
      %p150 = scmp.ne.s32.totalorder %s142, %s144
      %p151 = scmp.eq.s32.totalorder %s29, 1
      %p152 = por %p150, %p151
      %p153 = scmp.ne.s32.totalorder %s144, %s145
      %p154 = scmp.eq.s32.totalorder %s29, 0
      %p155 = por %p153, %p154
      %p156 = scmp.ne.s32.totalorder %s144, %s145
      %p157 = scmp.eq.s32.totalorder %s30, 1
      %p158 = por %p156, %p157
      %p160 = scmp.ne.s32.totalorder %s145, %s159
      %p161 = scmp.eq.s32.totalorder %s30, 0
      %p162 = por %p160, %p161
      %s164 = sadd.s32 %s163, 1
      %p167 = scmp.eq.s32.totalorder %s24, 1
      %p168 = scmp.ne.s32.totalorder %s163, %s165
      %p169 = scmp.eq.s32.totalorder %s24, 0
      %p170 = por %p168, %p169
      %p171 = scmp.ne.s32.totalorder %s163, %s165
      %p172 = scmp.eq.s32.totalorder %s29, 1
      %p173 = por %p171, %p172
      %p174 = scmp.ne.s32.totalorder %s165, %s166
      %p175 = scmp.eq.s32.totalorder %s29, 0
      %p176 = por %p174, %p175
      %p177 = scmp.ne.s32.totalorder %s165, %s166
      %p178 = scmp.eq.s32.totalorder %s30, 1
      %p179 = por %p177, %p178
      %p181 = scmp.ne.s32.totalorder %s166, %s180
      %p182 = scmp.eq.s32.totalorder %s30, 0
      %p183 = por %p181, %p182
      %s185 = sadd.s32 %s184, 1
      %p188 = scmp.eq.s32.totalorder %s24, 1
      %p189 = scmp.ne.s32.totalorder %s184, %s186
      %p190 = scmp.eq.s32.totalorder %s24, 0
      %p191 = por %p189, %p190
      %p192 = scmp.ne.s32.totalorder %s184, %s186
      %p193 = scmp.eq.s32.totalorder %s29, 1
      %p194 = por %p192, %p193
      %p195 = scmp.ne.s32.totalorder %s186, %s187
      %p196 = scmp.eq.s32.totalorder %s29, 0
      %p197 = por %p195, %p196
      %p198 = scmp.ne.s32.totalorder %s186, %s187
      %p199 = scmp.eq.s32.totalorder %s30, 1
      %p200 = por %p198, %p199
      %p202 = scmp.ne.s32.totalorder %s187, %s201
      %p203 = scmp.eq.s32.totalorder %s30, 0
      %p204 = por %p202, %p203
      %s206 = sadd.s32 %s205, 1
      %p209 = scmp.eq.s32.totalorder %s24, 1
      %p210 = scmp.ne.s32.totalorder %s205, %s207
      %p211 = scmp.eq.s32.totalorder %s24, 0
      %p212 = por %p210, %p211
      %p213 = scmp.ne.s32.totalorder %s205, %s207
      %p214 = scmp.eq.s32.totalorder %s29, 1
      %p215 = por %p213, %p214
      %p216 = scmp.ne.s32.totalorder %s207, %s208
      %p217 = scmp.eq.s32.totalorder %s29, 0
      %p218 = por %p216, %p217
      %p219 = scmp.ne.s32.totalorder %s207, %s208
      %p220 = scmp.eq.s32.totalorder %s30, 1
      %p221 = por %p219, %p220
      %p223 = scmp.ne.s32.totalorder %s208, %s222
      %p224 = scmp.eq.s32.totalorder %s30, 0
      %p225 = por %p223, %p224
      %s227 = sadd.s32 %s226, 1
      %p230 = scmp.eq.s32.totalorder %s24, 1
      %p231 = scmp.ne.s32.totalorder %s226, %s228
      %p232 = scmp.eq.s32.totalorder %s24, 0
      %p233 = por %p231, %p232
      %p234 = scmp.ne.s32.totalorder %s226, %s228
      %p235 = scmp.eq.s32.totalorder %s29, 1
      %p236 = por %p234, %p235
      %p237 = scmp.ne.s32.totalorder %s228, %s229
      %p238 = scmp.eq.s32.totalorder %s29, 0
      %p239 = por %p237, %p238
      %p240 = scmp.ne.s32.totalorder %s228, %s229
      %p241 = scmp.eq.s32.totalorder %s30, 1
      %p242 = por %p240, %p241
      %p244 = scmp.ne.s32.totalorder %s229, %s243
      %p245 = scmp.eq.s32.totalorder %s30, 0
      %p246 = por %p244, %p245
      %s248 = sadd.s32 %s247, 1
      %p251 = scmp.eq.s32.totalorder %s24, 1
      %p252 = scmp.ne.s32.totalorder %s247, %s249
      %p253 = scmp.eq.s32.totalorder %s24, 0
      %p254 = por %p252, %p253
      %p255 = scmp.ne.s32.totalorder %s247, %s249
      %p256 = scmp.eq.s32.totalorder %s29, 1
      %p257 = por %p255, %p256
      %p258 = scmp.ne.s32.totalorder %s249, %s250
      %p259 = scmp.eq.s32.totalorder %s29, 0
      %p260 = por %p258, %p259
      %p261 = scmp.ne.s32.totalorder %s249, %s250
      %p262 = scmp.eq.s32.totalorder %s30, 1
      %p263 = por %p261, %p262
      %p265 = scmp.ne.s32.totalorder %s250, %s264
      %p266 = scmp.eq.s32.totalorder %s30, 0
      %p267 = por %p265, %p266
      %s268 = ssub.s32 %s24, %s31
      %p269 = scmp.eq.s32.totalorder %s268, 0
      %s271 = sadd.s32 %s270, 1
      %s272 = scalar_select %p269, %s270, %s271
      %p275 = pneg %p269
      %p276 = scmp.eq.s32.totalorder %s24, 1
      %p277 = por %p275, %p276
      %p278 = scmp.ne.s32.totalorder %s270, %s273
      %p279 = scmp.eq.s32.totalorder %s24, 0
      %p280 = por %p278, %p279
      %p281 = scmp.ne.s32.totalorder %s270, %s273
      %p282 = scmp.eq.s32.totalorder %s29, 1
      %p283 = por %p281, %p282
      %p284 = scmp.ne.s32.totalorder %s273, %s274
      %p285 = scmp.eq.s32.totalorder %s29, 0
      %p286 = por %p284, %p285
      %p287 = scmp.ne.s32.totalorder %s273, %s274
      %p288 = scmp.eq.s32.totalorder %s30, 1
      %p289 = por %p287, %p288
      %p291 = scmp.ne.s32.totalorder %s274, %s290
      %p292 = scmp.eq.s32.totalorder %s30, 0
      %p293 = por %p291, %p292
      %p294 = scmp.le.s32.totalorder 1, %s24
      %p295 = scmp.lt.s32.totalorder %s24, 3
      %p296 = pnand %p294, %p295
      %p297 = pneg %p296
      // Predicated region
      $region9: #{small_cnn_forward.1} parent=5 // pred_check
        _
      $region10: #{small_cnn_forward.1} parent=5 // pred_check_branch
        %299 = sbr.rel (%p296) target = $region12
      $region11: #{small_cnn_forward.1} parent=5 // pred_region
        %s300 = ssub.s32 %s24, 1
        // Predicated region
        $region13: #{small_cnn_forward.1} parent=11 // pred_check
          %p301 = pneg %p71
        $region14: #{small_cnn_forward.1} parent=11 // pred_check_branch
          %303 = sbr.rel (%p301) target = $region16
        $region15: #{small_cnn_forward.1} parent=11 // pred_region
          %s305 = ssub.s32 256, 256
          %306 = vsyncadd [#allocation4], %s305
          %s307 = sshll.u32 [#allocation3], 4
          %s308 = int_to_ptr.vmem [resolvable:$true] %s307
          %313 = dma.hbm_to_vmem [thread:$0]  %s1, 256, %s308, [#allocation4], 128, 128, 8
        $region16: #{small_cnn_forward.1} parent=11 // pred_fallthru
          _
        // Predicated region
        $region17: #{small_cnn_forward.1} parent=11 // pred_check
          %p314 = pneg %p92
        $region18: #{small_cnn_forward.1} parent=11 // pred_check_branch
          %316 = sbr.rel (%p314) target = $region20
        $region19: #{small_cnn_forward.1} parent=11 // pred_region
          _
        $region20: #{small_cnn_forward.1} parent=11 // pred_fallthru
          _
        // Predicated region
        $region21: #{small_cnn_forward.1} parent=11 // pred_check
          %p317 = pneg %p113
        $region22: #{small_cnn_forward.1} parent=11 // pred_check_branch
          %319 = sbr.rel (%p317) target = $region24
        $region23: #{small_cnn_forward.1} parent=11 // pred_region
          _
        $region24: #{small_cnn_forward.1} parent=11 // pred_fallthru
          _
        // Predicated region
        $region25: #{small_cnn_forward.1} parent=11 // pred_check
          %p320 = pneg %p134
        $region26: #{small_cnn_forward.1} parent=11 // pred_check_branch
          %322 = sbr.rel (%p320) target = $region28
        $region27: #{small_cnn_forward.1} parent=11 // pred_region
          _
        $region28: #{small_cnn_forward.1} parent=11 // pred_fallthru
          _
        // Predicated region
        $region29: #{small_cnn_forward.1} parent=11 // pred_check
          %p323 = pneg %p155
        $region30: #{small_cnn_forward.1} parent=11 // pred_check_branch
          %325 = sbr.rel (%p323) target = $region32
        $region31: #{small_cnn_forward.1} parent=11 // pred_region
          %s327 = ssub.s32 27648, 27648
          %328 = vsyncadd [#allocation7], %s327
          %s329 = sshll.u32 [#allocation6], 4
          %s330 = int_to_ptr.vmem [resolvable:$true] %s329
          %335 = dma.hbm_to_vmem [thread:$0]  %s5, 27648, %s330, [#allocation7], 256, 256, 16
        $region32: #{small_cnn_forward.1} parent=11 // pred_fallthru
          _
        // Predicated region
        $region33: #{small_cnn_forward.1} parent=11 // pred_check
          %p336 = pneg %p176
        $region34: #{small_cnn_forward.1} parent=11 // pred_check_branch
          %338 = sbr.rel (%p336) target = $region36
        $region35: #{small_cnn_forward.1} parent=11 // pred_region
          %s340 = ssub.s32 3328, 3328
          %341 = vsyncadd [#allocation7], %s340
          %s342 = sshll.u32 [#allocation8], 4
          %s343 = int_to_ptr.vmem [resolvable:$true] %s342
          %348 = dma.hbm_to_vmem [thread:$0]  %s6, 3328, %s343, [#allocation7], 128, 128, 8
        $region36: #{small_cnn_forward.1} parent=11 // pred_fallthru
          _
        // Predicated region
        $region37: #{small_cnn_forward.1} parent=11 // pred_check
          %p349 = pneg %p197
        $region38: #{small_cnn_forward.1} parent=11 // pred_check_branch
          %351 = sbr.rel (%p349) target = $region40
        $region39: #{small_cnn_forward.1} parent=11 // pred_region
          %s353 = ssub.s32 65536, 65536
          %354 = vsyncadd [#allocation10], %s353
          %s355 = sshll.u32 [#allocation9], 4
          %s356 = int_to_ptr.vmem [resolvable:$true] %s355
          %361 = dma.hbm_to_vmem [thread:$0]  %s7, 65536, %s356, [#allocation10], 128, 128, 8
        $region40: #{small_cnn_forward.1} parent=11 // pred_fallthru
          _
        // Predicated region
        $region41: #{small_cnn_forward.1} parent=11 // pred_check
          %p362 = pneg %p218
        $region42: #{small_cnn_forward.1} parent=11 // pred_check_branch
          %364 = sbr.rel (%p362) target = $region44
        $region43: #{small_cnn_forward.1} parent=11 // pred_region
          %s366 = ssub.s32 16, 16
          %367 = vsyncadd [#allocation10], %s366
          %s369 = sshll.u32 [#allocation11], 4
          %s370 = int_to_ptr.vmem [resolvable:$true] %s369
          %372 = dma.hbm_to_vmem [thread:$0]  %s8, 16, %s370, [#allocation10]
        $region44: #{small_cnn_forward.1} parent=11 // pred_fallthru
          _
        // Predicated region
        $region45: #{small_cnn_forward.1} parent=11 // pred_check
          %p373 = pneg %p239
        $region46: #{small_cnn_forward.1} parent=11 // pred_check_branch
          %375 = sbr.rel (%p373) target = $region48
        $region47: #{small_cnn_forward.1} parent=11 // pred_region
          _
        $region48: #{small_cnn_forward.1} parent=11 // pred_fallthru
          _
        // Predicated region
        $region49: #{small_cnn_forward.1} parent=11 // pred_check
          %p376 = pneg %p260
        $region50: #{small_cnn_forward.1} parent=11 // pred_check_branch
          %378 = sbr.rel (%p376) target = $region52
        $region51: #{small_cnn_forward.1} parent=11 // pred_region
          %s380 = ssub.s32 16, 16
          %381 = vsyncadd [#allocation13], %s380
          %s383 = sshll.u32 [#allocation12], 4
          %s384 = int_to_ptr.vmem [resolvable:$true] %s383
          %386 = dma.hbm_to_vmem [thread:$0]  %s10, 16, %s384, [#allocation13]
        $region52: #{small_cnn_forward.1} parent=11 // pred_fallthru
          _
      $region12: #{small_cnn_forward.1} parent=5 // pred_fallthru
        _
      %p387 = scmp.lt.s32.totalorder %s24, 2
      // Predicated region
      $region53: #{small_cnn_forward.1} parent=5 // pred_check
        %p388 = pneg %p387
      $region54: #{small_cnn_forward.1} parent=5 // pred_check_branch
        %390 = sbr.rel (%p388) target = $region56
      $region55: #{small_cnn_forward.1} parent=5 // pred_region
        // Predicated region
        $region57: #{small_cnn_forward.1} parent=55 // pred_check
          %p391 = pneg %p44
        $region58: #{small_cnn_forward.1} parent=55 // pred_check_branch
          %393 = sbr.rel (%p391) target = $region60
        $region59: #{small_cnn_forward.1} parent=55 // pred_region
          %p394 = scmp.lt.s32.totalorder %s24, 1
          %s395 = scalar_select %p394, %s24, 1
          %s396 = smul.addr %s395, 8
          %s397 = scalar_lea.vmem %s0, %s396
        $region60: #{small_cnn_forward.1} parent=55 // pred_fallthru
          _
      $region56: #{small_cnn_forward.1} parent=5 // pred_fallthru
        _
      %p398 = scmp.le.s32.totalorder 1, %s24
      %p399 = scmp.lt.s32.totalorder %s24, 3
      %p400 = pnand %p398, %p399
      %p401 = pneg %p400
      // Predicated region
      $region61: #{small_cnn_forward.1} parent=5 // pred_check
        _
      $region62: #{small_cnn_forward.1} parent=5 // pred_check_branch
        %403 = sbr.rel (%p400) target = $region64
      $region63: #{small_cnn_forward.1} parent=5 // pred_region
        %s404 = ssub.s32 %s24, 1
        // Predicated region
        $region65: #{small_cnn_forward.1} parent=63 // pred_check
          %p405 = pneg %p71
        $region66: #{small_cnn_forward.1} parent=63 // pred_check_branch
          %407 = sbr.rel (%p405) target = $region68
        $region67: #{small_cnn_forward.1} parent=63 // pred_region
          %408 = dma.done [#allocation4], 256
        $region68: #{small_cnn_forward.1} parent=63 // pred_fallthru
          _
        // Predicated region
        $region69: #{small_cnn_forward.1} parent=63 // pred_check
          %p409 = pneg %p155
        $region70: #{small_cnn_forward.1} parent=63 // pred_check_branch
          %411 = sbr.rel (%p409) target = $region72
        $region71: #{small_cnn_forward.1} parent=63 // pred_region
          %412 = dma.done [#allocation7], 27648
        $region72: #{small_cnn_forward.1} parent=63 // pred_fallthru
          _
        // Predicated region
        $region73: #{small_cnn_forward.1} parent=63 // pred_check
          %p413 = pneg %p176
        $region74: #{small_cnn_forward.1} parent=63 // pred_check_branch
          %415 = sbr.rel (%p413) target = $region76
        $region75: #{small_cnn_forward.1} parent=63 // pred_region
          %416 = dma.done [#allocation7], 3328
        $region76: #{small_cnn_forward.1} parent=63 // pred_fallthru
          _
        // Predicated region
        $region77: #{small_cnn_forward.1} parent=63 // pred_check
          %p417 = pneg %p197
        $region78: #{small_cnn_forward.1} parent=63 // pred_check_branch
          %419 = sbr.rel (%p417) target = $region80
        $region79: #{small_cnn_forward.1} parent=63 // pred_region
          %420 = dma.done [#allocation10], 65536
        $region80: #{small_cnn_forward.1} parent=63 // pred_fallthru
          _
        // Predicated region
        $region81: #{small_cnn_forward.1} parent=63 // pred_check
          %p421 = pneg %p218
        $region82: #{small_cnn_forward.1} parent=63 // pred_check_branch
          %423 = sbr.rel (%p421) target = $region84
        $region83: #{small_cnn_forward.1} parent=63 // pred_region
          %424 = dma.done [#allocation10], 16
        $region84: #{small_cnn_forward.1} parent=63 // pred_fallthru
          _
        // Predicated region
        $region85: #{small_cnn_forward.1} parent=63 // pred_check
          %p425 = pneg %p260
        $region86: #{small_cnn_forward.1} parent=63 // pred_check_branch
          %427 = sbr.rel (%p425) target = $region88
        $region87: #{small_cnn_forward.1} parent=63 // pred_region
          %428 = dma.done [#allocation13], 16
        $region88: #{small_cnn_forward.1} parent=63 // pred_fallthru
          _
        %p429 = scmp.lt.s32.totalorder %s29, 1
        %s430 = scalar_select %p429, %s29, 1
        %s431 = smul.addr %s430, 8
        %s432 = scalar_lea.vmem %s0, %s431
        %p433 = pneg %p50
        %p434 = pneg %p47
        %p435 = pneg %p71
        %p436 = pneg %p68
        %p437 = pneg %p92
        %p438 = pneg %p89
        %p439 = pneg %p113
        %p440 = pneg %p110
        %p441 = pneg %p134
        %p442 = pneg %p131
        %p443 = pneg %p155
        %p444 = pneg %p152
        %p445 = pneg %p176
        %p446 = pneg %p173
        %p447 = pneg %p197
        %p448 = pneg %p194
        %p449 = pneg %p218
        %p450 = pneg %p215
        %p451 = pneg %p239
        %p452 = pneg %p236
        %p453 = pneg %p260
        %p454 = pneg %p257
        %p455 = pneg %p286
        %p456 = pneg %p283
        %s457 = sand.u32 %s273, 1
        %s458 = scalar_lea.sflag [#allocation5], %s457
        %s459 = sand.u32 %s273, 1
        %s460 = scalar_lea.vmem [#allocation14], %s459
        %p461 = scmp.lt.s32.totalorder %s29, 1
        %s462 = scalar_select %p461, %s29, 1
        %s463 = smul.addr %s462, 8
        %s464 = scalar_lea.vmem %s0, %s463
        %v465 = vld [vmem:[#allocation3] sm:$0xff]
        %v466 = vld [vmem:[#allocation3 + $0x8] sm:$0xff]
        %v467 = vld [vmem:[%s464] sm:$0x7f]
        %469 = vset.pattern.permute.xlu0 0
        %470 = vperm.xlu0 %469, %v465
        %v471 = vpop.permute.xlu0 %470
        %474 = vset.pattern.permute.xlu0 0
        %475 = vperm.xlu0 %474, %v466
        %v476 = vpop.permute.xlu0 %475
        %v479 = vlaneseq
        %v480 = vshrl.u32 %v479, 7
        %v481 = vsub.s32 0, %v480
        %v482 = vrot.slane %v467, %v481
        %v483 = vlaneseq
        %v484 = vshrl.u32 %v483, 7
        %v485 = vsub.s32 1, %v484
        %v486 = vrot.slane %v467, %v485
        %v487 = vlaneseq
        %v488 = vshrl.u32 %v487, 7
        %v489 = vsub.s32 2, %v488
        %v490 = vrot.slane %v467, %v489
        %v491 = vlaneseq
        %v492 = vshrl.u32 %v491, 7
        %v493 = vsub.s32 3, %v492
        %v494 = vrot.slane %v467, %v493
        %v495 = vlaneseq
        %v496 = vshrl.u32 %v495, 7
        %v497 = vsub.s32 4, %v496
        %v498 = vrot.slane %v467, %v497
        %v499 = vlaneseq
        %v500 = vshrl.u32 %v499, 7
        %v501 = vsub.s32 5, %v500
        %v502 = vrot.slane %v467, %v501
        %v503 = vlaneseq
        %v504 = vshrl.u32 %v503, 7
        %v505 = vsub.s32 6, %v504
        %v506 = vrot.slane %v467, %v505
        %v514 = vmul.f32 %v471, %v482
        %v515 = vmul.f32 %v471, %v486
        %v516 = vmul.f32 %v471, %v490
        %v517 = vmul.f32 %v471, %v494
        %v518 = vmul.f32 %v471, %v498
        %v519 = vmul.f32 %v471, %v502
        %v520 = vmul.f32 %v471, %v506
        %v521 = vmul.f32 %v476, %v482
        %v522 = vmul.f32 %v476, %v486
        %v523 = vmul.f32 %v476, %v490
        %v524 = vmul.f32 %v476, %v494
        %v525 = vmul.f32 %v476, %v498
        %v526 = vmul.f32 %v476, %v502
        %v527 = vmul.f32 %v476, %v506
        %v528 = vadd.f32 %v514, 0.0
        %v529 = vadd.f32 %v515, 0.0
        %v530 = vadd.f32 %v516, 0.0
        %v531 = vadd.f32 %v517, 0.0
        %v532 = vadd.f32 %v518, 0.0
        %v533 = vadd.f32 %v519, 0.0
        %v534 = vadd.f32 %v520, 0.0
        %v535 = vadd.f32 %v521, 0.0
        %v536 = vadd.f32 %v522, 0.0
        %v537 = vadd.f32 %v523, 0.0
        %v538 = vadd.f32 %v524, 0.0
        %v539 = vadd.f32 %v525, 0.0
        %v540 = vadd.f32 %v526, 0.0
        %v541 = vadd.f32 %v527, 0.0
        %542 = vset.pattern.permute.xlu0 1
        %543 = vperm.xlu0 %542, %v465
        %v544 = vpop.permute.xlu0 %543
        %546 = vset.pattern.permute.xlu0 1
        %547 = vperm.xlu0 %546, %v466
        %v548 = vpop.permute.xlu0 %547
        %v550 = vmul.f32 %v544, %v482
        %v551 = vmul.f32 %v544, %v486
        %v552 = vmul.f32 %v544, %v490
        %v553 = vmul.f32 %v544, %v494
        %v554 = vmul.f32 %v544, %v498
        %v555 = vmul.f32 %v544, %v502
        %v556 = vmul.f32 %v544, %v506
        %v557 = vmul.f32 %v548, %v482
        %v558 = vmul.f32 %v548, %v486
        %v559 = vmul.f32 %v548, %v490
        %v560 = vmul.f32 %v548, %v494
        %v561 = vmul.f32 %v548, %v498
        %v562 = vmul.f32 %v548, %v502
        %v563 = vmul.f32 %v548, %v506
        %578 = vrot.lane.b32.xlu0 %v550, 127
        %v579 = vpop.permute.xlu0 %578
        %580 = vrot.lane.b32.xlu0 %v551, 127
        %v581 = vpop.permute.xlu0 %580
        %582 = vrot.lane.b32.xlu0 %v552, 127
        %v583 = vpop.permute.xlu0 %582
        %584 = vrot.lane.b32.xlu0 %v553, 127
        %v585 = vpop.permute.xlu0 %584
        %586 = vrot.lane.b32.xlu0 %v554, 127
        %v587 = vpop.permute.xlu0 %586
        %588 = vrot.lane.b32.xlu0 %v555, 127
        %v589 = vpop.permute.xlu0 %588
        %590 = vrot.lane.b32.xlu0 %v556, 127
        %v591 = vpop.permute.xlu0 %590
        %592 = vrot.lane.b32.xlu0 %v557, 127
        %v593 = vpop.permute.xlu0 %592
        %594 = vrot.lane.b32.xlu0 %v558, 127
        %v595 = vpop.permute.xlu0 %594
        %596 = vrot.lane.b32.xlu0 %v559, 127
        %v597 = vpop.permute.xlu0 %596
        %598 = vrot.lane.b32.xlu0 %v560, 127
        %v599 = vpop.permute.xlu0 %598
        %600 = vrot.lane.b32.xlu0 %v561, 127
        %v601 = vpop.permute.xlu0 %600
        %602 = vrot.lane.b32.xlu0 %v562, 127
        %v603 = vpop.permute.xlu0 %602
        %604 = vrot.lane.b32.xlu0 %v563, 127
        %v605 = vpop.permute.xlu0 %604
        %vm606 = vcmask 1039360
        %v607 = vsel %vm606, %v579, %v581
        %v608 = vsel %vm606, %v581, %v583
        %v609 = vsel %vm606, %v583, %v585
        %v610 = vsel %vm606, %v585, %v587
        %v611 = vsel %vm606, %v587, %v589
        %v612 = vsel %vm606, %v589, %v591
        %v613 = vsel %vm606, %v593, %v595
        %v614 = vsel %vm606, %v595, %v597
        %v615 = vsel %vm606, %v597, %v599
        %v616 = vsel %vm606, %v599, %v601
        %v617 = vsel %vm606, %v601, %v603
        %v618 = vsel %vm606, %v603, %v605
        %v633 = vadd.f32 %v528, %v607
        %v634 = vadd.f32 %v529, %v608
        %v635 = vadd.f32 %v530, %v609
        %v636 = vadd.f32 %v531, %v610
        %v637 = vadd.f32 %v532, %v611
        %v638 = vadd.f32 %v533, %v612
        %v639 = vadd.f32 %v534, %v591
        %v640 = vadd.f32 %v535, %v613
        %v641 = vadd.f32 %v536, %v614
        %v642 = vadd.f32 %v537, %v615
        %v643 = vadd.f32 %v538, %v616
        %v644 = vadd.f32 %v539, %v617
        %v645 = vadd.f32 %v540, %v618
        %v646 = vadd.f32 %v541, %v605
        %647 = vset.pattern.permute.xlu0 2
        %648 = vperm.xlu0 %647, %v465
        %v649 = vpop.permute.xlu0 %648
        %651 = vset.pattern.permute.xlu0 2
        %652 = vperm.xlu0 %651, %v466
        %v653 = vpop.permute.xlu0 %652
        %v655 = vmul.f32 %v649, %v482
        %v656 = vmul.f32 %v649, %v486
        %v657 = vmul.f32 %v649, %v490
        %v658 = vmul.f32 %v649, %v494
        %v659 = vmul.f32 %v649, %v498
        %v660 = vmul.f32 %v649, %v502
        %v661 = vmul.f32 %v649, %v506
        %v662 = vmul.f32 %v653, %v482
        %v663 = vmul.f32 %v653, %v486
        %v664 = vmul.f32 %v653, %v490
        %v665 = vmul.f32 %v653, %v494
        %v666 = vmul.f32 %v653, %v498
        %v667 = vmul.f32 %v653, %v502
        %v668 = vmul.f32 %v653, %v506
        %683 = vrot.lane.b32.xlu0 %v655, 126
        %v684 = vpop.permute.xlu0 %683
        %685 = vrot.lane.b32.xlu0 %v656, 126
        %v686 = vpop.permute.xlu0 %685
        %687 = vrot.lane.b32.xlu0 %v657, 126
        %v688 = vpop.permute.xlu0 %687
        %689 = vrot.lane.b32.xlu0 %v658, 126
        %v690 = vpop.permute.xlu0 %689
        %691 = vrot.lane.b32.xlu0 %v659, 126
        %v692 = vpop.permute.xlu0 %691
        %693 = vrot.lane.b32.xlu0 %v660, 126
        %v694 = vpop.permute.xlu0 %693
        %695 = vrot.lane.b32.xlu0 %v661, 126
        %v696 = vpop.permute.xlu0 %695
        %697 = vrot.lane.b32.xlu0 %v662, 126
        %v698 = vpop.permute.xlu0 %697
        %699 = vrot.lane.b32.xlu0 %v663, 126
        %v700 = vpop.permute.xlu0 %699
        %701 = vrot.lane.b32.xlu0 %v664, 126
        %v702 = vpop.permute.xlu0 %701
        %703 = vrot.lane.b32.xlu0 %v665, 126
        %v704 = vpop.permute.xlu0 %703
        %705 = vrot.lane.b32.xlu0 %v666, 126
        %v706 = vpop.permute.xlu0 %705
        %707 = vrot.lane.b32.xlu0 %v667, 126
        %v708 = vpop.permute.xlu0 %707
        %709 = vrot.lane.b32.xlu0 %v668, 126
        %v710 = vpop.permute.xlu0 %709
        %vm711 = vcmask 1031168
        %v712 = vsel %vm711, %v684, %v686
        %v713 = vsel %vm711, %v686, %v688
        %v714 = vsel %vm711, %v688, %v690
        %v715 = vsel %vm711, %v690, %v692
        %v716 = vsel %vm711, %v692, %v694
        %v717 = vsel %vm711, %v694, %v696
        %v718 = vsel %vm711, %v698, %v700
        %v719 = vsel %vm711, %v700, %v702
        %v720 = vsel %vm711, %v702, %v704
        %v721 = vsel %vm711, %v704, %v706
        %v722 = vsel %vm711, %v706, %v708
        %v723 = vsel %vm711, %v708, %v710
        %v738 = vadd.f32 %v633, %v712
        %v739 = vadd.f32 %v634, %v713
        %v740 = vadd.f32 %v635, %v714
        %v741 = vadd.f32 %v636, %v715
        %v742 = vadd.f32 %v637, %v716
        %v743 = vadd.f32 %v638, %v717
        %v744 = vadd.f32 %v639, %v696
        %v745 = vadd.f32 %v640, %v718
        %v746 = vadd.f32 %v641, %v719
        %v747 = vadd.f32 %v642, %v720
        %v748 = vadd.f32 %v643, %v721
        %v749 = vadd.f32 %v644, %v722
        %v750 = vadd.f32 %v645, %v723
        %v751 = vadd.f32 %v646, %v710
        %v752 = vld [vmem:[%s464] sm:$0xff]
        %753 = vset.pattern.permute.xlu0 3
        %754 = vperm.xlu0 %753, %v465
        %v755 = vpop.permute.xlu0 %754
        %757 = vset.pattern.permute.xlu0 3
        %758 = vperm.xlu0 %757, %v466
        %v759 = vpop.permute.xlu0 %758
        %v762 = vlaneseq
        %v763 = vshrl.u32 %v762, 7
        %v764 = vsub.s32 0, %v763
        %v765 = vrot.slane %v752, %v764
        %v766 = vlaneseq
        %v767 = vshrl.u32 %v766, 7
        %v768 = vsub.s32 1, %v767
        %v769 = vrot.slane %v752, %v768
        %v770 = vlaneseq
        %v771 = vshrl.u32 %v770, 7
        %v772 = vsub.s32 2, %v771
        %v773 = vrot.slane %v752, %v772
        %v774 = vlaneseq
        %v775 = vshrl.u32 %v774, 7
        %v776 = vsub.s32 3, %v775
        %v777 = vrot.slane %v752, %v776
        %v778 = vlaneseq
        %v779 = vshrl.u32 %v778, 7
        %v780 = vsub.s32 4, %v779
        %v781 = vrot.slane %v752, %v780
        %v782 = vlaneseq
        %v783 = vshrl.u32 %v782, 7
        %v784 = vsub.s32 5, %v783
        %v785 = vrot.slane %v752, %v784
        %v786 = vlaneseq
        %v787 = vshrl.u32 %v786, 7
        %v788 = vsub.s32 6, %v787
        %v789 = vrot.slane %v752, %v788
        %v790 = vlaneseq
        %v791 = vshrl.u32 %v790, 7
        %v792 = vsub.s32 7, %v791
        %v793 = vrot.slane %v752, %v792
        %v802 = vmul.f32 %v755, %v765
        %v803 = vmul.f32 %v755, %v769
        %v804 = vmul.f32 %v755, %v773
        %v805 = vmul.f32 %v755, %v777
        %v806 = vmul.f32 %v755, %v781
        %v807 = vmul.f32 %v755, %v785
        %v808 = vmul.f32 %v755, %v789
        %v809 = vmul.f32 %v755, %v793
        %v810 = vmul.f32 %v759, %v765
        %v811 = vmul.f32 %v759, %v769
        %v812 = vmul.f32 %v759, %v773
        %v813 = vmul.f32 %v759, %v777
        %v814 = vmul.f32 %v759, %v781
        %v815 = vmul.f32 %v759, %v785
        %v816 = vmul.f32 %v759, %v789
        %v817 = vmul.f32 %v759, %v793
        %834 = vrot.lane.b32.xlu0 %v802, 96
        %v835 = vpop.permute.xlu0 %834
        %836 = vrot.lane.b32.xlu0 %v803, 96
        %v837 = vpop.permute.xlu0 %836
        %838 = vrot.lane.b32.xlu0 %v804, 96
        %v839 = vpop.permute.xlu0 %838
        %840 = vrot.lane.b32.xlu0 %v805, 96
        %v841 = vpop.permute.xlu0 %840
        %842 = vrot.lane.b32.xlu0 %v806, 96
        %v843 = vpop.permute.xlu0 %842
        %844 = vrot.lane.b32.xlu0 %v807, 96
        %v845 = vpop.permute.xlu0 %844
        %846 = vrot.lane.b32.xlu0 %v808, 96
        %v847 = vpop.permute.xlu0 %846
        %848 = vrot.lane.b32.xlu0 %v809, 96
        %v849 = vpop.permute.xlu0 %848
        %850 = vrot.lane.b32.xlu0 %v810, 96
        %v851 = vpop.permute.xlu0 %850
        %852 = vrot.lane.b32.xlu0 %v811, 96
        %v853 = vpop.permute.xlu0 %852
        %854 = vrot.lane.b32.xlu0 %v812, 96
        %v855 = vpop.permute.xlu0 %854
        %856 = vrot.lane.b32.xlu0 %v813, 96
        %v857 = vpop.permute.xlu0 %856
        %858 = vrot.lane.b32.xlu0 %v814, 96
        %v859 = vpop.permute.xlu0 %858
        %860 = vrot.lane.b32.xlu0 %v815, 96
        %v861 = vpop.permute.xlu0 %860
        %862 = vrot.lane.b32.xlu0 %v816, 96
        %v863 = vpop.permute.xlu0 %862
        %864 = vrot.lane.b32.xlu0 %v817, 96
        %v865 = vpop.permute.xlu0 %864
        %vm866 = vcmask 785408
        %v867 = vsel %vm866, %v835, %v837
        %v868 = vsel %vm866, %v837, %v839
        %v869 = vsel %vm866, %v839, %v841
        %v870 = vsel %vm866, %v841, %v843
        %v871 = vsel %vm866, %v843, %v845
        %v872 = vsel %vm866, %v845, %v847
        %v873 = vsel %vm866, %v847, %v849
        %v874 = vsel %vm866, %v851, %v853
        %v875 = vsel %vm866, %v853, %v855
        %v876 = vsel %vm866, %v855, %v857
        %v877 = vsel %vm866, %v857, %v859
        %v878 = vsel %vm866, %v859, %v861
        %v879 = vsel %vm866, %v861, %v863
        %v880 = vsel %vm866, %v863, %v865
        %v895 = vadd.f32 %v738, %v867
        %v896 = vadd.f32 %v739, %v868
        %v897 = vadd.f32 %v740, %v869
        %v898 = vadd.f32 %v741, %v870
        %v899 = vadd.f32 %v742, %v871
        %v900 = vadd.f32 %v743, %v872
        %v901 = vadd.f32 %v744, %v873
        %v902 = vadd.f32 %v745, %v874
        %v903 = vadd.f32 %v746, %v875
        %v904 = vadd.f32 %v747, %v876
        %v905 = vadd.f32 %v748, %v877
        %v906 = vadd.f32 %v749, %v878
        %v907 = vadd.f32 %v750, %v879
        %v908 = vadd.f32 %v751, %v880
        %909 = vset.pattern.permute.xlu0 4
        %910 = vperm.xlu0 %909, %v465
        %v911 = vpop.permute.xlu0 %910
        %913 = vset.pattern.permute.xlu0 4
        %914 = vperm.xlu0 %913, %v466
        %v915 = vpop.permute.xlu0 %914
        %v917 = vmul.f32 %v911, %v765
        %v918 = vmul.f32 %v911, %v769
        %v919 = vmul.f32 %v911, %v773
        %v920 = vmul.f32 %v911, %v777
        %v921 = vmul.f32 %v911, %v781
        %v922 = vmul.f32 %v911, %v785
        %v923 = vmul.f32 %v911, %v789
        %v924 = vmul.f32 %v911, %v793
        %v925 = vmul.f32 %v915, %v765
        %v926 = vmul.f32 %v915, %v769
        %v927 = vmul.f32 %v915, %v773
        %v928 = vmul.f32 %v915, %v777
        %v929 = vmul.f32 %v915, %v781
        %v930 = vmul.f32 %v915, %v785
        %v931 = vmul.f32 %v915, %v789
        %v932 = vmul.f32 %v915, %v793
        %949 = vrot.lane.b32.xlu0 %v917, 95
        %v950 = vpop.permute.xlu0 %949
        %951 = vrot.lane.b32.xlu0 %v918, 95
        %v952 = vpop.permute.xlu0 %951
        %953 = vrot.lane.b32.xlu0 %v919, 95
        %v954 = vpop.permute.xlu0 %953
        %955 = vrot.lane.b32.xlu0 %v920, 95
        %v956 = vpop.permute.xlu0 %955
        %957 = vrot.lane.b32.xlu0 %v921, 95
        %v958 = vpop.permute.xlu0 %957
        %959 = vrot.lane.b32.xlu0 %v922, 95
        %v960 = vpop.permute.xlu0 %959
        %961 = vrot.lane.b32.xlu0 %v923, 95
        %v962 = vpop.permute.xlu0 %961
        %963 = vrot.lane.b32.xlu0 %v924, 95
        %v964 = vpop.permute.xlu0 %963
        %965 = vrot.lane.b32.xlu0 %v925, 95
        %v966 = vpop.permute.xlu0 %965
        %967 = vrot.lane.b32.xlu0 %v926, 95
        %v968 = vpop.permute.xlu0 %967
        %969 = vrot.lane.b32.xlu0 %v927, 95
        %v970 = vpop.permute.xlu0 %969
        %971 = vrot.lane.b32.xlu0 %v928, 95
        %v972 = vpop.permute.xlu0 %971
        %973 = vrot.lane.b32.xlu0 %v929, 95
        %v974 = vpop.permute.xlu0 %973
        %975 = vrot.lane.b32.xlu0 %v930, 95
        %v976 = vpop.permute.xlu0 %975
        %977 = vrot.lane.b32.xlu0 %v931, 95
        %v978 = vpop.permute.xlu0 %977
        %979 = vrot.lane.b32.xlu0 %v932, 95
        %v980 = vpop.permute.xlu0 %979
        %vm981 = vcmask 777216
        %v982 = vsel %vm981, %v950, %v952
        %v983 = vsel %vm981, %v952, %v954
        %v984 = vsel %vm981, %v954, %v956
        %v985 = vsel %vm981, %v956, %v958
        %v986 = vsel %vm981, %v958, %v960
        %v987 = vsel %vm981, %v960, %v962
        %v988 = vsel %vm981, %v962, %v964
        %v989 = vsel %vm981, %v966, %v968
        %v990 = vsel %vm981, %v968, %v970
        %v991 = vsel %vm981, %v970, %v972
        %v992 = vsel %vm981, %v972, %v974
        %v993 = vsel %vm981, %v974, %v976
        %v994 = vsel %vm981, %v976, %v978
        %v995 = vsel %vm981, %v978, %v980
        %v1010 = vadd.f32 %v895, %v982
        %v1011 = vadd.f32 %v896, %v983
        %v1012 = vadd.f32 %v897, %v984
        %v1013 = vadd.f32 %v898, %v985
        %v1014 = vadd.f32 %v899, %v986
        %v1015 = vadd.f32 %v900, %v987
        %v1016 = vadd.f32 %v901, %v988
        %v1017 = vadd.f32 %v902, %v989
        %v1018 = vadd.f32 %v903, %v990
        %v1019 = vadd.f32 %v904, %v991
        %v1020 = vadd.f32 %v905, %v992
        %v1021 = vadd.f32 %v906, %v993
        %v1022 = vadd.f32 %v907, %v994
        %v1023 = vadd.f32 %v908, %v995
        %1024 = vset.pattern.permute.xlu0 5
        %1025 = vperm.xlu0 %1024, %v465
        %v1026 = vpop.permute.xlu0 %1025
        %1028 = vset.pattern.permute.xlu0 5
        %1029 = vperm.xlu0 %1028, %v466
        %v1030 = vpop.permute.xlu0 %1029
        %v1032 = vmul.f32 %v1026, %v765
        %v1033 = vmul.f32 %v1026, %v769
        %v1034 = vmul.f32 %v1026, %v773
        %v1035 = vmul.f32 %v1026, %v777
        %v1036 = vmul.f32 %v1026, %v781
        %v1037 = vmul.f32 %v1026, %v785
        %v1038 = vmul.f32 %v1026, %v789
        %v1039 = vmul.f32 %v1026, %v793
        %v1040 = vmul.f32 %v1030, %v765
        %v1041 = vmul.f32 %v1030, %v769
        %v1042 = vmul.f32 %v1030, %v773
        %v1043 = vmul.f32 %v1030, %v777
        %v1044 = vmul.f32 %v1030, %v781
        %v1045 = vmul.f32 %v1030, %v785
        %v1046 = vmul.f32 %v1030, %v789
        %v1047 = vmul.f32 %v1030, %v793
        %1064 = vrot.lane.b32.xlu0 %v1032, 94
        %v1065 = vpop.permute.xlu0 %1064
        %1066 = vrot.lane.b32.xlu0 %v1033, 94
        %v1067 = vpop.permute.xlu0 %1066
        %1068 = vrot.lane.b32.xlu0 %v1034, 94
        %v1069 = vpop.permute.xlu0 %1068
        %1070 = vrot.lane.b32.xlu0 %v1035, 94
        %v1071 = vpop.permute.xlu0 %1070
        %1072 = vrot.lane.b32.xlu0 %v1036, 94
        %v1073 = vpop.permute.xlu0 %1072
        %1074 = vrot.lane.b32.xlu0 %v1037, 94
        %v1075 = vpop.permute.xlu0 %1074
        %1076 = vrot.lane.b32.xlu0 %v1038, 94
        %v1077 = vpop.permute.xlu0 %1076
        %1078 = vrot.lane.b32.xlu0 %v1039, 94
        %v1079 = vpop.permute.xlu0 %1078
        %1080 = vrot.lane.b32.xlu0 %v1040, 94
        %v1081 = vpop.permute.xlu0 %1080
        %1082 = vrot.lane.b32.xlu0 %v1041, 94
        %v1083 = vpop.permute.xlu0 %1082
        %1084 = vrot.lane.b32.xlu0 %v1042, 94
        %v1085 = vpop.permute.xlu0 %1084
        %1086 = vrot.lane.b32.xlu0 %v1043, 94
        %v1087 = vpop.permute.xlu0 %1086
        %1088 = vrot.lane.b32.xlu0 %v1044, 94
        %v1089 = vpop.permute.xlu0 %1088
        %1090 = vrot.lane.b32.xlu0 %v1045, 94
        %v1091 = vpop.permute.xlu0 %1090
        %1092 = vrot.lane.b32.xlu0 %v1046, 94
        %v1093 = vpop.permute.xlu0 %1092
        %1094 = vrot.lane.b32.xlu0 %v1047, 94
        %v1095 = vpop.permute.xlu0 %1094
        %vm1096 = vcmask 769024
        %v1097 = vsel %vm1096, %v1065, %v1067
        %v1098 = vsel %vm1096, %v1067, %v1069
        %v1099 = vsel %vm1096, %v1069, %v1071
        %v1100 = vsel %vm1096, %v1071, %v1073
        %v1101 = vsel %vm1096, %v1073, %v1075
        %v1102 = vsel %vm1096, %v1075, %v1077
        %v1103 = vsel %vm1096, %v1077, %v1079
        %v1104 = vsel %vm1096, %v1081, %v1083
        %v1105 = vsel %vm1096, %v1083, %v1085
        %v1106 = vsel %vm1096, %v1085, %v1087
        %v1107 = vsel %vm1096, %v1087, %v1089
        %v1108 = vsel %vm1096, %v1089, %v1091
        %v1109 = vsel %vm1096, %v1091, %v1093
        %v1110 = vsel %vm1096, %v1093, %v1095
        %v1125 = vadd.f32 %v1010, %v1097
        %v1126 = vadd.f32 %v1011, %v1098
        %v1127 = vadd.f32 %v1012, %v1099
        %v1128 = vadd.f32 %v1013, %v1100
        %v1129 = vadd.f32 %v1014, %v1101
        %v1130 = vadd.f32 %v1015, %v1102
        %v1131 = vadd.f32 %v1016, %v1103
        %v1132 = vadd.f32 %v1017, %v1104
        %v1133 = vadd.f32 %v1018, %v1105
        %v1134 = vadd.f32 %v1019, %v1106
        %v1135 = vadd.f32 %v1020, %v1107
        %v1136 = vadd.f32 %v1021, %v1108
        %v1137 = vadd.f32 %v1022, %v1109
        %v1138 = vadd.f32 %v1023, %v1110
        %1139 = vset.pattern.permute.xlu0 6
        %1140 = vperm.xlu0 %1139, %v465
        %v1141 = vpop.permute.xlu0 %1140
        %1143 = vset.pattern.permute.xlu0 6
        %1144 = vperm.xlu0 %1143, %v466
        %v1145 = vpop.permute.xlu0 %1144
        %v1147 = vmul.f32 %v1141, %v765
        %v1148 = vmul.f32 %v1141, %v769
        %v1149 = vmul.f32 %v1141, %v773
        %v1150 = vmul.f32 %v1141, %v777
        %v1151 = vmul.f32 %v1141, %v781
        %v1152 = vmul.f32 %v1141, %v785
        %v1153 = vmul.f32 %v1141, %v789
        %v1154 = vmul.f32 %v1141, %v793
        %v1155 = vmul.f32 %v1145, %v765
        %v1156 = vmul.f32 %v1145, %v769
        %v1157 = vmul.f32 %v1145, %v773
        %v1158 = vmul.f32 %v1145, %v777
        %v1159 = vmul.f32 %v1145, %v781
        %v1160 = vmul.f32 %v1145, %v785
        %v1161 = vmul.f32 %v1145, %v789
        %v1162 = vmul.f32 %v1145, %v793
        %1179 = vrot.lane.b32.xlu0 %v1147, 64
        %v1180 = vpop.permute.xlu0 %1179
        %1181 = vrot.lane.b32.xlu0 %v1148, 64
        %v1182 = vpop.permute.xlu0 %1181
        %1183 = vrot.lane.b32.xlu0 %v1149, 64
        %v1184 = vpop.permute.xlu0 %1183
        %1185 = vrot.lane.b32.xlu0 %v1150, 64
        %v1186 = vpop.permute.xlu0 %1185
        %1187 = vrot.lane.b32.xlu0 %v1151, 64
        %v1188 = vpop.permute.xlu0 %1187
        %1189 = vrot.lane.b32.xlu0 %v1152, 64
        %v1190 = vpop.permute.xlu0 %1189
        %1191 = vrot.lane.b32.xlu0 %v1153, 64
        %v1192 = vpop.permute.xlu0 %1191
        %1193 = vrot.lane.b32.xlu0 %v1154, 64
        %v1194 = vpop.permute.xlu0 %1193
        %1195 = vrot.lane.b32.xlu0 %v1155, 64
        %v1196 = vpop.permute.xlu0 %1195
        %1197 = vrot.lane.b32.xlu0 %v1156, 64
        %v1198 = vpop.permute.xlu0 %1197
        %1199 = vrot.lane.b32.xlu0 %v1157, 64
        %v1200 = vpop.permute.xlu0 %1199
        %1201 = vrot.lane.b32.xlu0 %v1158, 64
        %v1202 = vpop.permute.xlu0 %1201
        %1203 = vrot.lane.b32.xlu0 %v1159, 64
        %v1204 = vpop.permute.xlu0 %1203
        %1205 = vrot.lane.b32.xlu0 %v1160, 64
        %v1206 = vpop.permute.xlu0 %1205
        %1207 = vrot.lane.b32.xlu0 %v1161, 64
        %v1208 = vpop.permute.xlu0 %1207
        %1209 = vrot.lane.b32.xlu0 %v1162, 64
        %v1210 = vpop.permute.xlu0 %1209
        %vm1211 = vcmask 523264
        %v1212 = vsel %vm1211, %v1180, %v1182
        %v1213 = vsel %vm1211, %v1182, %v1184
        %v1214 = vsel %vm1211, %v1184, %v1186
        %v1215 = vsel %vm1211, %v1186, %v1188
        %v1216 = vsel %vm1211, %v1188, %v1190
        %v1217 = vsel %vm1211, %v1190, %v1192
        %v1218 = vsel %vm1211, %v1192, %v1194
        %v1219 = vsel %vm1211, %v1196, %v1198
        %v1220 = vsel %vm1211, %v1198, %v1200
        %v1221 = vsel %vm1211, %v1200, %v1202
        %v1222 = vsel %vm1211, %v1202, %v1204
        %v1223 = vsel %vm1211, %v1204, %v1206
        %v1224 = vsel %vm1211, %v1206, %v1208
        %v1225 = vsel %vm1211, %v1208, %v1210
        %v1240 = vadd.f32 %v1125, %v1212
        %v1241 = vadd.f32 %v1126, %v1213
        %v1242 = vadd.f32 %v1127, %v1214
        %v1243 = vadd.f32 %v1128, %v1215
        %v1244 = vadd.f32 %v1129, %v1216
        %v1245 = vadd.f32 %v1130, %v1217
        %v1246 = vadd.f32 %v1131, %v1218
        %v1247 = vadd.f32 %v1132, %v1219
        %v1248 = vadd.f32 %v1133, %v1220
        %v1249 = vadd.f32 %v1134, %v1221
        %v1250 = vadd.f32 %v1135, %v1222
        %v1251 = vadd.f32 %v1136, %v1223
        %v1252 = vadd.f32 %v1137, %v1224
        %v1253 = vadd.f32 %v1138, %v1225
        %1254 = vset.pattern.permute.xlu0 7
        %1255 = vperm.xlu0 %1254, %v465
        %v1256 = vpop.permute.xlu0 %1255
        %1258 = vset.pattern.permute.xlu0 7
        %1259 = vperm.xlu0 %1258, %v466
        %v1260 = vpop.permute.xlu0 %1259
        %v1262 = vmul.f32 %v1256, %v765
        %v1263 = vmul.f32 %v1256, %v769
        %v1264 = vmul.f32 %v1256, %v773
        %v1265 = vmul.f32 %v1256, %v777
        %v1266 = vmul.f32 %v1256, %v781
        %v1267 = vmul.f32 %v1256, %v785
        %v1268 = vmul.f32 %v1256, %v789
        %v1269 = vmul.f32 %v1256, %v793
        %v1270 = vmul.f32 %v1260, %v765
        %v1271 = vmul.f32 %v1260, %v769
        %v1272 = vmul.f32 %v1260, %v773
        %v1273 = vmul.f32 %v1260, %v777
        %v1274 = vmul.f32 %v1260, %v781
        %v1275 = vmul.f32 %v1260, %v785
        %v1276 = vmul.f32 %v1260, %v789
        %v1277 = vmul.f32 %v1260, %v793
        %1294 = vrot.lane.b32.xlu0 %v1262, 63
        %v1295 = vpop.permute.xlu0 %1294
        %1296 = vrot.lane.b32.xlu0 %v1263, 63
        %v1297 = vpop.permute.xlu0 %1296
        %1298 = vrot.lane.b32.xlu0 %v1264, 63
        %v1299 = vpop.permute.xlu0 %1298
        %1300 = vrot.lane.b32.xlu0 %v1265, 63
        %v1301 = vpop.permute.xlu0 %1300
        %1302 = vrot.lane.b32.xlu0 %v1266, 63
        %v1303 = vpop.permute.xlu0 %1302
        %1304 = vrot.lane.b32.xlu0 %v1267, 63
        %v1305 = vpop.permute.xlu0 %1304
        %1306 = vrot.lane.b32.xlu0 %v1268, 63
        %v1307 = vpop.permute.xlu0 %1306
        %1308 = vrot.lane.b32.xlu0 %v1269, 63
        %v1309 = vpop.permute.xlu0 %1308
        %1310 = vrot.lane.b32.xlu0 %v1270, 63
        %v1311 = vpop.permute.xlu0 %1310
        %1312 = vrot.lane.b32.xlu0 %v1271, 63
        %v1313 = vpop.permute.xlu0 %1312
        %1314 = vrot.lane.b32.xlu0 %v1272, 63
        %v1315 = vpop.permute.xlu0 %1314
        %1316 = vrot.lane.b32.xlu0 %v1273, 63
        %v1317 = vpop.permute.xlu0 %1316
        %1318 = vrot.lane.b32.xlu0 %v1274, 63
        %v1319 = vpop.permute.xlu0 %1318
        %1320 = vrot.lane.b32.xlu0 %v1275, 63
        %v1321 = vpop.permute.xlu0 %1320
        %1322 = vrot.lane.b32.xlu0 %v1276, 63
        %v1323 = vpop.permute.xlu0 %1322
        %1324 = vrot.lane.b32.xlu0 %v1277, 63
        %v1325 = vpop.permute.xlu0 %1324
        %vm1326 = vcmask 515072
        %v1327 = vsel %vm1326, %v1295, %v1297
        %v1328 = vsel %vm1326, %v1297, %v1299
        %v1329 = vsel %vm1326, %v1299, %v1301
        %v1330 = vsel %vm1326, %v1301, %v1303
        %v1331 = vsel %vm1326, %v1303, %v1305
        %v1332 = vsel %vm1326, %v1305, %v1307
        %v1333 = vsel %vm1326, %v1307, %v1309
        %v1334 = vsel %vm1326, %v1311, %v1313
        %v1335 = vsel %vm1326, %v1313, %v1315
        %v1336 = vsel %vm1326, %v1315, %v1317
        %v1337 = vsel %vm1326, %v1317, %v1319
        %v1338 = vsel %vm1326, %v1319, %v1321
        %v1339 = vsel %vm1326, %v1321, %v1323
        %v1340 = vsel %vm1326, %v1323, %v1325
        %v1355 = vadd.f32 %v1240, %v1327
        %v1356 = vadd.f32 %v1241, %v1328
        %v1357 = vadd.f32 %v1242, %v1329
        %v1358 = vadd.f32 %v1243, %v1330
        %v1359 = vadd.f32 %v1244, %v1331
        %v1360 = vadd.f32 %v1245, %v1332
        %v1361 = vadd.f32 %v1246, %v1333
        %v1362 = vadd.f32 %v1247, %v1334
        %v1363 = vadd.f32 %v1248, %v1335
        %v1364 = vadd.f32 %v1249, %v1336
        %v1365 = vadd.f32 %v1250, %v1337
        %v1366 = vadd.f32 %v1251, %v1338
        %v1367 = vadd.f32 %v1252, %v1339
        %v1368 = vadd.f32 %v1253, %v1340
        %1369 = vset.pattern.permute.xlu0 8
        %1370 = vperm.xlu0 %1369, %v465
        %v1371 = vpop.permute.xlu0 %1370
        %1373 = vset.pattern.permute.xlu0 8
        %1374 = vperm.xlu0 %1373, %v466
        %v1375 = vpop.permute.xlu0 %1374
        %v1377 = vmul.f32 %v1371, %v765
        %v1378 = vmul.f32 %v1371, %v769
        %v1379 = vmul.f32 %v1371, %v773
        %v1380 = vmul.f32 %v1371, %v777
        %v1381 = vmul.f32 %v1371, %v781
        %v1382 = vmul.f32 %v1371, %v785
        %v1383 = vmul.f32 %v1371, %v789
        %v1384 = vmul.f32 %v1371, %v793
        %v1385 = vmul.f32 %v1375, %v765
        %v1386 = vmul.f32 %v1375, %v769
        %v1387 = vmul.f32 %v1375, %v773
        %v1388 = vmul.f32 %v1375, %v777
        %v1389 = vmul.f32 %v1375, %v781
        %v1390 = vmul.f32 %v1375, %v785
        %v1391 = vmul.f32 %v1375, %v789
        %v1392 = vmul.f32 %v1375, %v793
        %1409 = vrot.lane.b32.xlu0 %v1377, 62
        %v1410 = vpop.permute.xlu0 %1409
        %1411 = vrot.lane.b32.xlu0 %v1378, 62
        %v1412 = vpop.permute.xlu0 %1411
        %1413 = vrot.lane.b32.xlu0 %v1379, 62
        %v1414 = vpop.permute.xlu0 %1413
        %1415 = vrot.lane.b32.xlu0 %v1380, 62
        %v1416 = vpop.permute.xlu0 %1415
        %1417 = vrot.lane.b32.xlu0 %v1381, 62
        %v1418 = vpop.permute.xlu0 %1417
        %1419 = vrot.lane.b32.xlu0 %v1382, 62
        %v1420 = vpop.permute.xlu0 %1419
        %1421 = vrot.lane.b32.xlu0 %v1383, 62
        %v1422 = vpop.permute.xlu0 %1421
        %1423 = vrot.lane.b32.xlu0 %v1384, 62
        %v1424 = vpop.permute.xlu0 %1423
        %1425 = vrot.lane.b32.xlu0 %v1385, 62
        %v1426 = vpop.permute.xlu0 %1425
        %1427 = vrot.lane.b32.xlu0 %v1386, 62
        %v1428 = vpop.permute.xlu0 %1427
        %1429 = vrot.lane.b32.xlu0 %v1387, 62
        %v1430 = vpop.permute.xlu0 %1429
        %1431 = vrot.lane.b32.xlu0 %v1388, 62
        %v1432 = vpop.permute.xlu0 %1431
        %1433 = vrot.lane.b32.xlu0 %v1389, 62
        %v1434 = vpop.permute.xlu0 %1433
        %1435 = vrot.lane.b32.xlu0 %v1390, 62
        %v1436 = vpop.permute.xlu0 %1435
        %1437 = vrot.lane.b32.xlu0 %v1391, 62
        %v1438 = vpop.permute.xlu0 %1437
        %1439 = vrot.lane.b32.xlu0 %v1392, 62
        %v1440 = vpop.permute.xlu0 %1439
        %vm1441 = vcmask 506880
        %v1442 = vsel %vm1441, %v1410, %v1412
        %v1443 = vsel %vm1441, %v1412, %v1414
        %v1444 = vsel %vm1441, %v1414, %v1416
        %v1445 = vsel %vm1441, %v1416, %v1418
        %v1446 = vsel %vm1441, %v1418, %v1420
        %v1447 = vsel %vm1441, %v1420, %v1422
        %v1448 = vsel %vm1441, %v1422, %v1424
        %v1449 = vsel %vm1441, %v1426, %v1428
        %v1450 = vsel %vm1441, %v1428, %v1430
        %v1451 = vsel %vm1441, %v1430, %v1432
        %v1452 = vsel %vm1441, %v1432, %v1434
        %v1453 = vsel %vm1441, %v1434, %v1436
        %v1454 = vsel %vm1441, %v1436, %v1438
        %v1455 = vsel %vm1441, %v1438, %v1440
        %v1470 = vadd.f32 %v1355, %v1442
        %v1471 = vadd.f32 %v1356, %v1443
        %v1472 = vadd.f32 %v1357, %v1444
        %v1473 = vadd.f32 %v1358, %v1445
        %v1474 = vadd.f32 %v1359, %v1446
        %v1475 = vadd.f32 %v1360, %v1447
        %v1476 = vadd.f32 %v1361, %v1448
        %v1477 = vadd.f32 %v1362, %v1449
        %v1478 = vadd.f32 %v1363, %v1450
        %v1479 = vadd.f32 %v1364, %v1451
        %v1480 = vadd.f32 %v1365, %v1452
        %v1481 = vadd.f32 %v1366, %v1453
        %v1482 = vadd.f32 %v1367, %v1454
        %v1483 = vadd.f32 %v1368, %v1455
        %v1484 = vld [vmem:[%s2] sm:$0xff]
        %v1485 = vld [vmem:[%s2 + $0x8] sm:$0xff]
        %1487 = vset.pattern.permute.xlu0 0
        %1488 = vperm.xlu0 %1487, %v1484
        %v1489 = vpop.permute.xlu0 %1488
        %1492 = vset.pattern.permute.xlu0 0
        %1493 = vperm.xlu0 %1492, %v1485
        %v1494 = vpop.permute.xlu0 %1493
        %v1496 = vadd.f32 %v1470, %v1489
        %v1497 = vadd.f32 %v1471, %v1489
        %v1498 = vadd.f32 %v1472, %v1489
        %v1499 = vadd.f32 %v1473, %v1489
        %v1500 = vadd.f32 %v1474, %v1489
        %v1501 = vadd.f32 %v1475, %v1489
        %v1502 = vadd.f32 %v1476, %v1489
        %v1503 = vadd.f32 %v1477, %v1494
        %v1504 = vadd.f32 %v1478, %v1494
        %v1505 = vadd.f32 %v1479, %v1494
        %v1506 = vadd.f32 %v1480, %v1494
        %v1507 = vadd.f32 %v1481, %v1494
        %v1508 = vadd.f32 %v1482, %v1494
        %v1509 = vadd.f32 %v1483, %v1494
        %1524 = vrot.lane.b32.xlu0 %v1496, 127
        %v1525 = vpop.permute.xlu0 %1524
        %1526 = vrot.lane.b32.xlu0 %v1497, 127
        %v1527 = vpop.permute.xlu0 %1526
        %1528 = vrot.lane.b32.xlu0 %v1498, 127
        %v1529 = vpop.permute.xlu0 %1528
        %1530 = vrot.lane.b32.xlu0 %v1499, 127
        %v1531 = vpop.permute.xlu0 %1530
        %1532 = vrot.lane.b32.xlu0 %v1500, 127
        %v1533 = vpop.permute.xlu0 %1532
        %1534 = vrot.lane.b32.xlu0 %v1501, 127
        %v1535 = vpop.permute.xlu0 %1534
        %1536 = vrot.lane.b32.xlu0 %v1502, 127
        %v1537 = vpop.permute.xlu0 %1536
        %1538 = vrot.lane.b32.xlu0 %v1503, 127
        %v1539 = vpop.permute.xlu0 %1538
        %1540 = vrot.lane.b32.xlu0 %v1504, 127
        %v1541 = vpop.permute.xlu0 %1540
        %1542 = vrot.lane.b32.xlu0 %v1505, 127
        %v1543 = vpop.permute.xlu0 %1542
        %1544 = vrot.lane.b32.xlu0 %v1506, 127
        %v1545 = vpop.permute.xlu0 %1544
        %1546 = vrot.lane.b32.xlu0 %v1507, 127
        %v1547 = vpop.permute.xlu0 %1546
        %1548 = vrot.lane.b32.xlu0 %v1508, 127
        %v1549 = vpop.permute.xlu0 %1548
        %1550 = vrot.lane.b32.xlu0 %v1509, 127
        %v1551 = vpop.permute.xlu0 %1550
        %v1552 = vsel %vm606, %v1525, %v1527
        %v1553 = vsel %vm606, %v1527, %v1529
        %v1554 = vsel %vm606, %v1529, %v1531
        %v1555 = vsel %vm606, %v1531, %v1533
        %v1556 = vsel %vm606, %v1533, %v1535
        %v1557 = vsel %vm606, %v1535, %v1537
        %v1558 = vsel %vm606, %v1539, %v1541
        %v1559 = vsel %vm606, %v1541, %v1543
        %v1560 = vsel %vm606, %v1543, %v1545
        %v1561 = vsel %vm606, %v1545, %v1547
        %v1562 = vsel %vm606, %v1547, %v1549
        %v1563 = vsel %vm606, %v1549, %v1551
        %v1578 = vmax.f32 %v1496, %v1552
        %v1579 = vmax.f32 %v1497, %v1553
        %v1580 = vmax.f32 %v1498, %v1554
        %v1581 = vmax.f32 %v1499, %v1555
        %v1582 = vmax.f32 %v1500, %v1556
        %v1583 = vmax.f32 %v1501, %v1557
        %v1584 = vmax.f32 %v1502, %v1537
        %v1585 = vmax.f32 %v1503, %v1558
        %v1586 = vmax.f32 %v1504, %v1559
        %v1587 = vmax.f32 %v1505, %v1560
        %v1588 = vmax.f32 %v1506, %v1561
        %v1589 = vmax.f32 %v1507, %v1562
        %v1590 = vmax.f32 %v1508, %v1563
        %v1591 = vmax.f32 %v1509, %v1551
        %1606 = vrot.lane.b32.xlu0 %v1578, 96
        %v1607 = vpop.permute.xlu0 %1606
        %1608 = vrot.lane.b32.xlu0 %v1579, 96
        %v1609 = vpop.permute.xlu0 %1608
        %1610 = vrot.lane.b32.xlu0 %v1580, 96
        %v1611 = vpop.permute.xlu0 %1610
        %1612 = vrot.lane.b32.xlu0 %v1581, 96
        %v1613 = vpop.permute.xlu0 %1612
        %1614 = vrot.lane.b32.xlu0 %v1582, 96
        %v1615 = vpop.permute.xlu0 %1614
        %1616 = vrot.lane.b32.xlu0 %v1583, 96
        %v1617 = vpop.permute.xlu0 %1616
        %1618 = vrot.lane.b32.xlu0 %v1584, 96
        %v1619 = vpop.permute.xlu0 %1618
        %1620 = vrot.lane.b32.xlu0 %v1585, 96
        %v1621 = vpop.permute.xlu0 %1620
        %1622 = vrot.lane.b32.xlu0 %v1586, 96
        %v1623 = vpop.permute.xlu0 %1622
        %1624 = vrot.lane.b32.xlu0 %v1587, 96
        %v1625 = vpop.permute.xlu0 %1624
        %1626 = vrot.lane.b32.xlu0 %v1588, 96
        %v1627 = vpop.permute.xlu0 %1626
        %1628 = vrot.lane.b32.xlu0 %v1589, 96
        %v1629 = vpop.permute.xlu0 %1628
        %1630 = vrot.lane.b32.xlu0 %v1590, 96
        %v1631 = vpop.permute.xlu0 %1630
        %1632 = vrot.lane.b32.xlu0 %v1591, 96
        %v1633 = vpop.permute.xlu0 %1632
        %v1634 = vsel %vm866, %v1607, %v1609
        %v1635 = vsel %vm866, %v1609, %v1611
        %v1636 = vsel %vm866, %v1611, %v1613
        %v1637 = vsel %vm866, %v1613, %v1615
        %v1638 = vsel %vm866, %v1615, %v1617
        %v1639 = vsel %vm866, %v1617, %v1619
        %v1640 = vsel %vm866, %v1621, %v1623
        %v1641 = vsel %vm866, %v1623, %v1625
        %v1642 = vsel %vm866, %v1625, %v1627
        %v1643 = vsel %vm866, %v1627, %v1629
        %v1644 = vsel %vm866, %v1629, %v1631
        %v1645 = vsel %vm866, %v1631, %v1633
        %v1660 = vmax.f32 %v1578, %v1634
        %v1661 = vmax.f32 %v1579, %v1635
        %v1662 = vmax.f32 %v1580, %v1636
        %v1663 = vmax.f32 %v1581, %v1637
        %v1664 = vmax.f32 %v1582, %v1638
        %v1665 = vmax.f32 %v1583, %v1639
        %v1666 = vmax.f32 %v1584, %v1619
        %v1667 = vmax.f32 %v1585, %v1640
        %v1668 = vmax.f32 %v1586, %v1641
        %v1669 = vmax.f32 %v1587, %v1642
        %v1670 = vmax.f32 %v1588, %v1643
        %v1671 = vmax.f32 %v1589, %v1644
        %v1672 = vmax.f32 %v1590, %v1645
        %v1673 = vmax.f32 %v1591, %v1633
        %v1674 = vld [vmem:[#allocation6] sm:$0xff]
        %v1675 = vld [vmem:[#allocation6 + $0x8] sm:$0xff]
        %v1676 = vld [vmem:[#allocation6 + $0x10] sm:$0xff]
        %v1677 = vld [vmem:[#allocation6 + $0x18] sm:$0xff]
        %v1678 = vld [vmem:[#allocation6 + $0x20] sm:$0xff]
        %v1679 = vld [vmem:[#allocation6 + $0x28] sm:$0xff]
        %v1680 = vld [vmem:[#allocation6 + $0x30] sm:$0xff]
        %v1681 = vld [vmem:[#allocation6 + $0x38] sm:$0xff]
        %v1682 = vld [vmem:[#allocation6 + $0x40] sm:$0xff]
        %v1683 = vld [vmem:[#allocation6 + $0x48] sm:$0xff]
        %v1684 = vld [vmem:[#allocation6 + $0x50] sm:$0xff]
        %v1685 = vld [vmem:[#allocation6 + $0x58] sm:$0xff]
        %v1686 = vld [vmem:[#allocation6 + $0x60] sm:$0xff]
        %v1687 = vld [vmem:[#allocation6 + $0x68] sm:$0xff]
        %v1688 = vld [vmem:[#allocation6 + $0x70] sm:$0xff]
        %v1689 = vld [vmem:[#allocation6 + $0x78] sm:$0xff]
        %v1690 = vld [vmem:[#allocation6 + $0x80] sm:$0xff]
        %v1691 = vld [vmem:[#allocation6 + $0x88] sm:$0xff]
        %v1692 = vld [vmem:[#allocation6 + $0x90] sm:$0xff]
        %v1693 = vld [vmem:[#allocation6 + $0x98] sm:$0xff]
        %v1694 = vld [vmem:[#allocation6 + $0xa0] sm:$0xff]
        %v1695 = vld [vmem:[#allocation6 + $0xa8] sm:$0xff]
        %v1696 = vld [vmem:[#allocation6 + $0xb0] sm:$0xff]
        %v1697 = vld [vmem:[#allocation6 + $0xb8] sm:$0xff]
        %v1698 = vld [vmem:[#allocation6 + $0xc0] sm:$0xff]
        %v1699 = vld [vmem:[#allocation6 + $0xc8] sm:$0xff]
        %v1700 = vld [vmem:[#allocation6 + $0xd0] sm:$0xff]
        %v1701 = vld [vmem:[#allocation6 + $0xd8] sm:$0xff]
        %v1702 = vld [vmem:[#allocation6 + $0xe0] sm:$0xff]
        %v1703 = vld [vmem:[#allocation6 + $0xe8] sm:$0xff]
        %v1704 = vld [vmem:[#allocation6 + $0xf0] sm:$0xff]
        %v1705 = vld [vmem:[#allocation6 + $0xf8] sm:$0xff]
        %v1706 = vld [vmem:[#allocation6 + $0x100] sm:$0xff]
        %v1707 = vld [vmem:[#allocation6 + $0x108] sm:$0xff]
        %v1708 = vld [vmem:[#allocation6 + $0x110] sm:$0xff]
        %v1709 = vld [vmem:[#allocation6 + $0x118] sm:$0xff]
        %v1710 = vld [vmem:[#allocation6 + $0x120] sm:$0xff]
        %v1711 = vld [vmem:[#allocation6 + $0x128] sm:$0xff]
        %v1712 = vld [vmem:[#allocation6 + $0x130] sm:$0xff]
        %v1713 = vld [vmem:[#allocation6 + $0x138] sm:$0xff]
        %v1714 = vld [vmem:[#allocation6 + $0x140] sm:$0xff]
        %v1715 = vld [vmem:[#allocation6 + $0x148] sm:$0xff]
        %v1716 = vld [vmem:[#allocation6 + $0x150] sm:$0xff]
        %v1717 = vld [vmem:[#allocation6 + $0x158] sm:$0xff]
        %v1718 = vld [vmem:[#allocation6 + $0x160] sm:$0xff]
        %v1719 = vld [vmem:[#allocation6 + $0x168] sm:$0xff]
        %v1720 = vld [vmem:[#allocation6 + $0x170] sm:$0xff]
        %v1721 = vld [vmem:[#allocation6 + $0x178] sm:$0xff]
        %v1722 = vld [vmem:[#allocation6 + $0x180] sm:$0xff]
        %v1723 = vld [vmem:[#allocation6 + $0x188] sm:$0xff]
        %v1724 = vld [vmem:[#allocation6 + $0x190] sm:$0xff]
        %v1725 = vld [vmem:[#allocation6 + $0x198] sm:$0xff]
        %v1726 = vld [vmem:[#allocation6 + $0x1a0] sm:$0xff]
        %v1727 = vld [vmem:[#allocation6 + $0x1a8] sm:$0xff]
        %v1728 = vld [vmem:[#allocation6 + $0x1b0] sm:$0xff]
        %v1729 = vld [vmem:[#allocation6 + $0x1b8] sm:$0xff]
        %v1730 = vld [vmem:[#allocation6 + $0x1c0] sm:$0xff]
        %v1731 = vld [vmem:[#allocation6 + $0x1c8] sm:$0xff]
        %v1732 = vld [vmem:[#allocation6 + $0x1d0] sm:$0xff]
        %v1733 = vld [vmem:[#allocation6 + $0x1d8] sm:$0xff]
        %v1734 = vld [vmem:[#allocation6 + $0x1e0] sm:$0xff]
        %v1735 = vld [vmem:[#allocation6 + $0x1e8] sm:$0xff]
        %v1736 = vld [vmem:[#allocation6 + $0x1f0] sm:$0xff]
        %v1737 = vld [vmem:[#allocation6 + $0x1f8] sm:$0xff]
        %v1738 = vld [vmem:[#allocation6 + $0x200] sm:$0xff]
        %v1739 = vld [vmem:[#allocation6 + $0x208] sm:$0xff]
        %v1740 = vld [vmem:[#allocation6 + $0x210] sm:$0xff]
        %v1741 = vld [vmem:[#allocation6 + $0x218] sm:$0xff]
        %v1742 = vld [vmem:[#allocation6 + $0x220] sm:$0xff]
        %v1743 = vld [vmem:[#allocation6 + $0x228] sm:$0xff]
        %v1744 = vld [vmem:[#allocation6 + $0x230] sm:$0xff]
        %v1745 = vld [vmem:[#allocation6 + $0x238] sm:$0xff]
        %v1746 = vld [vmem:[#allocation6 + $0x240] sm:$0xff]
        %v1747 = vld [vmem:[#allocation6 + $0x248] sm:$0xff]
        %v1748 = vld [vmem:[#allocation6 + $0x250] sm:$0xff]
        %v1749 = vld [vmem:[#allocation6 + $0x258] sm:$0xff]
        %v1750 = vld [vmem:[#allocation6 + $0x260] sm:$0xff]
        %v1751 = vld [vmem:[#allocation6 + $0x268] sm:$0xff]
        %v1752 = vld [vmem:[#allocation6 + $0x270] sm:$0xff]
        %v1753 = vld [vmem:[#allocation6 + $0x278] sm:$0xff]
        %v1754 = vld [vmem:[#allocation6 + $0x280] sm:$0xff]
        %v1755 = vld [vmem:[#allocation6 + $0x288] sm:$0xff]
        %v1756 = vld [vmem:[#allocation6 + $0x290] sm:$0xff]
        %v1757 = vld [vmem:[#allocation6 + $0x298] sm:$0xff]
        %v1758 = vld [vmem:[#allocation6 + $0x2a0] sm:$0xff]
        %v1759 = vld [vmem:[#allocation6 + $0x2a8] sm:$0xff]
        %v1760 = vld [vmem:[#allocation6 + $0x2b0] sm:$0xff]
        %v1761 = vld [vmem:[#allocation6 + $0x2b8] sm:$0xff]
        %v1762 = vld [vmem:[#allocation6 + $0x2c0] sm:$0xff]
        %v1763 = vld [vmem:[#allocation6 + $0x2c8] sm:$0xff]
        %v1764 = vld [vmem:[#allocation6 + $0x2d0] sm:$0xff]
        %v1765 = vld [vmem:[#allocation6 + $0x2d8] sm:$0xff]
        %v1766 = vld [vmem:[#allocation6 + $0x2e0] sm:$0xff]
        %v1767 = vld [vmem:[#allocation6 + $0x2e8] sm:$0xff]
        %v1768 = vld [vmem:[#allocation6 + $0x2f0] sm:$0xff]
        %v1769 = vld [vmem:[#allocation6 + $0x2f8] sm:$0xff]
        %v1770 = vld [vmem:[#allocation6 + $0x300] sm:$0xff]
        %v1771 = vld [vmem:[#allocation6 + $0x308] sm:$0xff]
        %v1772 = vld [vmem:[#allocation6 + $0x310] sm:$0xff]
        %v1773 = vld [vmem:[#allocation6 + $0x318] sm:$0xff]
        %v1774 = vld [vmem:[#allocation6 + $0x320] sm:$0xff]
        %v1775 = vld [vmem:[#allocation6 + $0x328] sm:$0xff]
        %v1776 = vld [vmem:[#allocation6 + $0x330] sm:$0xff]
        %v1777 = vld [vmem:[#allocation6 + $0x338] sm:$0xff]
        %v1778 = vld [vmem:[#allocation6 + $0x340] sm:$0xff]
        %v1779 = vld [vmem:[#allocation6 + $0x348] sm:$0xff]
        %v1780 = vld [vmem:[#allocation6 + $0x350] sm:$0xff]
        %v1781 = vld [vmem:[#allocation6 + $0x358] sm:$0xff]
        %v1782 = vld [vmem:[#allocation6 + $0x360] sm:$0xff]
        %v1783 = vld [vmem:[#allocation6 + $0x368] sm:$0xff]
        %v1784 = vld [vmem:[#allocation6 + $0x370] sm:$0xff]
        %v1785 = vld [vmem:[#allocation6 + $0x378] sm:$0xff]
        %v1786 = vld [vmem:[#allocation6 + $0x380] sm:$0xff]
        %v1787 = vld [vmem:[#allocation6 + $0x388] sm:$0xff]
        %v1788 = vld [vmem:[#allocation6 + $0x390] sm:$0xff]
        %v1789 = vld [vmem:[#allocation6 + $0x398] sm:$0xff]
        %v1790 = vld [vmem:[#allocation6 + $0x3a0] sm:$0xff]
        %v1791 = vld [vmem:[#allocation6 + $0x3a8] sm:$0xff]
        %v1792 = vld [vmem:[#allocation6 + $0x3b0] sm:$0xff]
        %v1793 = vld [vmem:[#allocation6 + $0x3b8] sm:$0xff]
        %v1794 = vld [vmem:[#allocation6 + $0x3c0] sm:$0xff]
        %v1795 = vld [vmem:[#allocation6 + $0x3c8] sm:$0xff]
        %v1796 = vld [vmem:[#allocation6 + $0x3d0] sm:$0xff]
        %v1797 = vld [vmem:[#allocation6 + $0x3d8] sm:$0xff]
        %v1798 = vld [vmem:[#allocation6 + $0x3e0] sm:$0xff]
        %v1799 = vld [vmem:[#allocation6 + $0x3e8] sm:$0xff]
        %v1800 = vld [vmem:[#allocation6 + $0x3f0] sm:$0xff]
        %v1801 = vld [vmem:[#allocation6 + $0x3f8] sm:$0xff]
        %v1802 = vld [vmem:[#allocation6 + $0x400] sm:$0xff]
        %v1803 = vld [vmem:[#allocation6 + $0x408] sm:$0xff]
        %v1804 = vld [vmem:[#allocation6 + $0x410] sm:$0xff]
        %v1805 = vld [vmem:[#allocation6 + $0x418] sm:$0xff]
        %v1806 = vld [vmem:[#allocation6 + $0x420] sm:$0xff]
        %v1807 = vld [vmem:[#allocation6 + $0x428] sm:$0xff]
        %v1808 = vld [vmem:[#allocation6 + $0x430] sm:$0xff]
        %v1809 = vld [vmem:[#allocation6 + $0x438] sm:$0xff]
        %v1810 = vld [vmem:[#allocation6 + $0x440] sm:$0xff]
        %v1811 = vld [vmem:[#allocation6 + $0x448] sm:$0xff]
        %v1812 = vld [vmem:[#allocation6 + $0x450] sm:$0xff]
        %v1813 = vld [vmem:[#allocation6 + $0x458] sm:$0xff]
        %v1814 = vld [vmem:[#allocation6 + $0x460] sm:$0xff]
        %v1815 = vld [vmem:[#allocation6 + $0x468] sm:$0xff]
        %v1816 = vld [vmem:[#allocation6 + $0x470] sm:$0xff]
        %v1817 = vld [vmem:[#allocation6 + $0x478] sm:$0xff]
        %v1818 = vld [vmem:[#allocation6 + $0x480] sm:$0xff]
        %v1819 = vld [vmem:[#allocation6 + $0x488] sm:$0xff]
        %v1820 = vld [vmem:[#allocation6 + $0x490] sm:$0xff]
        %v1821 = vld [vmem:[#allocation6 + $0x498] sm:$0xff]
        %v1822 = vld [vmem:[#allocation6 + $0x4a0] sm:$0xff]
        %v1823 = vld [vmem:[#allocation6 + $0x4a8] sm:$0xff]
        %v1824 = vld [vmem:[#allocation6 + $0x4b0] sm:$0xff]
        %v1825 = vld [vmem:[#allocation6 + $0x4b8] sm:$0xff]
        %v1826 = vld [vmem:[#allocation6 + $0x4c0] sm:$0xff]
        %v1827 = vld [vmem:[#allocation6 + $0x4c8] sm:$0xff]
        %v1828 = vld [vmem:[#allocation6 + $0x4d0] sm:$0xff]
        %v1829 = vld [vmem:[#allocation6 + $0x4d8] sm:$0xff]
        %v1830 = vld [vmem:[#allocation6 + $0x4e0] sm:$0xff]
        %v1831 = vld [vmem:[#allocation6 + $0x4e8] sm:$0xff]
        %v1832 = vld [vmem:[#allocation6 + $0x4f0] sm:$0xff]
        %v1833 = vld [vmem:[#allocation6 + $0x4f8] sm:$0xff]
        %v1834 = vld [vmem:[#allocation6 + $0x500] sm:$0xff]
        %v1835 = vld [vmem:[#allocation6 + $0x508] sm:$0xff]
        %v1836 = vld [vmem:[#allocation6 + $0x510] sm:$0xff]
        %v1837 = vld [vmem:[#allocation6 + $0x518] sm:$0xff]
        %v1838 = vld [vmem:[#allocation6 + $0x520] sm:$0xff]
        %v1839 = vld [vmem:[#allocation6 + $0x528] sm:$0xff]
        %v1840 = vld [vmem:[#allocation6 + $0x530] sm:$0xff]
        %v1841 = vld [vmem:[#allocation6 + $0x538] sm:$0xff]
        %v1842 = vld [vmem:[#allocation6 + $0x540] sm:$0xff]
        %v1843 = vld [vmem:[#allocation6 + $0x548] sm:$0xff]
        %v1844 = vld [vmem:[#allocation6 + $0x550] sm:$0xff]
        %v1845 = vld [vmem:[#allocation6 + $0x558] sm:$0xff]
        %v1846 = vld [vmem:[#allocation6 + $0x560] sm:$0xff]
        %v1847 = vld [vmem:[#allocation6 + $0x568] sm:$0xff]
        %v1848 = vld [vmem:[#allocation6 + $0x570] sm:$0xff]
        %v1849 = vld [vmem:[#allocation6 + $0x578] sm:$0xff]
        %v1850 = vld [vmem:[#allocation6 + $0x580] sm:$0xff]
        %v1851 = vld [vmem:[#allocation6 + $0x588] sm:$0xff]
        %v1852 = vld [vmem:[#allocation6 + $0x590] sm:$0xff]
        %v1853 = vld [vmem:[#allocation6 + $0x598] sm:$0xff]
        %v1854 = vld [vmem:[#allocation6 + $0x5a0] sm:$0xff]
        %v1855 = vld [vmem:[#allocation6 + $0x5a8] sm:$0xff]
        %v1856 = vld [vmem:[#allocation6 + $0x5b0] sm:$0xff]
        %v1857 = vld [vmem:[#allocation6 + $0x5b8] sm:$0xff]
        %v1858 = vld [vmem:[#allocation6 + $0x5c0] sm:$0xff]
        %v1859 = vld [vmem:[#allocation6 + $0x5c8] sm:$0xff]
        %v1860 = vld [vmem:[#allocation6 + $0x5d0] sm:$0xff]
        %v1861 = vld [vmem:[#allocation6 + $0x5d8] sm:$0xff]
        %v1862 = vld [vmem:[#allocation6 + $0x5e0] sm:$0xff]
        %v1863 = vld [vmem:[#allocation6 + $0x5e8] sm:$0xff]
        %v1864 = vld [vmem:[#allocation6 + $0x5f0] sm:$0xff]
        %v1865 = vld [vmem:[#allocation6 + $0x5f8] sm:$0xff]
        %v1866 = vld [vmem:[#allocation6 + $0x600] sm:$0xff]
        %v1867 = vld [vmem:[#allocation6 + $0x608] sm:$0xff]
        %v1868 = vld [vmem:[#allocation6 + $0x610] sm:$0xff]
        %v1869 = vld [vmem:[#allocation6 + $0x618] sm:$0xff]
        %v1870 = vld [vmem:[#allocation6 + $0x620] sm:$0xff]
        %v1871 = vld [vmem:[#allocation6 + $0x628] sm:$0xff]
        %v1872 = vld [vmem:[#allocation6 + $0x630] sm:$0xff]
        %v1873 = vld [vmem:[#allocation6 + $0x638] sm:$0xff]
        %v1874 = vld [vmem:[#allocation6 + $0x640] sm:$0xff]
        %v1875 = vld [vmem:[#allocation6 + $0x648] sm:$0xff]
        %v1876 = vld [vmem:[#allocation6 + $0x650] sm:$0xff]
        %v1877 = vld [vmem:[#allocation6 + $0x658] sm:$0xff]
        %v1878 = vld [vmem:[#allocation6 + $0x660] sm:$0xff]
        %v1879 = vld [vmem:[#allocation6 + $0x668] sm:$0xff]
        %v1880 = vld [vmem:[#allocation6 + $0x670] sm:$0xff]
        %v1881 = vld [vmem:[#allocation6 + $0x678] sm:$0xff]
        %v1882 = vld [vmem:[#allocation6 + $0x680] sm:$0xff]
        %v1883 = vld [vmem:[#allocation6 + $0x688] sm:$0xff]
        %v1884 = vld [vmem:[#allocation6 + $0x690] sm:$0xff]
        %v1885 = vld [vmem:[#allocation6 + $0x698] sm:$0xff]
        %v1886 = vld [vmem:[#allocation6 + $0x6a0] sm:$0xff]
        %v1887 = vld [vmem:[#allocation6 + $0x6a8] sm:$0xff]
        %v1888 = vld [vmem:[#allocation6 + $0x6b0] sm:$0x7]
        %v1889 = vld [vmem:[#allocation6 + $0x6b8] sm:$0x7]
        %vm1890 = vcmask 744448
        %v1892 = vsel %vm1890, %v1666, 0
        %v1895 = vsel %vm1890, %v1673, 0
        %vm1897 = vcmask 1042432
        %v1899 = vsel %vm1897, %v1888, 0
        %v1902 = vsel %vm1897, %v1889, 0
        %1904 = vmatprep.subr.mxu0 %v1675
        %1905 = vmatpush1.msra.mxu0 %v1674
        %1906 = vmatprep.subr.mxu0 %v1677
        %1907 = vmatpush1.msra.mxu0 %v1676
        %1908 = vmatprep.subr.mxu0 %v1679
        %1909 = vmatpush1.msra.mxu0 %v1678
        %1910 = vmatprep.subr.mxu0 %v1681
        %1911 = vmatpush1.msra.mxu0 %v1680
        %1912 = vmatprep.subr.mxu0 %v1683
        %1913 = vmatpush1.msra.mxu0 %v1682
        %1914 = vmatprep.subr.mxu0 %v1685
        %1915 = vmatpush1.msra.mxu0 %v1684
        %1916 = vmatprep.subr.mxu0 %v1687
        %1917 = vmatpush1.msra.mxu0 %v1686
        %1918 = vmatprep.subr.mxu0 %v1689
        %1919 = vmatpush1.msra.mxu0 %v1688
        %1920 = vmatprep.subr.mxu0 %v1691
        %1921 = vmatpush1.msra.mxu0 %v1690
        %1922 = vmatprep.subr.mxu0 %v1693
        %1923 = vmatpush1.msra.mxu0 %v1692
        %1924 = vmatprep.subr.mxu0 %v1695
        %1925 = vmatpush1.msra.mxu0 %v1694
        %1926 = vmatprep.subr.mxu0 %v1697
        %1927 = vmatpush1.msra.mxu0 %v1696
        %1928 = vmatprep.subr.mxu0 %v1699
        %1929 = vmatpush1.msra.mxu0 %v1698
        %1930 = vmatprep.subr.mxu0 %v1701
        %1931 = vmatpush1.msra.mxu0 %v1700
        %1932 = vmatprep.subr.mxu0 %v1703
        %1933 = vmatpush1.msra.mxu0 %v1702
        %1934 = vmatprep.subr.mxu0 %v1705
        %1935 = vmatpush1.msra.mxu0 %v1704
        %1936 = vmatprep.subr.mxu0 %v1707
        %1937 = vmatpush1.msra.mxu0 %v1706
        %1938 = vmatprep.subr.mxu0 %v1709
        %1939 = vmatpush1.msra.mxu0 %v1708
        %1940 = vmatprep.subr.mxu0 %v1711
        %1941 = vmatpush1.msra.mxu0 %v1710
        %1942 = vmatprep.subr.mxu0 %v1713
        %1943 = vmatpush1.msra.mxu0 %v1712
        %1944 = vmatprep.subr.mxu0 %v1715
        %1945 = vmatpush1.msra.mxu0 %v1714
        %1946 = vmatprep.subr.mxu0 %v1717
        %1947 = vmatpush1.msra.mxu0 %v1716
        %1948 = vmatprep.subr.mxu0 %v1719
        %1949 = vmatpush1.msra.mxu0 %v1718
        %1950 = vmatprep.subr.mxu0 %v1721
        %1951 = vmatpush1.msra.mxu0 %v1720
        %1952 = vmatprep.subr.mxu0 %v1723
        %1953 = vmatpush1.msra.mxu0 %v1722
        %1954 = vmatprep.subr.mxu0 %v1725
        %1955 = vmatpush1.msra.mxu0 %v1724
        %1956 = vmatprep.subr.mxu0 %v1727
        %1957 = vmatpush1.msra.mxu0 %v1726
        %1958 = vmatprep.subr.mxu0 %v1729
        %1959 = vmatpush1.msra.mxu0 %v1728
        %1960 = vmatprep.subr.mxu0 %v1731
        %1961 = vmatpush1.msra.mxu0 %v1730
        %1962 = vmatprep.subr.mxu0 %v1733
        %1963 = vmatpush1.msra.mxu0 %v1732
        %1964 = vmatprep.subr.mxu0 %v1735
        %1965 = vmatpush1.msra.mxu0 %v1734
        %1966 = vmatprep.subr.mxu0 %v1737
        %1967 = vmatpush1.msra.mxu0 %v1736
        %1968 = vmatprep.mubr.f32.mxu0 %v1661
        %1969 = vmatmul.mubr.f32.gmra.mrb[0].mxu0 %v1660
        %v1970 = vpop.f32.mrb[0].mxu0
        %v1971 = vadd.f32 0.0, %v1970
        %v1972 = vpop.f32.mrb[0].mxu0
        %v1973 = vadd.f32 0.0, %v1972
        %1974 = vmatprep.mubr.f32.mxu0 %v1668
        %1975 = vmatmul.mubr.f32.gmra.mrb[0].mxu0 %v1667
        %v1976 = vpop.f32.mrb[0].mxu0
        %v1977 = vadd.f32 0.0, %v1976
        %v1978 = vpop.f32.mrb[0].mxu0
        %v1979 = vadd.f32 0.0, %v1978
        %1980 = vdwg.mxu0
        %1981 = vmatprep.subr.mxu0 %v1739
        %1982 = vmatpush1.msra.mxu0 %v1738
        %1983 = vmatprep.subr.mxu0 %v1741
        %1984 = vmatpush1.msra.mxu0 %v1740
        %1985 = vmatprep.subr.mxu0 %v1743
        %1986 = vmatpush1.msra.mxu0 %v1742
        %1987 = vmatprep.subr.mxu0 %v1745
        %1988 = vmatpush1.msra.mxu0 %v1744
        %1989 = vmatprep.subr.mxu0 %v1747
        %1990 = vmatpush1.msra.mxu0 %v1746
        %1991 = vmatprep.subr.mxu0 %v1749
        %1992 = vmatpush1.msra.mxu0 %v1748
        %1993 = vmatprep.subr.mxu0 %v1751
        %1994 = vmatpush1.msra.mxu0 %v1750
        %1995 = vmatprep.subr.mxu0 %v1753
        %1996 = vmatpush1.msra.mxu0 %v1752
        %1997 = vmatprep.subr.mxu0 %v1755
        %1998 = vmatpush1.msra.mxu0 %v1754
        %1999 = vmatprep.subr.mxu0 %v1757
        %2000 = vmatpush1.msra.mxu0 %v1756
        %2001 = vmatprep.subr.mxu0 %v1759
        %2002 = vmatpush1.msra.mxu0 %v1758
        %2003 = vmatprep.subr.mxu0 %v1761
        %2004 = vmatpush1.msra.mxu0 %v1760
        %2005 = vmatprep.subr.mxu0 %v1763
        %2006 = vmatpush1.msra.mxu0 %v1762
        %2007 = vmatprep.subr.mxu0 %v1765
        %2008 = vmatpush1.msra.mxu0 %v1764
        %2009 = vmatprep.subr.mxu0 %v1767
        %2010 = vmatpush1.msra.mxu0 %v1766
        %2011 = vmatprep.subr.mxu0 %v1769
        %2012 = vmatpush1.msra.mxu0 %v1768
        %2013 = vmatprep.subr.mxu0 %v1771
        %2014 = vmatpush1.msra.mxu0 %v1770
        %2015 = vmatprep.subr.mxu0 %v1773
        %2016 = vmatpush1.msra.mxu0 %v1772
        %2017 = vmatprep.subr.mxu0 %v1775
        %2018 = vmatpush1.msra.mxu0 %v1774
        %2019 = vmatprep.subr.mxu0 %v1777
        %2020 = vmatpush1.msra.mxu0 %v1776
        %2021 = vmatprep.subr.mxu0 %v1779
        %2022 = vmatpush1.msra.mxu0 %v1778
        %2023 = vmatprep.subr.mxu0 %v1781
        %2024 = vmatpush1.msra.mxu0 %v1780
        %2025 = vmatprep.subr.mxu0 %v1783
        %2026 = vmatpush1.msra.mxu0 %v1782
        %2027 = vmatprep.subr.mxu0 %v1785
        %2028 = vmatpush1.msra.mxu0 %v1784
        %2029 = vmatprep.subr.mxu0 %v1787
        %2030 = vmatpush1.msra.mxu0 %v1786
        %2031 = vmatprep.subr.mxu0 %v1789
        %2032 = vmatpush1.msra.mxu0 %v1788
        %2033 = vmatprep.subr.mxu0 %v1791
        %2034 = vmatpush1.msra.mxu0 %v1790
        %2035 = vmatprep.subr.mxu0 %v1793
        %2036 = vmatpush1.msra.mxu0 %v1792
        %2037 = vmatprep.subr.mxu0 %v1795
        %2038 = vmatpush1.msra.mxu0 %v1794
        %2039 = vmatprep.subr.mxu0 %v1797
        %2040 = vmatpush1.msra.mxu0 %v1796
        %2041 = vmatprep.subr.mxu0 %v1799
        %2042 = vmatpush1.msra.mxu0 %v1798
        %2043 = vmatprep.subr.mxu0 %v1801
        %2044 = vmatpush1.msra.mxu0 %v1800
        %2045 = vmatprep.mubr.f32.mxu0 %v1663
        %2046 = vmatmul.mubr.f32.gmra.mrb[0].mxu0 %v1662
        %v2047 = vpop.f32.mrb[0].mxu0
        %v2048 = vadd.f32 %v1971, %v2047
        %v2049 = vpop.f32.mrb[0].mxu0
        %v2050 = vadd.f32 %v1973, %v2049
        %2051 = vmatprep.mubr.f32.mxu0 %v1670
        %2052 = vmatmul.mubr.f32.gmra.mrb[0].mxu0 %v1669
        %v2053 = vpop.f32.mrb[0].mxu0
        %v2054 = vadd.f32 %v1977, %v2053
        %v2055 = vpop.f32.mrb[0].mxu0
        %v2056 = vadd.f32 %v1979, %v2055
        %2057 = vdwg.mxu0
        %2058 = vmatprep.subr.mxu0 %v1803
        %2059 = vmatpush1.msra.mxu0 %v1802
        %2060 = vmatprep.subr.mxu0 %v1805
        %2061 = vmatpush1.msra.mxu0 %v1804
        %2062 = vmatprep.subr.mxu0 %v1807
        %2063 = vmatpush1.msra.mxu0 %v1806
        %2064 = vmatprep.subr.mxu0 %v1809
        %2065 = vmatpush1.msra.mxu0 %v1808
        %2066 = vmatprep.subr.mxu0 %v1811
        %2067 = vmatpush1.msra.mxu0 %v1810
        %2068 = vmatprep.subr.mxu0 %v1813
        %2069 = vmatpush1.msra.mxu0 %v1812
        %2070 = vmatprep.subr.mxu0 %v1815
        %2071 = vmatpush1.msra.mxu0 %v1814
        %2072 = vmatprep.subr.mxu0 %v1817
        %2073 = vmatpush1.msra.mxu0 %v1816
        %2074 = vmatprep.subr.mxu0 %v1819
        %2075 = vmatpush1.msra.mxu0 %v1818
        %2076 = vmatprep.subr.mxu0 %v1821
        %2077 = vmatpush1.msra.mxu0 %v1820
        %2078 = vmatprep.subr.mxu0 %v1823
        %2079 = vmatpush1.msra.mxu0 %v1822
        %2080 = vmatprep.subr.mxu0 %v1825
        %2081 = vmatpush1.msra.mxu0 %v1824
        %2082 = vmatprep.subr.mxu0 %v1827
        %2083 = vmatpush1.msra.mxu0 %v1826
        %2084 = vmatprep.subr.mxu0 %v1829
        %2085 = vmatpush1.msra.mxu0 %v1828
        %2086 = vmatprep.subr.mxu0 %v1831
        %2087 = vmatpush1.msra.mxu0 %v1830
        %2088 = vmatprep.subr.mxu0 %v1833
        %2089 = vmatpush1.msra.mxu0 %v1832
        %2090 = vmatprep.subr.mxu0 %v1835
        %2091 = vmatpush1.msra.mxu0 %v1834
        %2092 = vmatprep.subr.mxu0 %v1837
        %2093 = vmatpush1.msra.mxu0 %v1836
        %2094 = vmatprep.subr.mxu0 %v1839
        %2095 = vmatpush1.msra.mxu0 %v1838
        %2096 = vmatprep.subr.mxu0 %v1841
        %2097 = vmatpush1.msra.mxu0 %v1840
        %2098 = vmatprep.subr.mxu0 %v1843
        %2099 = vmatpush1.msra.mxu0 %v1842
        %2100 = vmatprep.subr.mxu0 %v1845
        %2101 = vmatpush1.msra.mxu0 %v1844
        %2102 = vmatprep.subr.mxu0 %v1847
        %2103 = vmatpush1.msra.mxu0 %v1846
        %2104 = vmatprep.subr.mxu0 %v1849
        %2105 = vmatpush1.msra.mxu0 %v1848
        %2106 = vmatprep.subr.mxu0 %v1851
        %2107 = vmatpush1.msra.mxu0 %v1850
        %2108 = vmatprep.subr.mxu0 %v1853
        %2109 = vmatpush1.msra.mxu0 %v1852
        %2110 = vmatprep.subr.mxu0 %v1855
        %2111 = vmatpush1.msra.mxu0 %v1854
        %2112 = vmatprep.subr.mxu0 %v1857
        %2113 = vmatpush1.msra.mxu0 %v1856
        %2114 = vmatprep.subr.mxu0 %v1859
        %2115 = vmatpush1.msra.mxu0 %v1858
        %2116 = vmatprep.subr.mxu0 %v1861
        %2117 = vmatpush1.msra.mxu0 %v1860
        %2118 = vmatprep.subr.mxu0 %v1863
        %2119 = vmatpush1.msra.mxu0 %v1862
        %2120 = vmatprep.subr.mxu0 %v1865
        %2121 = vmatpush1.msra.mxu0 %v1864
        %2122 = vmatprep.mubr.f32.mxu0 %v1665
        %2123 = vmatmul.mubr.f32.gmra.mrb[0].mxu0 %v1664
        %v2124 = vpop.f32.mrb[0].mxu0
        %v2125 = vadd.f32 %v2048, %v2124
        %v2126 = vpop.f32.mrb[0].mxu0
        %v2127 = vadd.f32 %v2050, %v2126
        %2128 = vmatprep.mubr.f32.mxu0 %v1672
        %2129 = vmatmul.mubr.f32.gmra.mrb[0].mxu0 %v1671
        %v2130 = vpop.f32.mrb[0].mxu0
        %v2131 = vadd.f32 %v2054, %v2130
        %v2132 = vpop.f32.mrb[0].mxu0
        %v2133 = vadd.f32 %v2056, %v2132
        %2134 = vdwg.mxu0
        %2135 = vmatprep.subr.mxu0 %v1867
        %2136 = vmatpush1.msra.mxu0 %v1866
        %2137 = vmatprep.subr.mxu0 %v1869
        %2138 = vmatpush1.msra.mxu0 %v1868
        %2139 = vmatprep.subr.mxu0 %v1871
        %2140 = vmatpush1.msra.mxu0 %v1870
        %2141 = vmatprep.subr.mxu0 %v1873
        %2142 = vmatpush1.msra.mxu0 %v1872
        %2143 = vmatprep.subr.mxu0 %v1875
        %2144 = vmatpush1.msra.mxu0 %v1874
        %2145 = vmatprep.subr.mxu0 %v1877
        %2146 = vmatpush1.msra.mxu0 %v1876
        %2147 = vmatprep.subr.mxu0 %v1879
        %2148 = vmatpush1.msra.mxu0 %v1878
        %2149 = vmatprep.subr.mxu0 %v1881
        %2150 = vmatpush1.msra.mxu0 %v1880
        %2151 = vmatprep.subr.mxu0 %v1883
        %2152 = vmatpush1.msra.mxu0 %v1882
        %2153 = vmatprep.subr.mxu0 %v1885
        %2154 = vmatpush1.msra.mxu0 %v1884
        %2155 = vmatprep.subr.mxu0 %v1887
        %2156 = vmatpush1.msra.mxu0 %v1886
        %2157 = vmatprep.subr.mxu0 %v1902
        %2158 = vmatpush1.msra.mxu0 %v1899
        %2159 = vmatprep.subr.mxu0 0.0
        %2160 = vmatpush1.msra.mxu0 0.0
        %2161 = vmatprep.subr.mxu0 0.0
        %2162 = vmatpush1.msra.mxu0 0.0
        %2163 = vmatprep.subr.mxu0 0.0
        %2164 = vmatpush1.msra.mxu0 0.0
        %2165 = vmatprep.subr.mxu0 0.0
        %2166 = vmatpush1.msra.mxu0 0.0
        %2167 = vmatprep.subr.mxu0 0.0
        %2168 = vmatpush1.msra.mxu0 0.0
        %2169 = vmatprep.subr.mxu0 0.0
        %2170 = vmatpush1.msra.mxu0 0.0
        %2171 = vmatprep.subr.mxu0 0.0
        %2172 = vmatpush1.msra.mxu0 0.0
        %2173 = vmatprep.subr.mxu0 0.0
        %2174 = vmatpush1.msra.mxu0 0.0
        %2175 = vmatprep.subr.mxu0 0.0
        %2176 = vmatpush1.msra.mxu0 0.0
        %2177 = vmatprep.subr.mxu0 0.0
        %2178 = vmatpush1.msra.mxu0 0.0
        %2179 = vmatprep.subr.mxu0 0.0
        %2180 = vmatpush1.msra.mxu0 0.0
        %2181 = vmatprep.subr.mxu0 0.0
        %2182 = vmatpush1.msra.mxu0 0.0
        %2183 = vmatprep.subr.mxu0 0.0
        %2184 = vmatpush1.msra.mxu0 0.0
        %2185 = vmatprep.subr.mxu0 0.0
        %2186 = vmatpush1.msra.mxu0 0.0
        %2187 = vmatprep.subr.mxu0 0.0
        %2188 = vmatpush1.msra.mxu0 0.0
        %2189 = vmatprep.subr.mxu0 0.0
        %2190 = vmatpush1.msra.mxu0 0.0
        %2191 = vmatprep.subr.mxu0 0.0
        %2192 = vmatpush1.msra.mxu0 0.0
        %2193 = vmatprep.subr.mxu0 0.0
        %2194 = vmatpush1.msra.mxu0 0.0
        %2195 = vmatprep.subr.mxu0 0.0
        %2196 = vmatpush1.msra.mxu0 0.0
        %2197 = vmatprep.subr.mxu0 0.0
        %2198 = vmatpush1.msra.mxu0 0.0
        %2199 = vmatprep.mubr.f32.mxu0 0.0
        %2200 = vmatmul.mubr.f32.gmra.mrb[0].mxu0 %v1892
        %v2201 = vpop.f32.mrb[0].mxu0
        %v2202 = vadd.f32 %v2125, %v2201
        %v2203 = vpop.f32.mrb[0].mxu0
        %v2204 = vadd.f32 %v2127, %v2203
        %2205 = vmatprep.mubr.f32.mxu0 0.0
        %2206 = vmatmul.mubr.f32.gmra.mrb[0].mxu0 %v1895
        %v2207 = vpop.f32.mrb[0].mxu0
        %v2208 = vadd.f32 %v2131, %v2207
        %v2209 = vpop.f32.mrb[0].mxu0
        %v2210 = vadd.f32 %v2133, %v2209
        %2211 = vdwg.mxu0
        %v2212 = vmax.f32 %v2202, 0.0
        %v2213 = vmax.f32 %v2204, 0.0
        %v2214 = vmax.f32 %v2208, 0.0
        %v2215 = vmax.f32 %v2210, 0.0
        %v2216 = vld [vmem:[%s3] sm:$0xff]
        %v2217 = vld [vmem:[%s3 + $0x8] sm:$0xff]
        %v2218 = vld [vmem:[%s3 + $0x10] sm:$0xff]
        %v2219 = vld [vmem:[%s3 + $0x18] sm:$0xff]
        %s2220 = scalar_lea.vmem %s3, 32
        %v2221 = vld [vmem:[%s2220] sm:$0xff]
        %v2222 = vld [vmem:[%s2220 + $0x8] sm:$0xff]
        %v2223 = vld [vmem:[%s2220 + $0x10] sm:$0xff]
        %v2224 = vld [vmem:[%s2220 + $0x18] sm:$0xff]
        %2229 = vrot.lane.b32.xlu0 %v2212, 127
        %v2230 = vpop.permute.xlu0 %2229
        %2231 = vrot.lane.b32.xlu0 %v2213, 127
        %v2232 = vpop.permute.xlu0 %2231
        %2233 = vrot.lane.b32.xlu0 %v2214, 127
        %v2234 = vpop.permute.xlu0 %2233
        %2235 = vrot.lane.b32.xlu0 %v2215, 127
        %v2236 = vpop.permute.xlu0 %2235
        %v2237 = vsel %vm606, %v2230, %v2232
        %v2238 = vsel %vm606, %v2234, %v2236
        %vm2243 = vcmask 130048
        %v2245 = vsel %vm2243, %v2221, 0
        %v2248 = vsel %vm2243, %v2222, 0
        %v2251 = vsel %vm2243, %v2223, 0
        %v2254 = vsel %vm2243, %v2224, 0
        %2256 = vmatprep.subr.mxu0 %v2232
        %2257 = vmatpush1.msra.mxu0 %v2237
        %2258 = vmatprep.subr.mxu0 %v2236
        %2259 = vmatpush1.msra.mxu0 %v2238
        %2260 = vmatprep.subr.mxu0 0.0
        %2261 = vmatpush1.msra.mxu0 0.0
        %2262 = vmatprep.subr.mxu0 0.0
        %2263 = vmatpush1.msra.mxu0 0.0
        %2264 = vmatprep.subr.mxu0 0.0
        %2265 = vmatpush1.msra.mxu0 0.0
        %2266 = vmatprep.subr.mxu0 0.0
        %2267 = vmatpush1.msra.mxu0 0.0
        %2268 = vmatprep.subr.mxu0 0.0
        %2269 = vmatpush1.msra.mxu0 0.0
        %2270 = vmatprep.subr.mxu0 0.0
        %2271 = vmatpush1.msra.mxu0 0.0
        %2272 = vmatprep.subr.mxu0 0.0
        %2273 = vmatpush1.msra.mxu0 0.0
        %2274 = vmatprep.subr.mxu0 0.0
        %2275 = vmatpush1.msra.mxu0 0.0
        %2276 = vmatprep.subr.mxu0 0.0
        %2277 = vmatpush1.msra.mxu0 0.0
        %2278 = vmatprep.subr.mxu0 0.0
        %2279 = vmatpush1.msra.mxu0 0.0
        %2280 = vmatprep.subr.mxu0 0.0
        %2281 = vmatpush1.msra.mxu0 0.0
        %2282 = vmatprep.subr.mxu0 0.0
        %2283 = vmatpush1.msra.mxu0 0.0
        %2284 = vmatprep.subr.mxu0 0.0
        %2285 = vmatpush1.msra.mxu0 0.0
        %2286 = vmatprep.subr.mxu0 0.0
        %2287 = vmatpush1.msra.mxu0 0.0
        %2288 = vmatprep.subr.mxu0 0.0
        %2289 = vmatpush1.msra.mxu0 0.0
        %2290 = vmatprep.subr.mxu0 0.0
        %2291 = vmatpush1.msra.mxu0 0.0
        %2292 = vmatprep.subr.mxu0 0.0
        %2293 = vmatpush1.msra.mxu0 0.0
        %2294 = vmatprep.subr.mxu0 0.0
        %2295 = vmatpush1.msra.mxu0 0.0
        %2296 = vmatprep.subr.mxu0 0.0
        %2297 = vmatpush1.msra.mxu0 0.0
        %2298 = vmatprep.subr.mxu0 0.0
        %2299 = vmatpush1.msra.mxu0 0.0
        %2300 = vmatprep.subr.mxu0 0.0
        %2301 = vmatpush1.msra.mxu0 0.0
        %2302 = vmatprep.subr.mxu0 0.0
        %2303 = vmatpush1.msra.mxu0 0.0
        %2304 = vmatprep.subr.mxu0 0.0
        %2305 = vmatpush1.msra.mxu0 0.0
        %2306 = vmatprep.subr.mxu0 0.0
        %2307 = vmatpush1.msra.mxu0 0.0
        %2308 = vmatprep.subr.mxu0 0.0
        %2309 = vmatpush1.msra.mxu0 0.0
        %2310 = vmatprep.subr.mxu0 0.0
        %2311 = vmatpush1.msra.mxu0 0.0
        %2312 = vmatprep.subr.mxu0 0.0
        %2313 = vmatpush1.msra.mxu0 0.0
        %2314 = vmatprep.subr.mxu0 0.0
        %2315 = vmatpush1.msra.mxu0 0.0
        %2316 = vmatprep.subr.mxu0 0.0
        %2317 = vmatpush1.msra.mxu0 0.0
        %2318 = vmatprep.subr.mxu0 0.0
        %2319 = vmatpush1.msra.mxu0 0.0
        %2320 = vmatprep.mubr.f32.mxu0 0.0
        %2321 = vmatmul.mubr.f32.gmra.mrb[0].mxu0 %v2245
        %v2322 = vpop.f32.mrb[0].mxu0
        %v2323 = vadd.f32 0.0, %v2322
        %v2324 = vpop.f32.mrb[0].mxu0
        %v2325 = vadd.f32 0.0, %v2324
        %2326 = vmatprep.mubr.f32.mxu0 0.0
        %2327 = vmatmul.mubr.f32.gmra.mrb[0].mxu0 %v2248
        %v2328 = vpop.f32.mrb[0].mxu0
        %v2329 = vadd.f32 0.0, %v2328
        %v2330 = vpop.f32.mrb[0].mxu0
        %v2331 = vadd.f32 0.0, %v2330
        %2332 = vmatprep.mubr.f32.mxu0 0.0
        %2333 = vmatmul.mubr.f32.gmra.mrb[0].mxu0 %v2251
        %v2334 = vpop.f32.mrb[0].mxu0
        %v2335 = vadd.f32 0.0, %v2334
        %v2336 = vpop.f32.mrb[0].mxu0
        %v2337 = vadd.f32 0.0, %v2336
        %2338 = vmatprep.mubr.f32.mxu0 0.0
        %2339 = vmatmul.mubr.f32.gmra.mrb[0].mxu0 %v2254
        %v2340 = vpop.f32.mrb[0].mxu0
        %v2341 = vadd.f32 0.0, %v2340
        %v2342 = vpop.f32.mrb[0].mxu0
        %v2343 = vadd.f32 0.0, %v2342
        %2344 = vdwg.mxu0
        %v2346 = vsel %vm2243, %v2216, 0
        %v2349 = vsel %vm2243, %v2217, 0
        %v2352 = vsel %vm2243, %v2218, 0
        %v2355 = vsel %vm2243, %v2219, 0
        %2357 = vmatprep.subr.mxu0 %v2213
        %2358 = vmatpush1.msra.mxu0 %v2212
        %2359 = vmatprep.subr.mxu0 %v2215
        %2360 = vmatpush1.msra.mxu0 %v2214
        %2361 = vmatprep.subr.mxu0 0.0
        %2362 = vmatpush1.msra.mxu0 0.0
        %2363 = vmatprep.subr.mxu0 0.0
        %2364 = vmatpush1.msra.mxu0 0.0
        %2365 = vmatprep.subr.mxu0 0.0
        %2366 = vmatpush1.msra.mxu0 0.0
        %2367 = vmatprep.subr.mxu0 0.0
        %2368 = vmatpush1.msra.mxu0 0.0
        %2369 = vmatprep.subr.mxu0 0.0
        %2370 = vmatpush1.msra.mxu0 0.0
        %2371 = vmatprep.subr.mxu0 0.0
        %2372 = vmatpush1.msra.mxu0 0.0
        %2373 = vmatprep.subr.mxu0 0.0
        %2374 = vmatpush1.msra.mxu0 0.0
        %2375 = vmatprep.subr.mxu0 0.0
        %2376 = vmatpush1.msra.mxu0 0.0
        %2377 = vmatprep.subr.mxu0 0.0
        %2378 = vmatpush1.msra.mxu0 0.0
        %2379 = vmatprep.subr.mxu0 0.0
        %2380 = vmatpush1.msra.mxu0 0.0
        %2381 = vmatprep.subr.mxu0 0.0
        %2382 = vmatpush1.msra.mxu0 0.0
        %2383 = vmatprep.subr.mxu0 0.0
        %2384 = vmatpush1.msra.mxu0 0.0
        %2385 = vmatprep.subr.mxu0 0.0
        %2386 = vmatpush1.msra.mxu0 0.0
        %2387 = vmatprep.subr.mxu0 0.0
        %2388 = vmatpush1.msra.mxu0 0.0
        %2389 = vmatprep.subr.mxu0 0.0
        %2390 = vmatpush1.msra.mxu0 0.0
        %2391 = vmatprep.subr.mxu0 0.0
        %2392 = vmatpush1.msra.mxu0 0.0
        %2393 = vmatprep.subr.mxu0 0.0
        %2394 = vmatpush1.msra.mxu0 0.0
        %2395 = vmatprep.subr.mxu0 0.0
        %2396 = vmatpush1.msra.mxu0 0.0
        %2397 = vmatprep.subr.mxu0 0.0
        %2398 = vmatpush1.msra.mxu0 0.0
        %2399 = vmatprep.subr.mxu0 0.0
        %2400 = vmatpush1.msra.mxu0 0.0
        %2401 = vmatprep.subr.mxu0 0.0
        %2402 = vmatpush1.msra.mxu0 0.0
        %2403 = vmatprep.subr.mxu0 0.0
        %2404 = vmatpush1.msra.mxu0 0.0
        %2405 = vmatprep.subr.mxu0 0.0
        %2406 = vmatpush1.msra.mxu0 0.0
        %2407 = vmatprep.subr.mxu0 0.0
        %2408 = vmatpush1.msra.mxu0 0.0
        %2409 = vmatprep.subr.mxu0 0.0
        %2410 = vmatpush1.msra.mxu0 0.0
        %2411 = vmatprep.subr.mxu0 0.0
        %2412 = vmatpush1.msra.mxu0 0.0
        %2413 = vmatprep.subr.mxu0 0.0
        %2414 = vmatpush1.msra.mxu0 0.0
        %2415 = vmatprep.subr.mxu0 0.0
        %2416 = vmatpush1.msra.mxu0 0.0
        %2417 = vmatprep.subr.mxu0 0.0
        %2418 = vmatpush1.msra.mxu0 0.0
        %2419 = vmatprep.subr.mxu0 0.0
        %2420 = vmatpush1.msra.mxu0 0.0
        %2421 = vmatprep.mubr.f32.mxu0 0.0
        %2422 = vmatmul.mubr.f32.gmra.mrb[0].mxu0 %v2346
        %v2423 = vpop.f32.mrb[0].mxu0
        %v2424 = vadd.f32 %v2323, %v2423
        %v2425 = vpop.f32.mrb[0].mxu0
        %v2426 = vadd.f32 %v2325, %v2425
        %2427 = vmatprep.mubr.f32.mxu0 0.0
        %2428 = vmatmul.mubr.f32.gmra.mrb[0].mxu0 %v2349
        %v2429 = vpop.f32.mrb[0].mxu0
        %v2430 = vadd.f32 %v2329, %v2429
        %v2431 = vpop.f32.mrb[0].mxu0
        %v2432 = vadd.f32 %v2331, %v2431
        %2433 = vmatprep.mubr.f32.mxu0 0.0
        %2434 = vmatmul.mubr.f32.gmra.mrb[0].mxu0 %v2352
        %v2435 = vpop.f32.mrb[0].mxu0
        %v2436 = vadd.f32 %v2335, %v2435
        %v2437 = vpop.f32.mrb[0].mxu0
        %v2438 = vadd.f32 %v2337, %v2437
        %2439 = vmatprep.mubr.f32.mxu0 0.0
        %2440 = vmatmul.mubr.f32.gmra.mrb[0].mxu0 %v2355
        %v2441 = vpop.f32.mrb[0].mxu0
        %v2442 = vadd.f32 %v2341, %v2441
        %v2443 = vpop.f32.mrb[0].mxu0
        %v2444 = vadd.f32 %v2343, %v2443
        %2445 = vdwg.mxu0
        %s2446 = scalar_lea.vmem %s3, 64
        %v2447 = vld [vmem:[%s2446] sm:$0xff]
        %v2448 = vld [vmem:[%s2446 + $0x8] sm:$0xff]
        %v2449 = vld [vmem:[%s2446 + $0x10] sm:$0xff]
        %v2450 = vld [vmem:[%s2446 + $0x18] sm:$0xff]
        %2451 = vrot.lane.b32.xlu0 %v2212, 126
        %v2452 = vpop.permute.xlu0 %2451
        %2453 = vrot.lane.b32.xlu0 %v2213, 126
        %v2454 = vpop.permute.xlu0 %2453
        %2455 = vrot.lane.b32.xlu0 %v2214, 126
        %v2456 = vpop.permute.xlu0 %2455
        %2457 = vrot.lane.b32.xlu0 %v2215, 126
        %v2458 = vpop.permute.xlu0 %2457
        %v2459 = vsel %vm711, %v2452, %v2454
        %v2460 = vsel %vm711, %v2456, %v2458
        %v2466 = vsel %vm2243, %v2447, 0
        %v2469 = vsel %vm2243, %v2448, 0
        %v2472 = vsel %vm2243, %v2449, 0
        %v2475 = vsel %vm2243, %v2450, 0
        %2477 = vmatprep.subr.mxu0 %v2454
        %2478 = vmatpush1.msra.mxu0 %v2459
        %2479 = vmatprep.subr.mxu0 %v2458
        %2480 = vmatpush1.msra.mxu0 %v2460
        %2481 = vmatprep.subr.mxu0 0.0
        %2482 = vmatpush1.msra.mxu0 0.0
        %2483 = vmatprep.subr.mxu0 0.0
        %2484 = vmatpush1.msra.mxu0 0.0
        %2485 = vmatprep.subr.mxu0 0.0
        %2486 = vmatpush1.msra.mxu0 0.0
        %2487 = vmatprep.subr.mxu0 0.0
        %2488 = vmatpush1.msra.mxu0 0.0
        %2489 = vmatprep.subr.mxu0 0.0
        %2490 = vmatpush1.msra.mxu0 0.0
        %2491 = vmatprep.subr.mxu0 0.0
        %2492 = vmatpush1.msra.mxu0 0.0
        %2493 = vmatprep.subr.mxu0 0.0
        %2494 = vmatpush1.msra.mxu0 0.0
        %2495 = vmatprep.subr.mxu0 0.0
        %2496 = vmatpush1.msra.mxu0 0.0
        %2497 = vmatprep.subr.mxu0 0.0
        %2498 = vmatpush1.msra.mxu0 0.0
        %2499 = vmatprep.subr.mxu0 0.0
        %2500 = vmatpush1.msra.mxu0 0.0
        %2501 = vmatprep.subr.mxu0 0.0
        %2502 = vmatpush1.msra.mxu0 0.0
        %2503 = vmatprep.subr.mxu0 0.0
        %2504 = vmatpush1.msra.mxu0 0.0
        %2505 = vmatprep.subr.mxu0 0.0
        %2506 = vmatpush1.msra.mxu0 0.0
        %2507 = vmatprep.subr.mxu0 0.0
        %2508 = vmatpush1.msra.mxu0 0.0
        %2509 = vmatprep.subr.mxu0 0.0
        %2510 = vmatpush1.msra.mxu0 0.0
        %2511 = vmatprep.subr.mxu0 0.0
        %2512 = vmatpush1.msra.mxu0 0.0
        %2513 = vmatprep.subr.mxu0 0.0
        %2514 = vmatpush1.msra.mxu0 0.0
        %2515 = vmatprep.subr.mxu0 0.0
        %2516 = vmatpush1.msra.mxu0 0.0
        %2517 = vmatprep.subr.mxu0 0.0
        %2518 = vmatpush1.msra.mxu0 0.0
        %2519 = vmatprep.subr.mxu0 0.0
        %2520 = vmatpush1.msra.mxu0 0.0
        %2521 = vmatprep.subr.mxu0 0.0
        %2522 = vmatpush1.msra.mxu0 0.0
        %2523 = vmatprep.subr.mxu0 0.0
        %2524 = vmatpush1.msra.mxu0 0.0
        %2525 = vmatprep.subr.mxu0 0.0
        %2526 = vmatpush1.msra.mxu0 0.0
        %2527 = vmatprep.subr.mxu0 0.0
        %2528 = vmatpush1.msra.mxu0 0.0
        %2529 = vmatprep.subr.mxu0 0.0
        %2530 = vmatpush1.msra.mxu0 0.0
        %2531 = vmatprep.subr.mxu0 0.0
        %2532 = vmatpush1.msra.mxu0 0.0
        %2533 = vmatprep.subr.mxu0 0.0
        %2534 = vmatpush1.msra.mxu0 0.0
        %2535 = vmatprep.subr.mxu0 0.0
        %2536 = vmatpush1.msra.mxu0 0.0
        %2537 = vmatprep.subr.mxu0 0.0
        %2538 = vmatpush1.msra.mxu0 0.0
        %2539 = vmatprep.subr.mxu0 0.0
        %2540 = vmatpush1.msra.mxu0 0.0
        %2541 = vmatprep.mubr.f32.mxu0 0.0
        %2542 = vmatmul.mubr.f32.gmra.mrb[0].mxu0 %v2466
        %v2543 = vpop.f32.mrb[0].mxu0
        %v2544 = vadd.f32 0.0, %v2543
        %v2545 = vpop.f32.mrb[0].mxu0
        %v2546 = vadd.f32 0.0, %v2545
        %2547 = vmatprep.mubr.f32.mxu0 0.0
        %2548 = vmatmul.mubr.f32.gmra.mrb[0].mxu0 %v2469
        %v2549 = vpop.f32.mrb[0].mxu0
        %v2550 = vadd.f32 0.0, %v2549
        %v2551 = vpop.f32.mrb[0].mxu0
        %v2552 = vadd.f32 0.0, %v2551
        %2553 = vmatprep.mubr.f32.mxu0 0.0
        %2554 = vmatmul.mubr.f32.gmra.mrb[0].mxu0 %v2472
        %v2555 = vpop.f32.mrb[0].mxu0
        %v2556 = vadd.f32 0.0, %v2555
        %v2557 = vpop.f32.mrb[0].mxu0
        %v2558 = vadd.f32 0.0, %v2557
        %2559 = vmatprep.mubr.f32.mxu0 0.0
        %2560 = vmatmul.mubr.f32.gmra.mrb[0].mxu0 %v2475
        %v2561 = vpop.f32.mrb[0].mxu0
        %v2562 = vadd.f32 0.0, %v2561
        %v2563 = vpop.f32.mrb[0].mxu0
        %v2564 = vadd.f32 0.0, %v2563
        %2565 = vdwg.mxu0
        %v2566 = vadd.f32 %v2424, %v2544
        %v2567 = vadd.f32 %v2426, %v2546
        %v2568 = vadd.f32 %v2430, %v2550
        %v2569 = vadd.f32 %v2432, %v2552
        %v2570 = vadd.f32 %v2436, %v2556
        %v2571 = vadd.f32 %v2438, %v2558
        %v2572 = vadd.f32 %v2442, %v2562
        %v2573 = vadd.f32 %v2444, %v2564
        %s2574 = scalar_lea.vmem %s3, 96
        %v2575 = vld [vmem:[%s2574] sm:$0xff]
        %v2576 = vld [vmem:[%s2574 + $0x8] sm:$0xff]
        %v2577 = vld [vmem:[%s2574 + $0x10] sm:$0xff]
        %v2578 = vld [vmem:[%s2574 + $0x18] sm:$0xff]
        %2579 = vrot.lane.b32.xlu0 %v2212, 112
        %v2580 = vpop.permute.xlu0 %2579
        %2581 = vrot.lane.b32.xlu0 %v2213, 112
        %v2582 = vpop.permute.xlu0 %2581
        %2583 = vrot.lane.b32.xlu0 %v2214, 112
        %v2584 = vpop.permute.xlu0 %2583
        %2585 = vrot.lane.b32.xlu0 %v2215, 112
        %v2586 = vpop.permute.xlu0 %2585
        %vm2587 = vcmask 916480
        %v2588 = vsel %vm2587, %v2580, %v2582
        %v2589 = vsel %vm2587, %v2584, %v2586
        %v2595 = vsel %vm2243, %v2575, 0
        %v2598 = vsel %vm2243, %v2576, 0
        %v2601 = vsel %vm2243, %v2577, 0
        %v2604 = vsel %vm2243, %v2578, 0
        %2606 = vmatprep.subr.mxu0 %v2582
        %2607 = vmatpush1.msra.mxu0 %v2588
        %2608 = vmatprep.subr.mxu0 %v2586
        %2609 = vmatpush1.msra.mxu0 %v2589
        %2610 = vmatprep.subr.mxu0 0.0
        %2611 = vmatpush1.msra.mxu0 0.0
        %2612 = vmatprep.subr.mxu0 0.0
        %2613 = vmatpush1.msra.mxu0 0.0
        %2614 = vmatprep.subr.mxu0 0.0
        %2615 = vmatpush1.msra.mxu0 0.0
        %2616 = vmatprep.subr.mxu0 0.0
        %2617 = vmatpush1.msra.mxu0 0.0
        %2618 = vmatprep.subr.mxu0 0.0
        %2619 = vmatpush1.msra.mxu0 0.0
        %2620 = vmatprep.subr.mxu0 0.0
        %2621 = vmatpush1.msra.mxu0 0.0
        %2622 = vmatprep.subr.mxu0 0.0
        %2623 = vmatpush1.msra.mxu0 0.0
        %2624 = vmatprep.subr.mxu0 0.0
        %2625 = vmatpush1.msra.mxu0 0.0
        %2626 = vmatprep.subr.mxu0 0.0
        %2627 = vmatpush1.msra.mxu0 0.0
        %2628 = vmatprep.subr.mxu0 0.0
        %2629 = vmatpush1.msra.mxu0 0.0
        %2630 = vmatprep.subr.mxu0 0.0
        %2631 = vmatpush1.msra.mxu0 0.0
        %2632 = vmatprep.subr.mxu0 0.0
        %2633 = vmatpush1.msra.mxu0 0.0
        %2634 = vmatprep.subr.mxu0 0.0
        %2635 = vmatpush1.msra.mxu0 0.0
        %2636 = vmatprep.subr.mxu0 0.0
        %2637 = vmatpush1.msra.mxu0 0.0
        %2638 = vmatprep.subr.mxu0 0.0
        %2639 = vmatpush1.msra.mxu0 0.0
        %2640 = vmatprep.subr.mxu0 0.0
        %2641 = vmatpush1.msra.mxu0 0.0
        %2642 = vmatprep.subr.mxu0 0.0
        %2643 = vmatpush1.msra.mxu0 0.0
        %2644 = vmatprep.subr.mxu0 0.0
        %2645 = vmatpush1.msra.mxu0 0.0
        %2646 = vmatprep.subr.mxu0 0.0
        %2647 = vmatpush1.msra.mxu0 0.0
        %2648 = vmatprep.subr.mxu0 0.0
        %2649 = vmatpush1.msra.mxu0 0.0
        %2650 = vmatprep.subr.mxu0 0.0
        %2651 = vmatpush1.msra.mxu0 0.0
        %2652 = vmatprep.subr.mxu0 0.0
        %2653 = vmatpush1.msra.mxu0 0.0
        %2654 = vmatprep.subr.mxu0 0.0
        %2655 = vmatpush1.msra.mxu0 0.0
        %2656 = vmatprep.subr.mxu0 0.0
        %2657 = vmatpush1.msra.mxu0 0.0
        %2658 = vmatprep.subr.mxu0 0.0
        %2659 = vmatpush1.msra.mxu0 0.0
        %2660 = vmatprep.subr.mxu0 0.0
        %2661 = vmatpush1.msra.mxu0 0.0
        %2662 = vmatprep.subr.mxu0 0.0
        %2663 = vmatpush1.msra.mxu0 0.0
        %2664 = vmatprep.subr.mxu0 0.0
        %2665 = vmatpush1.msra.mxu0 0.0
        %2666 = vmatprep.subr.mxu0 0.0
        %2667 = vmatpush1.msra.mxu0 0.0
        %2668 = vmatprep.subr.mxu0 0.0
        %2669 = vmatpush1.msra.mxu0 0.0
        %2670 = vmatprep.mubr.f32.mxu0 0.0
        %2671 = vmatmul.mubr.f32.gmra.mrb[0].mxu0 %v2595
        %v2672 = vpop.f32.mrb[0].mxu0
        %v2673 = vadd.f32 0.0, %v2672
        %v2674 = vpop.f32.mrb[0].mxu0
        %v2675 = vadd.f32 0.0, %v2674
        %2676 = vmatprep.mubr.f32.mxu0 0.0
        %2677 = vmatmul.mubr.f32.gmra.mrb[0].mxu0 %v2598
        %v2678 = vpop.f32.mrb[0].mxu0
        %v2679 = vadd.f32 0.0, %v2678
        %v2680 = vpop.f32.mrb[0].mxu0
        %v2681 = vadd.f32 0.0, %v2680
        %2682 = vmatprep.mubr.f32.mxu0 0.0
        %2683 = vmatmul.mubr.f32.gmra.mrb[0].mxu0 %v2601
        %v2684 = vpop.f32.mrb[0].mxu0
        %v2685 = vadd.f32 0.0, %v2684
        %v2686 = vpop.f32.mrb[0].mxu0
        %v2687 = vadd.f32 0.0, %v2686
        %2688 = vmatprep.mubr.f32.mxu0 0.0
        %2689 = vmatmul.mubr.f32.gmra.mrb[0].mxu0 %v2604
        %v2690 = vpop.f32.mrb[0].mxu0
        %v2691 = vadd.f32 0.0, %v2690
        %v2692 = vpop.f32.mrb[0].mxu0
        %v2693 = vadd.f32 0.0, %v2692
        %2694 = vdwg.mxu0
        %v2695 = vadd.f32 %v2566, %v2673
        %v2696 = vadd.f32 %v2567, %v2675
        %v2697 = vadd.f32 %v2568, %v2679
        %v2698 = vadd.f32 %v2569, %v2681
        %v2699 = vadd.f32 %v2570, %v2685
        %v2700 = vadd.f32 %v2571, %v2687
        %v2701 = vadd.f32 %v2572, %v2691
        %v2702 = vadd.f32 %v2573, %v2693
        %s2703 = scalar_lea.vmem %s3, 128
        %v2704 = vld [vmem:[%s2703] sm:$0xff]
        %v2705 = vld [vmem:[%s2703 + $0x8] sm:$0xff]
        %v2706 = vld [vmem:[%s2703 + $0x10] sm:$0xff]
        %v2707 = vld [vmem:[%s2703 + $0x18] sm:$0xff]
        %2708 = vrot.lane.b32.xlu0 %v2212, 111
        %v2709 = vpop.permute.xlu0 %2708
        %2710 = vrot.lane.b32.xlu0 %v2213, 111
        %v2711 = vpop.permute.xlu0 %2710
        %2712 = vrot.lane.b32.xlu0 %v2214, 111
        %v2713 = vpop.permute.xlu0 %2712
        %2714 = vrot.lane.b32.xlu0 %v2215, 111
        %v2715 = vpop.permute.xlu0 %2714
        %vm2716 = vcmask 908288
        %v2717 = vsel %vm2716, %v2709, %v2711
        %v2718 = vsel %vm2716, %v2713, %v2715
        %v2724 = vsel %vm2243, %v2704, 0
        %v2727 = vsel %vm2243, %v2705, 0
        %v2730 = vsel %vm2243, %v2706, 0
        %v2733 = vsel %vm2243, %v2707, 0
        %2735 = vmatprep.subr.mxu0 %v2711
        %2736 = vmatpush1.msra.mxu0 %v2717
        %2737 = vmatprep.subr.mxu0 %v2715
        %2738 = vmatpush1.msra.mxu0 %v2718
        %2739 = vmatprep.subr.mxu0 0.0
        %2740 = vmatpush1.msra.mxu0 0.0
        %2741 = vmatprep.subr.mxu0 0.0
        %2742 = vmatpush1.msra.mxu0 0.0
        %2743 = vmatprep.subr.mxu0 0.0
        %2744 = vmatpush1.msra.mxu0 0.0
        %2745 = vmatprep.subr.mxu0 0.0
        %2746 = vmatpush1.msra.mxu0 0.0
        %2747 = vmatprep.subr.mxu0 0.0
        %2748 = vmatpush1.msra.mxu0 0.0
        %2749 = vmatprep.subr.mxu0 0.0
        %2750 = vmatpush1.msra.mxu0 0.0
        %2751 = vmatprep.subr.mxu0 0.0
        %2752 = vmatpush1.msra.mxu0 0.0
        %2753 = vmatprep.subr.mxu0 0.0
        %2754 = vmatpush1.msra.mxu0 0.0
        %2755 = vmatprep.subr.mxu0 0.0
        %2756 = vmatpush1.msra.mxu0 0.0
        %2757 = vmatprep.subr.mxu0 0.0
        %2758 = vmatpush1.msra.mxu0 0.0
        %2759 = vmatprep.subr.mxu0 0.0
        %2760 = vmatpush1.msra.mxu0 0.0
        %2761 = vmatprep.subr.mxu0 0.0
        %2762 = vmatpush1.msra.mxu0 0.0
        %2763 = vmatprep.subr.mxu0 0.0
        %2764 = vmatpush1.msra.mxu0 0.0
        %2765 = vmatprep.subr.mxu0 0.0
        %2766 = vmatpush1.msra.mxu0 0.0
        %2767 = vmatprep.subr.mxu0 0.0
        %2768 = vmatpush1.msra.mxu0 0.0
        %2769 = vmatprep.subr.mxu0 0.0
        %2770 = vmatpush1.msra.mxu0 0.0
        %2771 = vmatprep.subr.mxu0 0.0
        %2772 = vmatpush1.msra.mxu0 0.0
        %2773 = vmatprep.subr.mxu0 0.0
        %2774 = vmatpush1.msra.mxu0 0.0
        %2775 = vmatprep.subr.mxu0 0.0
        %2776 = vmatpush1.msra.mxu0 0.0
        %2777 = vmatprep.subr.mxu0 0.0
        %2778 = vmatpush1.msra.mxu0 0.0
        %2779 = vmatprep.subr.mxu0 0.0
        %2780 = vmatpush1.msra.mxu0 0.0
        %2781 = vmatprep.subr.mxu0 0.0
        %2782 = vmatpush1.msra.mxu0 0.0
        %2783 = vmatprep.subr.mxu0 0.0
        %2784 = vmatpush1.msra.mxu0 0.0
        %2785 = vmatprep.subr.mxu0 0.0
        %2786 = vmatpush1.msra.mxu0 0.0
        %2787 = vmatprep.subr.mxu0 0.0
        %2788 = vmatpush1.msra.mxu0 0.0
        %2789 = vmatprep.subr.mxu0 0.0
        %2790 = vmatpush1.msra.mxu0 0.0
        %2791 = vmatprep.subr.mxu0 0.0
        %2792 = vmatpush1.msra.mxu0 0.0
        %2793 = vmatprep.subr.mxu0 0.0
        %2794 = vmatpush1.msra.mxu0 0.0
        %2795 = vmatprep.subr.mxu0 0.0
        %2796 = vmatpush1.msra.mxu0 0.0
        %2797 = vmatprep.subr.mxu0 0.0
        %2798 = vmatpush1.msra.mxu0 0.0
        %2799 = vmatprep.mubr.f32.mxu0 0.0
        %2800 = vmatmul.mubr.f32.gmra.mrb[0].mxu0 %v2724
        %v2801 = vpop.f32.mrb[0].mxu0
        %v2802 = vadd.f32 0.0, %v2801
        %v2803 = vpop.f32.mrb[0].mxu0
        %v2804 = vadd.f32 0.0, %v2803
        %2805 = vmatprep.mubr.f32.mxu0 0.0
        %2806 = vmatmul.mubr.f32.gmra.mrb[0].mxu0 %v2727
        %v2807 = vpop.f32.mrb[0].mxu0
        %v2808 = vadd.f32 0.0, %v2807
        %v2809 = vpop.f32.mrb[0].mxu0
        %v2810 = vadd.f32 0.0, %v2809
        %2811 = vmatprep.mubr.f32.mxu0 0.0
        %2812 = vmatmul.mubr.f32.gmra.mrb[0].mxu0 %v2730
        %v2813 = vpop.f32.mrb[0].mxu0
        %v2814 = vadd.f32 0.0, %v2813
        %v2815 = vpop.f32.mrb[0].mxu0
        %v2816 = vadd.f32 0.0, %v2815
        %2817 = vmatprep.mubr.f32.mxu0 0.0
        %2818 = vmatmul.mubr.f32.gmra.mrb[0].mxu0 %v2733
        %v2819 = vpop.f32.mrb[0].mxu0
        %v2820 = vadd.f32 0.0, %v2819
        %v2821 = vpop.f32.mrb[0].mxu0
        %v2822 = vadd.f32 0.0, %v2821
        %2823 = vdwg.mxu0
        %v2824 = vadd.f32 %v2695, %v2802
        %v2825 = vadd.f32 %v2696, %v2804
        %v2826 = vadd.f32 %v2697, %v2808
        %v2827 = vadd.f32 %v2698, %v2810
        %v2828 = vadd.f32 %v2699, %v2814
        %v2829 = vadd.f32 %v2700, %v2816
        %v2830 = vadd.f32 %v2701, %v2820
        %v2831 = vadd.f32 %v2702, %v2822
        %s2832 = scalar_lea.vmem %s3, 160
        %v2833 = vld [vmem:[%s2832] sm:$0xff]
        %v2834 = vld [vmem:[%s2832 + $0x8] sm:$0xff]
        %v2835 = vld [vmem:[%s2832 + $0x10] sm:$0xff]
        %v2836 = vld [vmem:[%s2832 + $0x18] sm:$0xff]
        %2837 = vrot.lane.b32.xlu0 %v2212, 110
        %v2838 = vpop.permute.xlu0 %2837
        %2839 = vrot.lane.b32.xlu0 %v2213, 110
        %v2840 = vpop.permute.xlu0 %2839
        %2841 = vrot.lane.b32.xlu0 %v2214, 110
        %v2842 = vpop.permute.xlu0 %2841
        %2843 = vrot.lane.b32.xlu0 %v2215, 110
        %v2844 = vpop.permute.xlu0 %2843
        %vm2845 = vcmask 900096
        %v2846 = vsel %vm2845, %v2838, %v2840
        %v2847 = vsel %vm2845, %v2842, %v2844
        %v2853 = vsel %vm2243, %v2833, 0
        %v2856 = vsel %vm2243, %v2834, 0
        %v2859 = vsel %vm2243, %v2835, 0
        %v2862 = vsel %vm2243, %v2836, 0
        %2864 = vmatprep.subr.mxu0 %v2840
        %2865 = vmatpush1.msra.mxu0 %v2846
        %2866 = vmatprep.subr.mxu0 %v2844
        %2867 = vmatpush1.msra.mxu0 %v2847
        %2868 = vmatprep.subr.mxu0 0.0
        %2869 = vmatpush1.msra.mxu0 0.0
        %2870 = vmatprep.subr.mxu0 0.0
        %2871 = vmatpush1.msra.mxu0 0.0
        %2872 = vmatprep.subr.mxu0 0.0
        %2873 = vmatpush1.msra.mxu0 0.0
        %2874 = vmatprep.subr.mxu0 0.0
        %2875 = vmatpush1.msra.mxu0 0.0
        %2876 = vmatprep.subr.mxu0 0.0
        %2877 = vmatpush1.msra.mxu0 0.0
        %2878 = vmatprep.subr.mxu0 0.0
        %2879 = vmatpush1.msra.mxu0 0.0
        %2880 = vmatprep.subr.mxu0 0.0
        %2881 = vmatpush1.msra.mxu0 0.0
        %2882 = vmatprep.subr.mxu0 0.0
        %2883 = vmatpush1.msra.mxu0 0.0
        %2884 = vmatprep.subr.mxu0 0.0
        %2885 = vmatpush1.msra.mxu0 0.0
        %2886 = vmatprep.subr.mxu0 0.0
        %2887 = vmatpush1.msra.mxu0 0.0
        %2888 = vmatprep.subr.mxu0 0.0
        %2889 = vmatpush1.msra.mxu0 0.0
        %2890 = vmatprep.subr.mxu0 0.0
        %2891 = vmatpush1.msra.mxu0 0.0
        %2892 = vmatprep.subr.mxu0 0.0
        %2893 = vmatpush1.msra.mxu0 0.0
        %2894 = vmatprep.subr.mxu0 0.0
        %2895 = vmatpush1.msra.mxu0 0.0
        %2896 = vmatprep.subr.mxu0 0.0
        %2897 = vmatpush1.msra.mxu0 0.0
        %2898 = vmatprep.subr.mxu0 0.0
        %2899 = vmatpush1.msra.mxu0 0.0
        %2900 = vmatprep.subr.mxu0 0.0
        %2901 = vmatpush1.msra.mxu0 0.0
        %2902 = vmatprep.subr.mxu0 0.0
        %2903 = vmatpush1.msra.mxu0 0.0
        %2904 = vmatprep.subr.mxu0 0.0
        %2905 = vmatpush1.msra.mxu0 0.0
        %2906 = vmatprep.subr.mxu0 0.0
        %2907 = vmatpush1.msra.mxu0 0.0
        %2908 = vmatprep.subr.mxu0 0.0
        %2909 = vmatpush1.msra.mxu0 0.0
        %2910 = vmatprep.subr.mxu0 0.0
        %2911 = vmatpush1.msra.mxu0 0.0
        %2912 = vmatprep.subr.mxu0 0.0
        %2913 = vmatpush1.msra.mxu0 0.0
        %2914 = vmatprep.subr.mxu0 0.0
        %2915 = vmatpush1.msra.mxu0 0.0
        %2916 = vmatprep.subr.mxu0 0.0
        %2917 = vmatpush1.msra.mxu0 0.0
        %2918 = vmatprep.subr.mxu0 0.0
        %2919 = vmatpush1.msra.mxu0 0.0
        %2920 = vmatprep.subr.mxu0 0.0
        %2921 = vmatpush1.msra.mxu0 0.0
        %2922 = vmatprep.subr.mxu0 0.0
        %2923 = vmatpush1.msra.mxu0 0.0
        %2924 = vmatprep.subr.mxu0 0.0
        %2925 = vmatpush1.msra.mxu0 0.0
        %2926 = vmatprep.subr.mxu0 0.0
        %2927 = vmatpush1.msra.mxu0 0.0
        %2928 = vmatprep.mubr.f32.mxu0 0.0
        %2929 = vmatmul.mubr.f32.gmra.mrb[0].mxu0 %v2853
        %v2930 = vpop.f32.mrb[0].mxu0
        %v2931 = vadd.f32 0.0, %v2930
        %v2932 = vpop.f32.mrb[0].mxu0
        %v2933 = vadd.f32 0.0, %v2932
        %2934 = vmatprep.mubr.f32.mxu0 0.0
        %2935 = vmatmul.mubr.f32.gmra.mrb[0].mxu0 %v2856
        %v2936 = vpop.f32.mrb[0].mxu0
        %v2937 = vadd.f32 0.0, %v2936
        %v2938 = vpop.f32.mrb[0].mxu0
        %v2939 = vadd.f32 0.0, %v2938
        %2940 = vmatprep.mubr.f32.mxu0 0.0
        %2941 = vmatmul.mubr.f32.gmra.mrb[0].mxu0 %v2859
        %v2942 = vpop.f32.mrb[0].mxu0
        %v2943 = vadd.f32 0.0, %v2942
        %v2944 = vpop.f32.mrb[0].mxu0
        %v2945 = vadd.f32 0.0, %v2944
        %2946 = vmatprep.mubr.f32.mxu0 0.0
        %2947 = vmatmul.mubr.f32.gmra.mrb[0].mxu0 %v2862
        %v2948 = vpop.f32.mrb[0].mxu0
        %v2949 = vadd.f32 0.0, %v2948
        %v2950 = vpop.f32.mrb[0].mxu0
        %v2951 = vadd.f32 0.0, %v2950
        %2952 = vdwg.mxu0
        %v2953 = vadd.f32 %v2824, %v2931
        %v2954 = vadd.f32 %v2825, %v2933
        %v2955 = vadd.f32 %v2826, %v2937
        %v2956 = vadd.f32 %v2827, %v2939
        %v2957 = vadd.f32 %v2828, %v2943
        %v2958 = vadd.f32 %v2829, %v2945
        %v2959 = vadd.f32 %v2830, %v2949
        %v2960 = vadd.f32 %v2831, %v2951
        %s2961 = scalar_lea.vmem %s3, 192
        %v2962 = vld [vmem:[%s2961] sm:$0xff]
        %v2963 = vld [vmem:[%s2961 + $0x8] sm:$0xff]
        %v2964 = vld [vmem:[%s2961 + $0x10] sm:$0xff]
        %v2965 = vld [vmem:[%s2961 + $0x18] sm:$0xff]
        %2966 = vrot.lane.b32.xlu0 %v2212, 96
        %v2967 = vpop.permute.xlu0 %2966
        %2968 = vrot.lane.b32.xlu0 %v2213, 96
        %v2969 = vpop.permute.xlu0 %2968
        %2970 = vrot.lane.b32.xlu0 %v2214, 96
        %v2971 = vpop.permute.xlu0 %2970
        %2972 = vrot.lane.b32.xlu0 %v2215, 96
        %v2973 = vpop.permute.xlu0 %2972
        %v2974 = vsel %vm866, %v2967, %v2969
        %v2975 = vsel %vm866, %v2971, %v2973
        %v2981 = vsel %vm2243, %v2962, 0
        %v2984 = vsel %vm2243, %v2963, 0
        %v2987 = vsel %vm2243, %v2964, 0
        %v2990 = vsel %vm2243, %v2965, 0
        %2992 = vmatprep.subr.mxu0 %v2969
        %2993 = vmatpush1.msra.mxu0 %v2974
        %2994 = vmatprep.subr.mxu0 %v2973
        %2995 = vmatpush1.msra.mxu0 %v2975
        %2996 = vmatprep.subr.mxu0 0.0
        %2997 = vmatpush1.msra.mxu0 0.0
        %2998 = vmatprep.subr.mxu0 0.0
        %2999 = vmatpush1.msra.mxu0 0.0
        %3000 = vmatprep.subr.mxu0 0.0
        %3001 = vmatpush1.msra.mxu0 0.0
        %3002 = vmatprep.subr.mxu0 0.0
        %3003 = vmatpush1.msra.mxu0 0.0
        %3004 = vmatprep.subr.mxu0 0.0
        %3005 = vmatpush1.msra.mxu0 0.0
        %3006 = vmatprep.subr.mxu0 0.0
        %3007 = vmatpush1.msra.mxu0 0.0
        %3008 = vmatprep.subr.mxu0 0.0
        %3009 = vmatpush1.msra.mxu0 0.0
        %3010 = vmatprep.subr.mxu0 0.0
        %3011 = vmatpush1.msra.mxu0 0.0
        %3012 = vmatprep.subr.mxu0 0.0
        %3013 = vmatpush1.msra.mxu0 0.0
        %3014 = vmatprep.subr.mxu0 0.0
        %3015 = vmatpush1.msra.mxu0 0.0
        %3016 = vmatprep.subr.mxu0 0.0
        %3017 = vmatpush1.msra.mxu0 0.0
        %3018 = vmatprep.subr.mxu0 0.0
        %3019 = vmatpush1.msra.mxu0 0.0
        %3020 = vmatprep.subr.mxu0 0.0
        %3021 = vmatpush1.msra.mxu0 0.0
        %3022 = vmatprep.subr.mxu0 0.0
        %3023 = vmatpush1.msra.mxu0 0.0
        %3024 = vmatprep.subr.mxu0 0.0
        %3025 = vmatpush1.msra.mxu0 0.0
        %3026 = vmatprep.subr.mxu0 0.0
        %3027 = vmatpush1.msra.mxu0 0.0
        %3028 = vmatprep.subr.mxu0 0.0
        %3029 = vmatpush1.msra.mxu0 0.0
        %3030 = vmatprep.subr.mxu0 0.0
        %3031 = vmatpush1.msra.mxu0 0.0
        %3032 = vmatprep.subr.mxu0 0.0
        %3033 = vmatpush1.msra.mxu0 0.0
        %3034 = vmatprep.subr.mxu0 0.0
        %3035 = vmatpush1.msra.mxu0 0.0
        %3036 = vmatprep.subr.mxu0 0.0
        %3037 = vmatpush1.msra.mxu0 0.0
        %3038 = vmatprep.subr.mxu0 0.0
        %3039 = vmatpush1.msra.mxu0 0.0
        %3040 = vmatprep.subr.mxu0 0.0
        %3041 = vmatpush1.msra.mxu0 0.0
        %3042 = vmatprep.subr.mxu0 0.0
        %3043 = vmatpush1.msra.mxu0 0.0
        %3044 = vmatprep.subr.mxu0 0.0
        %3045 = vmatpush1.msra.mxu0 0.0
        %3046 = vmatprep.subr.mxu0 0.0
        %3047 = vmatpush1.msra.mxu0 0.0
        %3048 = vmatprep.subr.mxu0 0.0
        %3049 = vmatpush1.msra.mxu0 0.0
        %3050 = vmatprep.subr.mxu0 0.0
        %3051 = vmatpush1.msra.mxu0 0.0
        %3052 = vmatprep.subr.mxu0 0.0
        %3053 = vmatpush1.msra.mxu0 0.0
        %3054 = vmatprep.subr.mxu0 0.0
        %3055 = vmatpush1.msra.mxu0 0.0
        %3056 = vmatprep.mubr.f32.mxu0 0.0
        %3057 = vmatmul.mubr.f32.gmra.mrb[0].mxu0 %v2981
        %v3058 = vpop.f32.mrb[0].mxu0
        %v3059 = vadd.f32 0.0, %v3058
        %v3060 = vpop.f32.mrb[0].mxu0
        %v3061 = vadd.f32 0.0, %v3060
        %3062 = vmatprep.mubr.f32.mxu0 0.0
        %3063 = vmatmul.mubr.f32.gmra.mrb[0].mxu0 %v2984
        %v3064 = vpop.f32.mrb[0].mxu0
        %v3065 = vadd.f32 0.0, %v3064
        %v3066 = vpop.f32.mrb[0].mxu0
        %v3067 = vadd.f32 0.0, %v3066
        %3068 = vmatprep.mubr.f32.mxu0 0.0
        %3069 = vmatmul.mubr.f32.gmra.mrb[0].mxu0 %v2987
        %v3070 = vpop.f32.mrb[0].mxu0
        %v3071 = vadd.f32 0.0, %v3070
        %v3072 = vpop.f32.mrb[0].mxu0
        %v3073 = vadd.f32 0.0, %v3072
        %3074 = vmatprep.mubr.f32.mxu0 0.0
        %3075 = vmatmul.mubr.f32.gmra.mrb[0].mxu0 %v2990
        %v3076 = vpop.f32.mrb[0].mxu0
        %v3077 = vadd.f32 0.0, %v3076
        %v3078 = vpop.f32.mrb[0].mxu0
        %v3079 = vadd.f32 0.0, %v3078
        %3080 = vdwg.mxu0
        %v3081 = vadd.f32 %v2953, %v3059
        %v3082 = vadd.f32 %v2954, %v3061
        %v3083 = vadd.f32 %v2955, %v3065
        %v3084 = vadd.f32 %v2956, %v3067
        %v3085 = vadd.f32 %v2957, %v3071
        %v3086 = vadd.f32 %v2958, %v3073
        %v3087 = vadd.f32 %v2959, %v3077
        %v3088 = vadd.f32 %v2960, %v3079
        %s3089 = scalar_lea.vmem %s3, 224
        %v3090 = vld [vmem:[%s3089] sm:$0xff]
        %v3091 = vld [vmem:[%s3089 + $0x8] sm:$0xff]
        %v3092 = vld [vmem:[%s3089 + $0x10] sm:$0xff]
        %v3093 = vld [vmem:[%s3089 + $0x18] sm:$0xff]
        %3094 = vrot.lane.b32.xlu0 %v2212, 95
        %v3095 = vpop.permute.xlu0 %3094
        %3096 = vrot.lane.b32.xlu0 %v2213, 95
        %v3097 = vpop.permute.xlu0 %3096
        %3098 = vrot.lane.b32.xlu0 %v2214, 95
        %v3099 = vpop.permute.xlu0 %3098
        %3100 = vrot.lane.b32.xlu0 %v2215, 95
        %v3101 = vpop.permute.xlu0 %3100
        %v3102 = vsel %vm981, %v3095, %v3097
        %v3103 = vsel %vm981, %v3099, %v3101
        %v3109 = vsel %vm2243, %v3090, 0
        %v3112 = vsel %vm2243, %v3091, 0
        %v3115 = vsel %vm2243, %v3092, 0
        %v3118 = vsel %vm2243, %v3093, 0
        %3120 = vmatprep.subr.mxu0 %v3097
        %3121 = vmatpush1.msra.mxu0 %v3102
        %3122 = vmatprep.subr.mxu0 %v3101
        %3123 = vmatpush1.msra.mxu0 %v3103
        %3124 = vmatprep.subr.mxu0 0.0
        %3125 = vmatpush1.msra.mxu0 0.0
        %3126 = vmatprep.subr.mxu0 0.0
        %3127 = vmatpush1.msra.mxu0 0.0
        %3128 = vmatprep.subr.mxu0 0.0
        %3129 = vmatpush1.msra.mxu0 0.0
        %3130 = vmatprep.subr.mxu0 0.0
        %3131 = vmatpush1.msra.mxu0 0.0
        %3132 = vmatprep.subr.mxu0 0.0
        %3133 = vmatpush1.msra.mxu0 0.0
        %3134 = vmatprep.subr.mxu0 0.0
        %3135 = vmatpush1.msra.mxu0 0.0
        %3136 = vmatprep.subr.mxu0 0.0
        %3137 = vmatpush1.msra.mxu0 0.0
        %3138 = vmatprep.subr.mxu0 0.0
        %3139 = vmatpush1.msra.mxu0 0.0
        %3140 = vmatprep.subr.mxu0 0.0
        %3141 = vmatpush1.msra.mxu0 0.0
        %3142 = vmatprep.subr.mxu0 0.0
        %3143 = vmatpush1.msra.mxu0 0.0
        %3144 = vmatprep.subr.mxu0 0.0
        %3145 = vmatpush1.msra.mxu0 0.0
        %3146 = vmatprep.subr.mxu0 0.0
        %3147 = vmatpush1.msra.mxu0 0.0
        %3148 = vmatprep.subr.mxu0 0.0
        %3149 = vmatpush1.msra.mxu0 0.0
        %3150 = vmatprep.subr.mxu0 0.0
        %3151 = vmatpush1.msra.mxu0 0.0
        %3152 = vmatprep.subr.mxu0 0.0
        %3153 = vmatpush1.msra.mxu0 0.0
        %3154 = vmatprep.subr.mxu0 0.0
        %3155 = vmatpush1.msra.mxu0 0.0
        %3156 = vmatprep.subr.mxu0 0.0
        %3157 = vmatpush1.msra.mxu0 0.0
        %3158 = vmatprep.subr.mxu0 0.0
        %3159 = vmatpush1.msra.mxu0 0.0
        %3160 = vmatprep.subr.mxu0 0.0
        %3161 = vmatpush1.msra.mxu0 0.0
        %3162 = vmatprep.subr.mxu0 0.0
        %3163 = vmatpush1.msra.mxu0 0.0
        %3164 = vmatprep.subr.mxu0 0.0
        %3165 = vmatpush1.msra.mxu0 0.0
        %3166 = vmatprep.subr.mxu0 0.0
        %3167 = vmatpush1.msra.mxu0 0.0
        %3168 = vmatprep.subr.mxu0 0.0
        %3169 = vmatpush1.msra.mxu0 0.0
        %3170 = vmatprep.subr.mxu0 0.0
        %3171 = vmatpush1.msra.mxu0 0.0
        %3172 = vmatprep.subr.mxu0 0.0
        %3173 = vmatpush1.msra.mxu0 0.0
        %3174 = vmatprep.subr.mxu0 0.0
        %3175 = vmatpush1.msra.mxu0 0.0
        %3176 = vmatprep.subr.mxu0 0.0
        %3177 = vmatpush1.msra.mxu0 0.0
        %3178 = vmatprep.subr.mxu0 0.0
        %3179 = vmatpush1.msra.mxu0 0.0
        %3180 = vmatprep.subr.mxu0 0.0
        %3181 = vmatpush1.msra.mxu0 0.0
        %3182 = vmatprep.subr.mxu0 0.0
        %3183 = vmatpush1.msra.mxu0 0.0
        %3184 = vmatprep.mubr.f32.mxu0 0.0
        %3185 = vmatmul.mubr.f32.gmra.mrb[0].mxu0 %v3109
        %v3186 = vpop.f32.mrb[0].mxu0
        %v3187 = vadd.f32 0.0, %v3186
        %v3188 = vpop.f32.mrb[0].mxu0
        %v3189 = vadd.f32 0.0, %v3188
        %3190 = vmatprep.mubr.f32.mxu0 0.0
        %3191 = vmatmul.mubr.f32.gmra.mrb[0].mxu0 %v3112
        %v3192 = vpop.f32.mrb[0].mxu0
        %v3193 = vadd.f32 0.0, %v3192
        %v3194 = vpop.f32.mrb[0].mxu0
        %v3195 = vadd.f32 0.0, %v3194
        %3196 = vmatprep.mubr.f32.mxu0 0.0
        %3197 = vmatmul.mubr.f32.gmra.mrb[0].mxu0 %v3115
        %v3198 = vpop.f32.mrb[0].mxu0
        %v3199 = vadd.f32 0.0, %v3198
        %v3200 = vpop.f32.mrb[0].mxu0
        %v3201 = vadd.f32 0.0, %v3200
        %3202 = vmatprep.mubr.f32.mxu0 0.0
        %3203 = vmatmul.mubr.f32.gmra.mrb[0].mxu0 %v3118
        %v3204 = vpop.f32.mrb[0].mxu0
        %v3205 = vadd.f32 0.0, %v3204
        %v3206 = vpop.f32.mrb[0].mxu0
        %v3207 = vadd.f32 0.0, %v3206
        %3208 = vdwg.mxu0
        %v3209 = vadd.f32 %v3081, %v3187
        %v3210 = vadd.f32 %v3082, %v3189
        %v3211 = vadd.f32 %v3083, %v3193
        %v3212 = vadd.f32 %v3084, %v3195
        %v3213 = vadd.f32 %v3085, %v3199
        %v3214 = vadd.f32 %v3086, %v3201
        %v3215 = vadd.f32 %v3087, %v3205
        %v3216 = vadd.f32 %v3088, %v3207
        %s3217 = scalar_lea.vmem %s3, 256
        %v3218 = vld [vmem:[%s3217] sm:$0xff]
        %v3219 = vld [vmem:[%s3217 + $0x8] sm:$0xff]
        %v3220 = vld [vmem:[%s3217 + $0x10] sm:$0xff]
        %v3221 = vld [vmem:[%s3217 + $0x18] sm:$0xff]
        %3222 = vrot.lane.b32.xlu0 %v2212, 94
        %v3223 = vpop.permute.xlu0 %3222
        %3224 = vrot.lane.b32.xlu0 %v2213, 94
        %v3225 = vpop.permute.xlu0 %3224
        %3226 = vrot.lane.b32.xlu0 %v2214, 94
        %v3227 = vpop.permute.xlu0 %3226
        %3228 = vrot.lane.b32.xlu0 %v2215, 94
        %v3229 = vpop.permute.xlu0 %3228
        %v3230 = vsel %vm1096, %v3223, %v3225
        %v3231 = vsel %vm1096, %v3227, %v3229
        %v3237 = vsel %vm2243, %v3218, 0
        %v3240 = vsel %vm2243, %v3219, 0
        %v3243 = vsel %vm2243, %v3220, 0
        %v3246 = vsel %vm2243, %v3221, 0
        %3248 = vmatprep.subr.mxu0 %v3225
        %3249 = vmatpush1.msra.mxu0 %v3230
        %3250 = vmatprep.subr.mxu0 %v3229
        %3251 = vmatpush1.msra.mxu0 %v3231
        %3252 = vmatprep.subr.mxu0 0.0
        %3253 = vmatpush1.msra.mxu0 0.0
        %3254 = vmatprep.subr.mxu0 0.0
        %3255 = vmatpush1.msra.mxu0 0.0
        %3256 = vmatprep.subr.mxu0 0.0
        %3257 = vmatpush1.msra.mxu0 0.0
        %3258 = vmatprep.subr.mxu0 0.0
        %3259 = vmatpush1.msra.mxu0 0.0
        %3260 = vmatprep.subr.mxu0 0.0
        %3261 = vmatpush1.msra.mxu0 0.0
        %3262 = vmatprep.subr.mxu0 0.0
        %3263 = vmatpush1.msra.mxu0 0.0
        %3264 = vmatprep.subr.mxu0 0.0
        %3265 = vmatpush1.msra.mxu0 0.0
        %3266 = vmatprep.subr.mxu0 0.0
        %3267 = vmatpush1.msra.mxu0 0.0
        %3268 = vmatprep.subr.mxu0 0.0
        %3269 = vmatpush1.msra.mxu0 0.0
        %3270 = vmatprep.subr.mxu0 0.0
        %3271 = vmatpush1.msra.mxu0 0.0
        %3272 = vmatprep.subr.mxu0 0.0
        %3273 = vmatpush1.msra.mxu0 0.0
        %3274 = vmatprep.subr.mxu0 0.0
        %3275 = vmatpush1.msra.mxu0 0.0
        %3276 = vmatprep.subr.mxu0 0.0
        %3277 = vmatpush1.msra.mxu0 0.0
        %3278 = vmatprep.subr.mxu0 0.0
        %3279 = vmatpush1.msra.mxu0 0.0
        %3280 = vmatprep.subr.mxu0 0.0
        %3281 = vmatpush1.msra.mxu0 0.0
        %3282 = vmatprep.subr.mxu0 0.0
        %3283 = vmatpush1.msra.mxu0 0.0
        %3284 = vmatprep.subr.mxu0 0.0
        %3285 = vmatpush1.msra.mxu0 0.0
        %3286 = vmatprep.subr.mxu0 0.0
        %3287 = vmatpush1.msra.mxu0 0.0
        %3288 = vmatprep.subr.mxu0 0.0
        %3289 = vmatpush1.msra.mxu0 0.0
        %3290 = vmatprep.subr.mxu0 0.0
        %3291 = vmatpush1.msra.mxu0 0.0
        %3292 = vmatprep.subr.mxu0 0.0
        %3293 = vmatpush1.msra.mxu0 0.0
        %3294 = vmatprep.subr.mxu0 0.0
        %3295 = vmatpush1.msra.mxu0 0.0
        %3296 = vmatprep.subr.mxu0 0.0
        %3297 = vmatpush1.msra.mxu0 0.0
        %3298 = vmatprep.subr.mxu0 0.0
        %3299 = vmatpush1.msra.mxu0 0.0
        %3300 = vmatprep.subr.mxu0 0.0
        %3301 = vmatpush1.msra.mxu0 0.0
        %3302 = vmatprep.subr.mxu0 0.0
        %3303 = vmatpush1.msra.mxu0 0.0
        %3304 = vmatprep.subr.mxu0 0.0
        %3305 = vmatpush1.msra.mxu0 0.0
        %3306 = vmatprep.subr.mxu0 0.0
        %3307 = vmatpush1.msra.mxu0 0.0
        %3308 = vmatprep.subr.mxu0 0.0
        %3309 = vmatpush1.msra.mxu0 0.0
        %3310 = vmatprep.subr.mxu0 0.0
        %3311 = vmatpush1.msra.mxu0 0.0
        %3312 = vmatprep.mubr.f32.mxu0 0.0
        %3313 = vmatmul.mubr.f32.gmra.mrb[0].mxu0 %v3237
        %v3314 = vpop.f32.mrb[0].mxu0
        %v3315 = vadd.f32 0.0, %v3314
        %v3316 = vpop.f32.mrb[0].mxu0
        %v3317 = vadd.f32 0.0, %v3316
        %3318 = vmatprep.mubr.f32.mxu0 0.0
        %3319 = vmatmul.mubr.f32.gmra.mrb[0].mxu0 %v3240
        %v3320 = vpop.f32.mrb[0].mxu0
        %v3321 = vadd.f32 0.0, %v3320
        %v3322 = vpop.f32.mrb[0].mxu0
        %v3323 = vadd.f32 0.0, %v3322
        %3324 = vmatprep.mubr.f32.mxu0 0.0
        %3325 = vmatmul.mubr.f32.gmra.mrb[0].mxu0 %v3243
        %v3326 = vpop.f32.mrb[0].mxu0
        %v3327 = vadd.f32 0.0, %v3326
        %v3328 = vpop.f32.mrb[0].mxu0
        %v3329 = vadd.f32 0.0, %v3328
        %3330 = vmatprep.mubr.f32.mxu0 0.0
        %3331 = vmatmul.mubr.f32.gmra.mrb[0].mxu0 %v3246
        %v3332 = vpop.f32.mrb[0].mxu0
        %v3333 = vadd.f32 0.0, %v3332
        %v3334 = vpop.f32.mrb[0].mxu0
        %v3335 = vadd.f32 0.0, %v3334
        %3336 = vdwg.mxu0
        %v3337 = vadd.f32 %v3209, %v3315
        %v3338 = vadd.f32 %v3210, %v3317
        %v3339 = vadd.f32 %v3211, %v3321
        %v3340 = vadd.f32 %v3212, %v3323
        %v3341 = vadd.f32 %v3213, %v3327
        %v3342 = vadd.f32 %v3214, %v3329
        %v3343 = vadd.f32 %v3215, %v3333
        %v3344 = vadd.f32 %v3216, %v3335
        %v3345 = vld [vmem:[%s4] sm:$0xff]
        %v3346 = vld [vmem:[%s4 + $0x8] sm:$0xff]
        %v3347 = vld [vmem:[%s4 + $0x10] sm:$0xff]
        %v3348 = vld [vmem:[%s4 + $0x18] sm:$0xff]
        %3350 = vset.pattern.permute.xlu0 0
        %3351 = vperm.xlu0 %3350, %v3345
        %v3352 = vpop.permute.xlu0 %3351
        %3355 = vset.pattern.permute.xlu0 0
        %3356 = vperm.xlu0 %3355, %v3346
        %v3357 = vpop.permute.xlu0 %3356
        %3360 = vset.pattern.permute.xlu0 0
        %3361 = vperm.xlu0 %3360, %v3347
        %v3362 = vpop.permute.xlu0 %3361
        %3365 = vset.pattern.permute.xlu0 0
        %3366 = vperm.xlu0 %3365, %v3348
        %v3367 = vpop.permute.xlu0 %3366
        %v3369 = vadd.f32 %v3337, %v3352
        %v3370 = vadd.f32 %v3338, %v3352
        %v3371 = vadd.f32 %v3339, %v3357
        %v3372 = vadd.f32 %v3340, %v3357
        %v3373 = vadd.f32 %v3341, %v3362
        %v3374 = vadd.f32 %v3342, %v3362
        %v3375 = vadd.f32 %v3343, %v3367
        %v3376 = vadd.f32 %v3344, %v3367
        %3385 = vrot.lane.b32.xlu0 %v3369, 127
        %v3386 = vpop.permute.xlu0 %3385
        %3387 = vrot.lane.b32.xlu0 %v3370, 127
        %v3388 = vpop.permute.xlu0 %3387
        %3389 = vrot.lane.b32.xlu0 %v3371, 127
        %v3390 = vpop.permute.xlu0 %3389
        %3391 = vrot.lane.b32.xlu0 %v3372, 127
        %v3392 = vpop.permute.xlu0 %3391
        %3393 = vrot.lane.b32.xlu0 %v3373, 127
        %v3394 = vpop.permute.xlu0 %3393
        %3395 = vrot.lane.b32.xlu0 %v3374, 127
        %v3396 = vpop.permute.xlu0 %3395
        %3397 = vrot.lane.b32.xlu0 %v3375, 127
        %v3398 = vpop.permute.xlu0 %3397
        %3399 = vrot.lane.b32.xlu0 %v3376, 127
        %v3400 = vpop.permute.xlu0 %3399
        %v3401 = vsel %vm606, %v3386, %v3388
        %v3402 = vsel %vm606, %v3390, %v3392
        %v3403 = vsel %vm606, %v3394, %v3396
        %v3404 = vsel %vm606, %v3398, %v3400
        %v3413 = vmax.f32 %v3369, %v3401
        %v3414 = vmax.f32 %v3370, %v3388
        %v3415 = vmax.f32 %v3371, %v3402
        %v3416 = vmax.f32 %v3372, %v3392
        %v3417 = vmax.f32 %v3373, %v3403
        %v3418 = vmax.f32 %v3374, %v3396
        %v3419 = vmax.f32 %v3375, %v3404
        %v3420 = vmax.f32 %v3376, %v3400
        %3429 = vrot.lane.b32.xlu0 %v3413, 112
        %v3430 = vpop.permute.xlu0 %3429
        %3431 = vrot.lane.b32.xlu0 %v3414, 112
        %v3432 = vpop.permute.xlu0 %3431
        %3433 = vrot.lane.b32.xlu0 %v3415, 112
        %v3434 = vpop.permute.xlu0 %3433
        %3435 = vrot.lane.b32.xlu0 %v3416, 112
        %v3436 = vpop.permute.xlu0 %3435
        %3437 = vrot.lane.b32.xlu0 %v3417, 112
        %v3438 = vpop.permute.xlu0 %3437
        %3439 = vrot.lane.b32.xlu0 %v3418, 112
        %v3440 = vpop.permute.xlu0 %3439
        %3441 = vrot.lane.b32.xlu0 %v3419, 112
        %v3442 = vpop.permute.xlu0 %3441
        %3443 = vrot.lane.b32.xlu0 %v3420, 112
        %v3444 = vpop.permute.xlu0 %3443
        %v3445 = vsel %vm2587, %v3430, %v3432
        %v3446 = vsel %vm2587, %v3434, %v3436
        %v3447 = vsel %vm2587, %v3438, %v3440
        %v3448 = vsel %vm2587, %v3442, %v3444
        %v3457 = vmax.f32 %v3413, %v3445
        %v3458 = vmax.f32 %v3414, %v3432
        %v3459 = vmax.f32 %v3415, %v3446
        %v3460 = vmax.f32 %v3416, %v3436
        %v3461 = vmax.f32 %v3417, %v3447
        %v3462 = vmax.f32 %v3418, %v3440
        %v3463 = vmax.f32 %v3419, %v3448
        %v3464 = vmax.f32 %v3420, %v3444
        %v3465 = vld [vmem:[#allocation8] sm:$0xff]
        %v3466 = vld [vmem:[#allocation8 + $0x8] sm:$0xff]
        %v3467 = vld [vmem:[#allocation8 + $0x10] sm:$0xff]
        %v3468 = vld [vmem:[#allocation8 + $0x18] sm:$0xff]
        %v3469 = vld [vmem:[#allocation8 + $0x20] sm:$0xff]
        %v3470 = vld [vmem:[#allocation8 + $0x28] sm:$0xff]
        %v3471 = vld [vmem:[#allocation8 + $0x30] sm:$0xff]
        %v3472 = vld [vmem:[#allocation8 + $0x38] sm:$0xff]
        %v3473 = vld [vmem:[#allocation8 + $0x40] sm:$0xff]
        %v3474 = vld [vmem:[#allocation8 + $0x48] sm:$0xff]
        %v3475 = vld [vmem:[#allocation8 + $0x50] sm:$0xff]
        %v3476 = vld [vmem:[#allocation8 + $0x58] sm:$0xff]
        %v3477 = vld [vmem:[#allocation8 + $0x60] sm:$0xff]
        %v3478 = vld [vmem:[#allocation8 + $0x68] sm:$0xff]
        %v3479 = vld [vmem:[#allocation8 + $0x70] sm:$0xff]
        %v3480 = vld [vmem:[#allocation8 + $0x78] sm:$0xff]
        %v3481 = vld [vmem:[#allocation8 + $0x80] sm:$0xff]
        %v3482 = vld [vmem:[#allocation8 + $0x88] sm:$0xff]
        %v3483 = vld [vmem:[#allocation8 + $0x90] sm:$0xff]
        %v3484 = vld [vmem:[#allocation8 + $0x98] sm:$0xff]
        %v3485 = vld [vmem:[#allocation8 + $0xa0] sm:$0xff]
        %v3486 = vld [vmem:[#allocation8 + $0xa8] sm:$0xff]
        %v3487 = vld [vmem:[#allocation8 + $0xb0] sm:$0xff]
        %v3488 = vld [vmem:[#allocation8 + $0xb8] sm:$0xff]
        %v3489 = vld [vmem:[#allocation8 + $0xc0] sm:$0xff]
        %v3490 = vld [vmem:[#allocation8 + $0xc8] sm:$0x1f]
        %vm3491 = vcmask 629760
        %v3493 = vsel %vm3491, %v3458, 0
        %v3496 = vsel %vm3491, %v3460, 0
        %v3499 = vsel %vm3491, %v3462, 0
        %v3502 = vsel %vm3491, %v3464, 0
        %vm3504 = vcmask 1044480
        %v3506 = vsel %vm3504, %v3490, 0
        %3508 = vmatprep.subr.mxu0 0.0
        %3509 = vmatpush1.msra.mxu0 %v3465
        %3510 = vmatprep.subr.mxu0 0.0
        %3511 = vmatpush1.msra.mxu0 %v3466
        %3512 = vmatprep.subr.mxu0 0.0
        %3513 = vmatpush1.msra.mxu0 %v3467
        %3514 = vmatprep.subr.mxu0 0.0
        %3515 = vmatpush1.msra.mxu0 %v3468
        %3516 = vmatprep.subr.mxu0 0.0
        %3517 = vmatpush1.msra.mxu0 %v3469
        %3518 = vmatprep.subr.mxu0 0.0
        %3519 = vmatpush1.msra.mxu0 %v3470
        %3520 = vmatprep.subr.mxu0 0.0
        %3521 = vmatpush1.msra.mxu0 %v3471
        %3522 = vmatprep.subr.mxu0 0.0
        %3523 = vmatpush1.msra.mxu0 %v3472
        %3524 = vmatprep.subr.mxu0 0.0
        %3525 = vmatpush1.msra.mxu0 %v3473
        %3526 = vmatprep.subr.mxu0 0.0
        %3527 = vmatpush1.msra.mxu0 %v3474
        %3528 = vmatprep.subr.mxu0 0.0
        %3529 = vmatpush1.msra.mxu0 %v3475
        %3530 = vmatprep.subr.mxu0 0.0
        %3531 = vmatpush1.msra.mxu0 %v3476
        %3532 = vmatprep.subr.mxu0 0.0
        %3533 = vmatpush1.msra.mxu0 %v3477
        %3534 = vmatprep.subr.mxu0 0.0
        %3535 = vmatpush1.msra.mxu0 %v3478
        %3536 = vmatprep.subr.mxu0 0.0
        %3537 = vmatpush1.msra.mxu0 %v3479
        %3538 = vmatprep.subr.mxu0 0.0
        %3539 = vmatpush1.msra.mxu0 %v3480
        %3540 = vmatprep.subr.mxu0 0.0
        %3541 = vmatpush1.msra.mxu0 %v3481
        %3542 = vmatprep.subr.mxu0 0.0
        %3543 = vmatpush1.msra.mxu0 %v3482
        %3544 = vmatprep.subr.mxu0 0.0
        %3545 = vmatpush1.msra.mxu0 %v3483
        %3546 = vmatprep.subr.mxu0 0.0
        %3547 = vmatpush1.msra.mxu0 %v3484
        %3548 = vmatprep.subr.mxu0 0.0
        %3549 = vmatpush1.msra.mxu0 %v3485
        %3550 = vmatprep.subr.mxu0 0.0
        %3551 = vmatpush1.msra.mxu0 %v3486
        %3552 = vmatprep.subr.mxu0 0.0
        %3553 = vmatpush1.msra.mxu0 %v3487
        %3554 = vmatprep.subr.mxu0 0.0
        %3555 = vmatpush1.msra.mxu0 %v3488
        %3556 = vmatprep.subr.mxu0 0.0
        %3557 = vmatpush1.msra.mxu0 %v3489
        %3558 = vmatprep.subr.mxu0 0.0
        %3559 = vmatpush1.msra.mxu0 %v3506
        %3560 = vmatprep.subr.mxu0 0.0
        %3561 = vmatpush1.msra.mxu0 0.0
        %3562 = vmatprep.subr.mxu0 0.0
        %3563 = vmatpush1.msra.mxu0 0.0
        %3564 = vmatprep.subr.mxu0 0.0
        %3565 = vmatpush1.msra.mxu0 0.0
        %3566 = vmatprep.subr.mxu0 0.0
        %3567 = vmatpush1.msra.mxu0 0.0
        %3568 = vmatprep.subr.mxu0 0.0
        %3569 = vmatpush1.msra.mxu0 0.0
        %3570 = vmatprep.subr.mxu0 0.0
        %3571 = vmatpush1.msra.mxu0 0.0
        %3572 = vmatprep.mubr.f32.mxu0 %v3493
        %3573 = vmatmul.mubr.f32.gmra.mrb[0].mxu0 %v3457
        %v3574 = vpop.f32.mrb[0].mxu0
        %v3575 = vadd.f32 0.0, %v3574
        %v3576 = vpop.f32.mrb[0].mxu0
        %3577 = vmatprep.mubr.f32.mxu0 %v3496
        %3578 = vmatmul.mubr.f32.gmra.mrb[0].mxu0 %v3459
        %v3579 = vpop.f32.mrb[0].mxu0
        %v3580 = vadd.f32 0.0, %v3579
        %v3581 = vpop.f32.mrb[0].mxu0
        %3582 = vmatprep.mubr.f32.mxu0 %v3499
        %3583 = vmatmul.mubr.f32.gmra.mrb[0].mxu0 %v3461
        %v3584 = vpop.f32.mrb[0].mxu0
        %v3585 = vadd.f32 0.0, %v3584
        %v3586 = vpop.f32.mrb[0].mxu0
        %3587 = vmatprep.mubr.f32.mxu0 %v3502
        %3588 = vmatmul.mubr.f32.gmra.mrb[0].mxu0 %v3463
        %v3589 = vpop.f32.mrb[0].mxu0
        %v3590 = vadd.f32 0.0, %v3589
        %v3591 = vpop.f32.mrb[0].mxu0
        %3592 = vdwg.mxu0
        %v3593 = vmax.f32 %v3575, 0.0
        %v3594 = vmax.f32 %v3580, 0.0
        %v3595 = vmax.f32 %v3585, 0.0
        %v3596 = vmax.f32 %v3590, 0.0
        %v3597 = vlaneseq
        %vm3598 = vcmp.ge.s32.totalorder %v3597, 0
        %vm3599 = vcmp.lt.s32.totalorder %v3597, 128
        %vm3600 = vmand %vm3598, %vm3599
        %3601 = vst.msk [vmem:[#allocation2] sm:$0x1] %vm3600, %v3593
        %v3604 = vunpack.c.l.s4 1966171168
        %v3605 = vunpack.c.0.s8 %v3604
        %v3606 = vlaneseq
        %v3607 = vshrl.u32 %v3606, 7
        %v3608 = vsub.s32 %v3605, %v3607
        %v3609 = vrot.slane %v3593, %v3608
        %v3610 = vcombine.high %v3609, %v3609
        %v3612 = vunpack.c.l.s4 1966171168
        %v3613 = vunpack.c.0.s8 %v3612
        %v3614 = vlaneseq
        %v3615 = vshrl.u32 %v3614, 7
        %v3616 = vsub.s32 %v3613, %v3615
        %v3617 = vrot.slane %v3609, %v3616
        %v3619 = vunpack.c.l.s4 1966171168
        %v3620 = vunpack.c.0.s8 %v3619
        %v3621 = vlaneseq
        %v3622 = vshrl.u32 %v3621, 7
        %v3623 = vsub.s32 %v3620, %v3622
        %v3624 = vrot.slane %v3610, %v3623
        %3626 = vst.msk [vmem:[#allocation2 + $0x1] sm:$0x1] %vm3600, %v3624
        %v3627 = vcombine.high %v3617, %v3617
        %3629 = vst.msk [vmem:[#allocation2 + $0x2] sm:$0x1] %vm3600, %v3627
        %v3630 = vcombine.high %v3624, %v3624
        %3632 = vst.msk [vmem:[#allocation2 + $0x3] sm:$0x1] %vm3600, %v3630
        %v3633 = vcombine.high %v3593, %v3593
        %v3635 = vunpack.c.l.s4 1966171168
        %v3636 = vunpack.c.0.s8 %v3635
        %v3637 = vlaneseq
        %v3638 = vshrl.u32 %v3637, 7
        %v3639 = vsub.s32 %v3636, %v3638
        %v3640 = vrot.slane %v3633, %v3639
        %v3642 = vunpack.c.l.s4 1966171168
        %v3643 = vunpack.c.0.s8 %v3642
        %v3644 = vlaneseq
        %v3645 = vshrl.u32 %v3644, 7
        %v3646 = vsub.s32 %v3643, %v3645
        %v3647 = vrot.slane %v3640, %v3646
        %3649 = vst.msk [vmem:[#allocation2 + $0x4] sm:$0x1] %vm3600, %v3647
        %v3650 = vcombine.high %v3640, %v3640
        %v3652 = vunpack.c.l.s4 1966171168
        %v3653 = vunpack.c.0.s8 %v3652
        %v3654 = vlaneseq
        %v3655 = vshrl.u32 %v3654, 7
        %v3656 = vsub.s32 %v3653, %v3655
        %v3657 = vrot.slane %v3650, %v3656
        %3659 = vst.msk [vmem:[#allocation2 + $0x5] sm:$0x1] %vm3600, %v3657
        %v3660 = vcombine.high %v3647, %v3647
        %3662 = vst.msk [vmem:[#allocation2 + $0x6] sm:$0x1] %vm3600, %v3660
        %v3663 = vcombine.high %v3657, %v3657
        %3665 = vst.msk [vmem:[#allocation2 + $0x7] sm:$0x1] %vm3600, %v3663
        %3666 = vst.msk [vmem:[#allocation2 + $0x8] sm:$0x1] %vm3600, %v3594
        %v3669 = vunpack.c.l.s4 1966171168
        %v3670 = vunpack.c.0.s8 %v3669
        %v3671 = vlaneseq
        %v3672 = vshrl.u32 %v3671, 7
        %v3673 = vsub.s32 %v3670, %v3672
        %v3674 = vrot.slane %v3594, %v3673
        %v3675 = vcombine.high %v3674, %v3674
        %v3677 = vunpack.c.l.s4 1966171168
        %v3678 = vunpack.c.0.s8 %v3677
        %v3679 = vlaneseq
        %v3680 = vshrl.u32 %v3679, 7
        %v3681 = vsub.s32 %v3678, %v3680
        %v3682 = vrot.slane %v3674, %v3681
        %v3684 = vunpack.c.l.s4 1966171168
        %v3685 = vunpack.c.0.s8 %v3684
        %v3686 = vlaneseq
        %v3687 = vshrl.u32 %v3686, 7
        %v3688 = vsub.s32 %v3685, %v3687
        %v3689 = vrot.slane %v3675, %v3688
        %3691 = vst.msk [vmem:[#allocation2 + $0x9] sm:$0x1] %vm3600, %v3689
        %v3692 = vcombine.high %v3682, %v3682
        %3694 = vst.msk [vmem:[#allocation2 + $0xa] sm:$0x1] %vm3600, %v3692
        %v3695 = vcombine.high %v3689, %v3689
        %3697 = vst.msk [vmem:[#allocation2 + $0xb] sm:$0x1] %vm3600, %v3695
        %v3698 = vcombine.high %v3594, %v3594
        %v3700 = vunpack.c.l.s4 1966171168
        %v3701 = vunpack.c.0.s8 %v3700
        %v3702 = vlaneseq
        %v3703 = vshrl.u32 %v3702, 7
        %v3704 = vsub.s32 %v3701, %v3703
        %v3705 = vrot.slane %v3698, %v3704
        %v3707 = vunpack.c.l.s4 1966171168
        %v3708 = vunpack.c.0.s8 %v3707
        %v3709 = vlaneseq
        %v3710 = vshrl.u32 %v3709, 7
        %v3711 = vsub.s32 %v3708, %v3710
        %v3712 = vrot.slane %v3705, %v3711
        %3714 = vst.msk [vmem:[#allocation2 + $0xc] sm:$0x1] %vm3600, %v3712
        %v3715 = vcombine.high %v3705, %v3705
        %v3717 = vunpack.c.l.s4 1966171168
        %v3718 = vunpack.c.0.s8 %v3717
        %v3719 = vlaneseq
        %v3720 = vshrl.u32 %v3719, 7
        %v3721 = vsub.s32 %v3718, %v3720
        %v3722 = vrot.slane %v3715, %v3721
        %3724 = vst.msk [vmem:[#allocation2 + $0xd] sm:$0x1] %vm3600, %v3722
        %v3725 = vcombine.high %v3712, %v3712
        %3727 = vst.msk [vmem:[#allocation2 + $0xe] sm:$0x1] %vm3600, %v3725
        %v3728 = vcombine.high %v3722, %v3722
        %3730 = vst.msk [vmem:[#allocation2 + $0xf] sm:$0x1] %vm3600, %v3728
        %3731 = vst.msk [vmem:[#allocation2 + $0x10] sm:$0x1] %vm3600, %v3595
        %v3734 = vunpack.c.l.s4 1966171168
        %v3735 = vunpack.c.0.s8 %v3734
        %v3736 = vlaneseq
        %v3737 = vshrl.u32 %v3736, 7
        %v3738 = vsub.s32 %v3735, %v3737
        %v3739 = vrot.slane %v3595, %v3738
        %v3740 = vcombine.high %v3739, %v3739
        %v3742 = vunpack.c.l.s4 1966171168
        %v3743 = vunpack.c.0.s8 %v3742
        %v3744 = vlaneseq
        %v3745 = vshrl.u32 %v3744, 7
        %v3746 = vsub.s32 %v3743, %v3745
        %v3747 = vrot.slane %v3739, %v3746
        %v3749 = vunpack.c.l.s4 1966171168
        %v3750 = vunpack.c.0.s8 %v3749
        %v3751 = vlaneseq
        %v3752 = vshrl.u32 %v3751, 7
        %v3753 = vsub.s32 %v3750, %v3752
        %v3754 = vrot.slane %v3740, %v3753
        %3756 = vst.msk [vmem:[#allocation2 + $0x11] sm:$0x1] %vm3600, %v3754
        %v3757 = vcombine.high %v3747, %v3747
        %3759 = vst.msk [vmem:[#allocation2 + $0x12] sm:$0x1] %vm3600, %v3757
        %v3760 = vcombine.high %v3754, %v3754
        %3762 = vst.msk [vmem:[#allocation2 + $0x13] sm:$0x1] %vm3600, %v3760
        %v3763 = vcombine.high %v3595, %v3595
        %v3765 = vunpack.c.l.s4 1966171168
        %v3766 = vunpack.c.0.s8 %v3765
        %v3767 = vlaneseq
        %v3768 = vshrl.u32 %v3767, 7
        %v3769 = vsub.s32 %v3766, %v3768
        %v3770 = vrot.slane %v3763, %v3769
        %v3772 = vunpack.c.l.s4 1966171168
        %v3773 = vunpack.c.0.s8 %v3772
        %v3774 = vlaneseq
        %v3775 = vshrl.u32 %v3774, 7
        %v3776 = vsub.s32 %v3773, %v3775
        %v3777 = vrot.slane %v3770, %v3776
        %3779 = vst.msk [vmem:[#allocation2 + $0x14] sm:$0x1] %vm3600, %v3777
        %v3780 = vcombine.high %v3770, %v3770
        %v3782 = vunpack.c.l.s4 1966171168
        %v3783 = vunpack.c.0.s8 %v3782
        %v3784 = vlaneseq
        %v3785 = vshrl.u32 %v3784, 7
        %v3786 = vsub.s32 %v3783, %v3785
        %v3787 = vrot.slane %v3780, %v3786
        %3789 = vst.msk [vmem:[#allocation2 + $0x15] sm:$0x1] %vm3600, %v3787
        %v3790 = vcombine.high %v3777, %v3777
        %3792 = vst.msk [vmem:[#allocation2 + $0x16] sm:$0x1] %vm3600, %v3790
        %v3793 = vcombine.high %v3787, %v3787
        %3795 = vst.msk [vmem:[#allocation2 + $0x17] sm:$0x1] %vm3600, %v3793
        %3796 = vst.msk [vmem:[#allocation2 + $0x18] sm:$0x1] %vm3600, %v3596
        %v3799 = vunpack.c.l.s4 1966171168
        %v3800 = vunpack.c.0.s8 %v3799
        %v3801 = vlaneseq
        %v3802 = vshrl.u32 %v3801, 7
        %v3803 = vsub.s32 %v3800, %v3802
        %v3804 = vrot.slane %v3596, %v3803
        %v3805 = vcombine.high %v3804, %v3804
        %v3807 = vunpack.c.l.s4 1966171168
        %v3808 = vunpack.c.0.s8 %v3807
        %v3809 = vlaneseq
        %v3810 = vshrl.u32 %v3809, 7
        %v3811 = vsub.s32 %v3808, %v3810
        %v3812 = vrot.slane %v3804, %v3811
        %v3814 = vunpack.c.l.s4 1966171168
        %v3815 = vunpack.c.0.s8 %v3814
        %v3816 = vlaneseq
        %v3817 = vshrl.u32 %v3816, 7
        %v3818 = vsub.s32 %v3815, %v3817
        %v3819 = vrot.slane %v3805, %v3818
        %3821 = vst.msk [vmem:[#allocation2 + $0x19] sm:$0x1] %vm3600, %v3819
        %v3822 = vcombine.high %v3812, %v3812
        %3824 = vst.msk [vmem:[#allocation2 + $0x1a] sm:$0x1] %vm3600, %v3822
        %v3825 = vcombine.high %v3819, %v3819
        %3827 = vst.msk [vmem:[#allocation2 + $0x1b] sm:$0x1] %vm3600, %v3825
        %v3828 = vcombine.high %v3596, %v3596
        %v3830 = vunpack.c.l.s4 1966171168
        %v3831 = vunpack.c.0.s8 %v3830
        %v3832 = vlaneseq
        %v3833 = vshrl.u32 %v3832, 7
        %v3834 = vsub.s32 %v3831, %v3833
        %v3835 = vrot.slane %v3828, %v3834
        %v3837 = vunpack.c.l.s4 1966171168
        %v3838 = vunpack.c.0.s8 %v3837
        %v3839 = vlaneseq
        %v3840 = vshrl.u32 %v3839, 7
        %v3841 = vsub.s32 %v3838, %v3840
        %v3842 = vrot.slane %v3835, %v3841
        %3844 = vst.msk [vmem:[#allocation2 + $0x1c] sm:$0x1] %vm3600, %v3842
        %v3845 = vcombine.high %v3835, %v3835
        %v3847 = vunpack.c.l.s4 1966171168
        %v3848 = vunpack.c.0.s8 %v3847
        %v3849 = vlaneseq
        %v3850 = vshrl.u32 %v3849, 7
        %v3851 = vsub.s32 %v3848, %v3850
        %v3852 = vrot.slane %v3845, %v3851
        %3854 = vst.msk [vmem:[#allocation2 + $0x1d] sm:$0x1] %vm3600, %v3852
        %v3855 = vcombine.high %v3842, %v3842
        %3857 = vst.msk [vmem:[#allocation2 + $0x1e] sm:$0x1] %vm3600, %v3855
        %v3858 = vcombine.high %v3852, %v3852
        %3860 = vst.msk [vmem:[#allocation2 + $0x1f] sm:$0x1] %vm3600, %v3858
        %v3861 = vld [vmem:[#allocation2] sm:$0xff]
        %v3862 = vld [vmem:[#allocation2 + $0x8] sm:$0xff]
        %v3863 = vld [vmem:[#allocation2 + $0x10] sm:$0xff]
        %v3864 = vld [vmem:[#allocation2 + $0x18] sm:$0xff]
        %v3865 = vld [vmem:[#allocation9] sm:$0xff]
        %v3866 = vld [vmem:[#allocation9 + $0x8] sm:$0xff]
        %v3867 = vld [vmem:[#allocation9 + $0x10] sm:$0xff]
        %v3868 = vld [vmem:[#allocation9 + $0x18] sm:$0xff]
        %v3869 = vld [vmem:[#allocation9 + $0x20] sm:$0xff]
        %v3870 = vld [vmem:[#allocation9 + $0x28] sm:$0xff]
        %v3871 = vld [vmem:[#allocation9 + $0x30] sm:$0xff]
        %v3872 = vld [vmem:[#allocation9 + $0x38] sm:$0xff]
        %v3873 = vld [vmem:[#allocation9 + $0x40] sm:$0xff]
        %v3874 = vld [vmem:[#allocation9 + $0x48] sm:$0xff]
        %v3875 = vld [vmem:[#allocation9 + $0x50] sm:$0xff]
        %v3876 = vld [vmem:[#allocation9 + $0x58] sm:$0xff]
        %v3877 = vld [vmem:[#allocation9 + $0x60] sm:$0xff]
        %v3878 = vld [vmem:[#allocation9 + $0x68] sm:$0xff]
        %v3879 = vld [vmem:[#allocation9 + $0x70] sm:$0xff]
        %v3880 = vld [vmem:[#allocation9 + $0x78] sm:$0xff]
        %v3881 = vld [vmem:[#allocation9 + $0x80] sm:$0xff]
        %v3882 = vld [vmem:[#allocation9 + $0x88] sm:$0xff]
        %v3883 = vld [vmem:[#allocation9 + $0x90] sm:$0xff]
        %v3884 = vld [vmem:[#allocation9 + $0x98] sm:$0xff]
        %v3885 = vld [vmem:[#allocation9 + $0xa0] sm:$0xff]
        %v3886 = vld [vmem:[#allocation9 + $0xa8] sm:$0xff]
        %v3887 = vld [vmem:[#allocation9 + $0xb0] sm:$0xff]
        %v3888 = vld [vmem:[#allocation9 + $0xb8] sm:$0xff]
        %v3889 = vld [vmem:[#allocation9 + $0xc0] sm:$0xff]
        %v3890 = vld [vmem:[#allocation9 + $0xc8] sm:$0xff]
        %v3891 = vld [vmem:[#allocation9 + $0xd0] sm:$0xff]
        %v3892 = vld [vmem:[#allocation9 + $0xd8] sm:$0xff]
        %v3893 = vld [vmem:[#allocation9 + $0xe0] sm:$0xff]
        %v3894 = vld [vmem:[#allocation9 + $0xe8] sm:$0xff]
        %v3895 = vld [vmem:[#allocation9 + $0xf0] sm:$0xff]
        %v3896 = vld [vmem:[#allocation9 + $0xf8] sm:$0xff]
        %v3897 = vld [vmem:[#allocation9 + $0x100] sm:$0xff]
        %v3898 = vld [vmem:[#allocation9 + $0x108] sm:$0xff]
        %v3899 = vld [vmem:[#allocation9 + $0x110] sm:$0xff]
        %v3900 = vld [vmem:[#allocation9 + $0x118] sm:$0xff]
        %v3901 = vld [vmem:[#allocation9 + $0x120] sm:$0xff]
        %v3902 = vld [vmem:[#allocation9 + $0x128] sm:$0xff]
        %v3903 = vld [vmem:[#allocation9 + $0x130] sm:$0xff]
        %v3904 = vld [vmem:[#allocation9 + $0x138] sm:$0xff]
        %v3905 = vld [vmem:[#allocation9 + $0x140] sm:$0xff]
        %v3906 = vld [vmem:[#allocation9 + $0x148] sm:$0xff]
        %v3907 = vld [vmem:[#allocation9 + $0x150] sm:$0xff]
        %v3908 = vld [vmem:[#allocation9 + $0x158] sm:$0xff]
        %v3909 = vld [vmem:[#allocation9 + $0x160] sm:$0xff]
        %v3910 = vld [vmem:[#allocation9 + $0x168] sm:$0xff]
        %v3911 = vld [vmem:[#allocation9 + $0x170] sm:$0xff]
        %v3912 = vld [vmem:[#allocation9 + $0x178] sm:$0xff]
        %v3913 = vld [vmem:[#allocation9 + $0x180] sm:$0xff]
        %v3914 = vld [vmem:[#allocation9 + $0x188] sm:$0xff]
        %v3915 = vld [vmem:[#allocation9 + $0x190] sm:$0xff]
        %v3916 = vld [vmem:[#allocation9 + $0x198] sm:$0xff]
        %v3917 = vld [vmem:[#allocation9 + $0x1a0] sm:$0xff]
        %v3918 = vld [vmem:[#allocation9 + $0x1a8] sm:$0xff]
        %v3919 = vld [vmem:[#allocation9 + $0x1b0] sm:$0xff]
        %v3920 = vld [vmem:[#allocation9 + $0x1b8] sm:$0xff]
        %v3921 = vld [vmem:[#allocation9 + $0x1c0] sm:$0xff]
        %v3922 = vld [vmem:[#allocation9 + $0x1c8] sm:$0xff]
        %v3923 = vld [vmem:[#allocation9 + $0x1d0] sm:$0xff]
        %v3924 = vld [vmem:[#allocation9 + $0x1d8] sm:$0xff]
        %v3925 = vld [vmem:[#allocation9 + $0x1e0] sm:$0xff]
        %v3926 = vld [vmem:[#allocation9 + $0x1e8] sm:$0xff]
        %v3927 = vld [vmem:[#allocation9 + $0x1f0] sm:$0xff]
        %v3928 = vld [vmem:[#allocation9 + $0x1f8] sm:$0xff]
        %v3929 = vld [vmem:[#allocation9 + $0x200] sm:$0xff]
        %v3930 = vld [vmem:[#allocation9 + $0x208] sm:$0xff]
        %v3931 = vld [vmem:[#allocation9 + $0x210] sm:$0xff]
        %v3932 = vld [vmem:[#allocation9 + $0x218] sm:$0xff]
        %v3933 = vld [vmem:[#allocation9 + $0x220] sm:$0xff]
        %v3934 = vld [vmem:[#allocation9 + $0x228] sm:$0xff]
        %v3935 = vld [vmem:[#allocation9 + $0x230] sm:$0xff]
        %v3936 = vld [vmem:[#allocation9 + $0x238] sm:$0xff]
        %v3937 = vld [vmem:[#allocation9 + $0x240] sm:$0xff]
        %v3938 = vld [vmem:[#allocation9 + $0x248] sm:$0xff]
        %v3939 = vld [vmem:[#allocation9 + $0x250] sm:$0xff]
        %v3940 = vld [vmem:[#allocation9 + $0x258] sm:$0xff]
        %v3941 = vld [vmem:[#allocation9 + $0x260] sm:$0xff]
        %v3942 = vld [vmem:[#allocation9 + $0x268] sm:$0xff]
        %v3943 = vld [vmem:[#allocation9 + $0x270] sm:$0xff]
        %v3944 = vld [vmem:[#allocation9 + $0x278] sm:$0xff]
        %v3945 = vld [vmem:[#allocation9 + $0x280] sm:$0xff]
        %v3946 = vld [vmem:[#allocation9 + $0x288] sm:$0xff]
        %v3947 = vld [vmem:[#allocation9 + $0x290] sm:$0xff]
        %v3948 = vld [vmem:[#allocation9 + $0x298] sm:$0xff]
        %v3949 = vld [vmem:[#allocation9 + $0x2a0] sm:$0xff]
        %v3950 = vld [vmem:[#allocation9 + $0x2a8] sm:$0xff]
        %v3951 = vld [vmem:[#allocation9 + $0x2b0] sm:$0xff]
        %v3952 = vld [vmem:[#allocation9 + $0x2b8] sm:$0xff]
        %v3953 = vld [vmem:[#allocation9 + $0x2c0] sm:$0xff]
        %v3954 = vld [vmem:[#allocation9 + $0x2c8] sm:$0xff]
        %v3955 = vld [vmem:[#allocation9 + $0x2d0] sm:$0xff]
        %v3956 = vld [vmem:[#allocation9 + $0x2d8] sm:$0xff]
        %v3957 = vld [vmem:[#allocation9 + $0x2e0] sm:$0xff]
        %v3958 = vld [vmem:[#allocation9 + $0x2e8] sm:$0xff]
        %v3959 = vld [vmem:[#allocation9 + $0x2f0] sm:$0xff]
        %v3960 = vld [vmem:[#allocation9 + $0x2f8] sm:$0xff]
        %v3961 = vld [vmem:[#allocation9 + $0x300] sm:$0xff]
        %v3962 = vld [vmem:[#allocation9 + $0x308] sm:$0xff]
        %v3963 = vld [vmem:[#allocation9 + $0x310] sm:$0xff]
        %v3964 = vld [vmem:[#allocation9 + $0x318] sm:$0xff]
        %v3965 = vld [vmem:[#allocation9 + $0x320] sm:$0xff]
        %v3966 = vld [vmem:[#allocation9 + $0x328] sm:$0xff]
        %v3967 = vld [vmem:[#allocation9 + $0x330] sm:$0xff]
        %v3968 = vld [vmem:[#allocation9 + $0x338] sm:$0xff]
        %v3969 = vld [vmem:[#allocation9 + $0x340] sm:$0xff]
        %v3970 = vld [vmem:[#allocation9 + $0x348] sm:$0xff]
        %v3971 = vld [vmem:[#allocation9 + $0x350] sm:$0xff]
        %v3972 = vld [vmem:[#allocation9 + $0x358] sm:$0xff]
        %v3973 = vld [vmem:[#allocation9 + $0x360] sm:$0xff]
        %v3974 = vld [vmem:[#allocation9 + $0x368] sm:$0xff]
        %v3975 = vld [vmem:[#allocation9 + $0x370] sm:$0xff]
        %v3976 = vld [vmem:[#allocation9 + $0x378] sm:$0xff]
        %v3977 = vld [vmem:[#allocation9 + $0x380] sm:$0xff]
        %v3978 = vld [vmem:[#allocation9 + $0x388] sm:$0xff]
        %v3979 = vld [vmem:[#allocation9 + $0x390] sm:$0xff]
        %v3980 = vld [vmem:[#allocation9 + $0x398] sm:$0xff]
        %v3981 = vld [vmem:[#allocation9 + $0x3a0] sm:$0xff]
        %v3982 = vld [vmem:[#allocation9 + $0x3a8] sm:$0xff]
        %v3983 = vld [vmem:[#allocation9 + $0x3b0] sm:$0xff]
        %v3984 = vld [vmem:[#allocation9 + $0x3b8] sm:$0xff]
        %v3985 = vld [vmem:[#allocation9 + $0x3c0] sm:$0xff]
        %v3986 = vld [vmem:[#allocation9 + $0x3c8] sm:$0xff]
        %v3987 = vld [vmem:[#allocation9 + $0x3d0] sm:$0xff]
        %v3988 = vld [vmem:[#allocation9 + $0x3d8] sm:$0xff]
        %v3989 = vld [vmem:[#allocation9 + $0x3e0] sm:$0xff]
        %v3990 = vld [vmem:[#allocation9 + $0x3e8] sm:$0xff]
        %v3991 = vld [vmem:[#allocation9 + $0x3f0] sm:$0xff]
        %v3992 = vld [vmem:[#allocation9 + $0x3f8] sm:$0xff]
        %v3993 = vld [vmem:[#allocation9 + $0x400] sm:$0xff]
        %v3994 = vld [vmem:[#allocation9 + $0x408] sm:$0xff]
        %v3995 = vld [vmem:[#allocation9 + $0x410] sm:$0xff]
        %v3996 = vld [vmem:[#allocation9 + $0x418] sm:$0xff]
        %v3997 = vld [vmem:[#allocation9 + $0x420] sm:$0xff]
        %v3998 = vld [vmem:[#allocation9 + $0x428] sm:$0xff]
        %v3999 = vld [vmem:[#allocation9 + $0x430] sm:$0xff]
        %v4000 = vld [vmem:[#allocation9 + $0x438] sm:$0xff]
        %v4001 = vld [vmem:[#allocation9 + $0x440] sm:$0xff]
        %v4002 = vld [vmem:[#allocation9 + $0x448] sm:$0xff]
        %v4003 = vld [vmem:[#allocation9 + $0x450] sm:$0xff]
        %v4004 = vld [vmem:[#allocation9 + $0x458] sm:$0xff]
        %v4005 = vld [vmem:[#allocation9 + $0x460] sm:$0xff]
        %v4006 = vld [vmem:[#allocation9 + $0x468] sm:$0xff]
        %v4007 = vld [vmem:[#allocation9 + $0x470] sm:$0xff]
        %v4008 = vld [vmem:[#allocation9 + $0x478] sm:$0xff]
        %v4009 = vld [vmem:[#allocation9 + $0x480] sm:$0xff]
        %v4010 = vld [vmem:[#allocation9 + $0x488] sm:$0xff]
        %v4011 = vld [vmem:[#allocation9 + $0x490] sm:$0xff]
        %v4012 = vld [vmem:[#allocation9 + $0x498] sm:$0xff]
        %v4013 = vld [vmem:[#allocation9 + $0x4a0] sm:$0xff]
        %v4014 = vld [vmem:[#allocation9 + $0x4a8] sm:$0xff]
        %v4015 = vld [vmem:[#allocation9 + $0x4b0] sm:$0xff]
        %v4016 = vld [vmem:[#allocation9 + $0x4b8] sm:$0xff]
        %v4017 = vld [vmem:[#allocation9 + $0x4c0] sm:$0xff]
        %v4018 = vld [vmem:[#allocation9 + $0x4c8] sm:$0xff]
        %v4019 = vld [vmem:[#allocation9 + $0x4d0] sm:$0xff]
        %v4020 = vld [vmem:[#allocation9 + $0x4d8] sm:$0xff]
        %v4021 = vld [vmem:[#allocation9 + $0x4e0] sm:$0xff]
        %v4022 = vld [vmem:[#allocation9 + $0x4e8] sm:$0xff]
        %v4023 = vld [vmem:[#allocation9 + $0x4f0] sm:$0xff]
        %v4024 = vld [vmem:[#allocation9 + $0x4f8] sm:$0xff]
        %v4025 = vld [vmem:[#allocation9 + $0x500] sm:$0xff]
        %v4026 = vld [vmem:[#allocation9 + $0x508] sm:$0xff]
        %v4027 = vld [vmem:[#allocation9 + $0x510] sm:$0xff]
        %v4028 = vld [vmem:[#allocation9 + $0x518] sm:$0xff]
        %v4029 = vld [vmem:[#allocation9 + $0x520] sm:$0xff]
        %v4030 = vld [vmem:[#allocation9 + $0x528] sm:$0xff]
        %v4031 = vld [vmem:[#allocation9 + $0x530] sm:$0xff]
        %v4032 = vld [vmem:[#allocation9 + $0x538] sm:$0xff]
        %v4033 = vld [vmem:[#allocation9 + $0x540] sm:$0xff]
        %v4034 = vld [vmem:[#allocation9 + $0x548] sm:$0xff]
        %v4035 = vld [vmem:[#allocation9 + $0x550] sm:$0xff]
        %v4036 = vld [vmem:[#allocation9 + $0x558] sm:$0xff]
        %v4037 = vld [vmem:[#allocation9 + $0x560] sm:$0xff]
        %v4038 = vld [vmem:[#allocation9 + $0x568] sm:$0xff]
        %v4039 = vld [vmem:[#allocation9 + $0x570] sm:$0xff]
        %v4040 = vld [vmem:[#allocation9 + $0x578] sm:$0xff]
        %v4041 = vld [vmem:[#allocation9 + $0x580] sm:$0xff]
        %v4042 = vld [vmem:[#allocation9 + $0x588] sm:$0xff]
        %v4043 = vld [vmem:[#allocation9 + $0x590] sm:$0xff]
        %v4044 = vld [vmem:[#allocation9 + $0x598] sm:$0xff]
        %v4045 = vld [vmem:[#allocation9 + $0x5a0] sm:$0xff]
        %v4046 = vld [vmem:[#allocation9 + $0x5a8] sm:$0xff]
        %v4047 = vld [vmem:[#allocation9 + $0x5b0] sm:$0xff]
        %v4048 = vld [vmem:[#allocation9 + $0x5b8] sm:$0xff]
        %v4049 = vld [vmem:[#allocation9 + $0x5c0] sm:$0xff]
        %v4050 = vld [vmem:[#allocation9 + $0x5c8] sm:$0xff]
        %v4051 = vld [vmem:[#allocation9 + $0x5d0] sm:$0xff]
        %v4052 = vld [vmem:[#allocation9 + $0x5d8] sm:$0xff]
        %v4053 = vld [vmem:[#allocation9 + $0x5e0] sm:$0xff]
        %v4054 = vld [vmem:[#allocation9 + $0x5e8] sm:$0xff]
        %v4055 = vld [vmem:[#allocation9 + $0x5f0] sm:$0xff]
        %v4056 = vld [vmem:[#allocation9 + $0x5f8] sm:$0xff]
        %v4057 = vld [vmem:[#allocation9 + $0x600] sm:$0xff]
        %v4058 = vld [vmem:[#allocation9 + $0x608] sm:$0xff]
        %v4059 = vld [vmem:[#allocation9 + $0x610] sm:$0xff]
        %v4060 = vld [vmem:[#allocation9 + $0x618] sm:$0xff]
        %v4061 = vld [vmem:[#allocation9 + $0x620] sm:$0xff]
        %v4062 = vld [vmem:[#allocation9 + $0x628] sm:$0xff]
        %v4063 = vld [vmem:[#allocation9 + $0x630] sm:$0xff]
        %v4064 = vld [vmem:[#allocation9 + $0x638] sm:$0xff]
        %v4065 = vld [vmem:[#allocation9 + $0x640] sm:$0xff]
        %v4066 = vld [vmem:[#allocation9 + $0x648] sm:$0xff]
        %v4067 = vld [vmem:[#allocation9 + $0x650] sm:$0xff]
        %v4068 = vld [vmem:[#allocation9 + $0x658] sm:$0xff]
        %v4069 = vld [vmem:[#allocation9 + $0x660] sm:$0xff]
        %v4070 = vld [vmem:[#allocation9 + $0x668] sm:$0xff]
        %v4071 = vld [vmem:[#allocation9 + $0x670] sm:$0xff]
        %v4072 = vld [vmem:[#allocation9 + $0x678] sm:$0xff]
        %v4073 = vld [vmem:[#allocation9 + $0x680] sm:$0xff]
        %v4074 = vld [vmem:[#allocation9 + $0x688] sm:$0xff]
        %v4075 = vld [vmem:[#allocation9 + $0x690] sm:$0xff]
        %v4076 = vld [vmem:[#allocation9 + $0x698] sm:$0xff]
        %v4077 = vld [vmem:[#allocation9 + $0x6a0] sm:$0xff]
        %v4078 = vld [vmem:[#allocation9 + $0x6a8] sm:$0xff]
        %v4079 = vld [vmem:[#allocation9 + $0x6b0] sm:$0xff]
        %v4080 = vld [vmem:[#allocation9 + $0x6b8] sm:$0xff]
        %v4081 = vld [vmem:[#allocation9 + $0x6c0] sm:$0xff]
        %v4082 = vld [vmem:[#allocation9 + $0x6c8] sm:$0xff]
        %v4083 = vld [vmem:[#allocation9 + $0x6d0] sm:$0xff]
        %v4084 = vld [vmem:[#allocation9 + $0x6d8] sm:$0xff]
        %v4085 = vld [vmem:[#allocation9 + $0x6e0] sm:$0xff]
        %v4086 = vld [vmem:[#allocation9 + $0x6e8] sm:$0xff]
        %v4087 = vld [vmem:[#allocation9 + $0x6f0] sm:$0xff]
        %v4088 = vld [vmem:[#allocation9 + $0x6f8] sm:$0xff]
        %v4089 = vld [vmem:[#allocation9 + $0x700] sm:$0xff]
        %v4090 = vld [vmem:[#allocation9 + $0x708] sm:$0xff]
        %v4091 = vld [vmem:[#allocation9 + $0x710] sm:$0xff]
        %v4092 = vld [vmem:[#allocation9 + $0x718] sm:$0xff]
        %v4093 = vld [vmem:[#allocation9 + $0x720] sm:$0xff]
        %v4094 = vld [vmem:[#allocation9 + $0x728] sm:$0xff]
        %v4095 = vld [vmem:[#allocation9 + $0x730] sm:$0xff]
        %v4096 = vld [vmem:[#allocation9 + $0x738] sm:$0xff]
        %v4097 = vld [vmem:[#allocation9 + $0x740] sm:$0xff]
        %v4098 = vld [vmem:[#allocation9 + $0x748] sm:$0xff]
        %v4099 = vld [vmem:[#allocation9 + $0x750] sm:$0xff]
        %v4100 = vld [vmem:[#allocation9 + $0x758] sm:$0xff]
        %v4101 = vld [vmem:[#allocation9 + $0x760] sm:$0xff]
        %v4102 = vld [vmem:[#allocation9 + $0x768] sm:$0xff]
        %v4103 = vld [vmem:[#allocation9 + $0x770] sm:$0xff]
        %v4104 = vld [vmem:[#allocation9 + $0x778] sm:$0xff]
        %v4105 = vld [vmem:[#allocation9 + $0x780] sm:$0xff]
        %v4106 = vld [vmem:[#allocation9 + $0x788] sm:$0xff]
        %v4107 = vld [vmem:[#allocation9 + $0x790] sm:$0xff]
        %v4108 = vld [vmem:[#allocation9 + $0x798] sm:$0xff]
        %v4109 = vld [vmem:[#allocation9 + $0x7a0] sm:$0xff]
        %v4110 = vld [vmem:[#allocation9 + $0x7a8] sm:$0xff]
        %v4111 = vld [vmem:[#allocation9 + $0x7b0] sm:$0xff]
        %v4112 = vld [vmem:[#allocation9 + $0x7b8] sm:$0xff]
        %v4113 = vld [vmem:[#allocation9 + $0x7c0] sm:$0xff]
        %v4114 = vld [vmem:[#allocation9 + $0x7c8] sm:$0xff]
        %v4115 = vld [vmem:[#allocation9 + $0x7d0] sm:$0xff]
        %v4116 = vld [vmem:[#allocation9 + $0x7d8] sm:$0xff]
        %v4117 = vld [vmem:[#allocation9 + $0x7e0] sm:$0xff]
        %v4118 = vld [vmem:[#allocation9 + $0x7e8] sm:$0xff]
        %v4119 = vld [vmem:[#allocation9 + $0x7f0] sm:$0xff]
        %v4120 = vld [vmem:[#allocation9 + $0x7f8] sm:$0xff]
        %v4121 = vld [vmem:[#allocation9 + $0x800] sm:$0xff]
        %v4122 = vld [vmem:[#allocation9 + $0x808] sm:$0xff]
        %v4123 = vld [vmem:[#allocation9 + $0x810] sm:$0xff]
        %v4124 = vld [vmem:[#allocation9 + $0x818] sm:$0xff]
        %v4125 = vld [vmem:[#allocation9 + $0x820] sm:$0xff]
        %v4126 = vld [vmem:[#allocation9 + $0x828] sm:$0xff]
        %v4127 = vld [vmem:[#allocation9 + $0x830] sm:$0xff]
        %v4128 = vld [vmem:[#allocation9 + $0x838] sm:$0xff]
        %v4129 = vld [vmem:[#allocation9 + $0x840] sm:$0xff]
        %v4130 = vld [vmem:[#allocation9 + $0x848] sm:$0xff]
        %v4131 = vld [vmem:[#allocation9 + $0x850] sm:$0xff]
        %v4132 = vld [vmem:[#allocation9 + $0x858] sm:$0xff]
        %v4133 = vld [vmem:[#allocation9 + $0x860] sm:$0xff]
        %v4134 = vld [vmem:[#allocation9 + $0x868] sm:$0xff]
        %v4135 = vld [vmem:[#allocation9 + $0x870] sm:$0xff]
        %v4136 = vld [vmem:[#allocation9 + $0x878] sm:$0xff]
        %v4137 = vld [vmem:[#allocation9 + $0x880] sm:$0xff]
        %v4138 = vld [vmem:[#allocation9 + $0x888] sm:$0xff]
        %v4139 = vld [vmem:[#allocation9 + $0x890] sm:$0xff]
        %v4140 = vld [vmem:[#allocation9 + $0x898] sm:$0xff]
        %v4141 = vld [vmem:[#allocation9 + $0x8a0] sm:$0xff]
        %v4142 = vld [vmem:[#allocation9 + $0x8a8] sm:$0xff]
        %v4143 = vld [vmem:[#allocation9 + $0x8b0] sm:$0xff]
        %v4144 = vld [vmem:[#allocation9 + $0x8b8] sm:$0xff]
        %v4145 = vld [vmem:[#allocation9 + $0x8c0] sm:$0xff]
        %v4146 = vld [vmem:[#allocation9 + $0x8c8] sm:$0xff]
        %v4147 = vld [vmem:[#allocation9 + $0x8d0] sm:$0xff]
        %v4148 = vld [vmem:[#allocation9 + $0x8d8] sm:$0xff]
        %v4149 = vld [vmem:[#allocation9 + $0x8e0] sm:$0xff]
        %v4150 = vld [vmem:[#allocation9 + $0x8e8] sm:$0xff]
        %v4151 = vld [vmem:[#allocation9 + $0x8f0] sm:$0xff]
        %v4152 = vld [vmem:[#allocation9 + $0x8f8] sm:$0xff]
        %v4153 = vld [vmem:[#allocation9 + $0x900] sm:$0xff]
        %v4154 = vld [vmem:[#allocation9 + $0x908] sm:$0xff]
        %v4155 = vld [vmem:[#allocation9 + $0x910] sm:$0xff]
        %v4156 = vld [vmem:[#allocation9 + $0x918] sm:$0xff]
        %v4157 = vld [vmem:[#allocation9 + $0x920] sm:$0xff]
        %v4158 = vld [vmem:[#allocation9 + $0x928] sm:$0xff]
        %v4159 = vld [vmem:[#allocation9 + $0x930] sm:$0xff]
        %v4160 = vld [vmem:[#allocation9 + $0x938] sm:$0xff]
        %v4161 = vld [vmem:[#allocation9 + $0x940] sm:$0xff]
        %v4162 = vld [vmem:[#allocation9 + $0x948] sm:$0xff]
        %v4163 = vld [vmem:[#allocation9 + $0x950] sm:$0xff]
        %v4164 = vld [vmem:[#allocation9 + $0x958] sm:$0xff]
        %v4165 = vld [vmem:[#allocation9 + $0x960] sm:$0xff]
        %v4166 = vld [vmem:[#allocation9 + $0x968] sm:$0xff]
        %v4167 = vld [vmem:[#allocation9 + $0x970] sm:$0xff]
        %v4168 = vld [vmem:[#allocation9 + $0x978] sm:$0xff]
        %v4169 = vld [vmem:[#allocation9 + $0x980] sm:$0xff]
        %v4170 = vld [vmem:[#allocation9 + $0x988] sm:$0xff]
        %v4171 = vld [vmem:[#allocation9 + $0x990] sm:$0xff]
        %v4172 = vld [vmem:[#allocation9 + $0x998] sm:$0xff]
        %v4173 = vld [vmem:[#allocation9 + $0x9a0] sm:$0xff]
        %v4174 = vld [vmem:[#allocation9 + $0x9a8] sm:$0xff]
        %v4175 = vld [vmem:[#allocation9 + $0x9b0] sm:$0xff]
        %v4176 = vld [vmem:[#allocation9 + $0x9b8] sm:$0xff]
        %v4177 = vld [vmem:[#allocation9 + $0x9c0] sm:$0xff]
        %v4178 = vld [vmem:[#allocation9 + $0x9c8] sm:$0xff]
        %v4179 = vld [vmem:[#allocation9 + $0x9d0] sm:$0xff]
        %v4180 = vld [vmem:[#allocation9 + $0x9d8] sm:$0xff]
        %v4181 = vld [vmem:[#allocation9 + $0x9e0] sm:$0xff]
        %v4182 = vld [vmem:[#allocation9 + $0x9e8] sm:$0xff]
        %v4183 = vld [vmem:[#allocation9 + $0x9f0] sm:$0xff]
        %v4184 = vld [vmem:[#allocation9 + $0x9f8] sm:$0xff]
        %v4185 = vld [vmem:[#allocation9 + $0xa00] sm:$0xff]
        %v4186 = vld [vmem:[#allocation9 + $0xa08] sm:$0xff]
        %v4187 = vld [vmem:[#allocation9 + $0xa10] sm:$0xff]
        %v4188 = vld [vmem:[#allocation9 + $0xa18] sm:$0xff]
        %v4189 = vld [vmem:[#allocation9 + $0xa20] sm:$0xff]
        %v4190 = vld [vmem:[#allocation9 + $0xa28] sm:$0xff]
        %v4191 = vld [vmem:[#allocation9 + $0xa30] sm:$0xff]
        %v4192 = vld [vmem:[#allocation9 + $0xa38] sm:$0xff]
        %v4193 = vld [vmem:[#allocation9 + $0xa40] sm:$0xff]
        %v4194 = vld [vmem:[#allocation9 + $0xa48] sm:$0xff]
        %v4195 = vld [vmem:[#allocation9 + $0xa50] sm:$0xff]
        %v4196 = vld [vmem:[#allocation9 + $0xa58] sm:$0xff]
        %v4197 = vld [vmem:[#allocation9 + $0xa60] sm:$0xff]
        %v4198 = vld [vmem:[#allocation9 + $0xa68] sm:$0xff]
        %v4199 = vld [vmem:[#allocation9 + $0xa70] sm:$0xff]
        %v4200 = vld [vmem:[#allocation9 + $0xa78] sm:$0xff]
        %v4201 = vld [vmem:[#allocation9 + $0xa80] sm:$0xff]
        %v4202 = vld [vmem:[#allocation9 + $0xa88] sm:$0xff]
        %v4203 = vld [vmem:[#allocation9 + $0xa90] sm:$0xff]
        %v4204 = vld [vmem:[#allocation9 + $0xa98] sm:$0xff]
        %v4205 = vld [vmem:[#allocation9 + $0xaa0] sm:$0xff]
        %v4206 = vld [vmem:[#allocation9 + $0xaa8] sm:$0xff]
        %v4207 = vld [vmem:[#allocation9 + $0xab0] sm:$0xff]
        %v4208 = vld [vmem:[#allocation9 + $0xab8] sm:$0xff]
        %v4209 = vld [vmem:[#allocation9 + $0xac0] sm:$0xff]
        %v4210 = vld [vmem:[#allocation9 + $0xac8] sm:$0xff]
        %v4211 = vld [vmem:[#allocation9 + $0xad0] sm:$0xff]
        %v4212 = vld [vmem:[#allocation9 + $0xad8] sm:$0xff]
        %v4213 = vld [vmem:[#allocation9 + $0xae0] sm:$0xff]
        %v4214 = vld [vmem:[#allocation9 + $0xae8] sm:$0xff]
        %v4215 = vld [vmem:[#allocation9 + $0xaf0] sm:$0xff]
        %v4216 = vld [vmem:[#allocation9 + $0xaf8] sm:$0xff]
        %v4217 = vld [vmem:[#allocation9 + $0xb00] sm:$0xff]
        %v4218 = vld [vmem:[#allocation9 + $0xb08] sm:$0xff]
        %v4219 = vld [vmem:[#allocation9 + $0xb10] sm:$0xff]
        %v4220 = vld [vmem:[#allocation9 + $0xb18] sm:$0xff]
        %v4221 = vld [vmem:[#allocation9 + $0xb20] sm:$0xff]
        %v4222 = vld [vmem:[#allocation9 + $0xb28] sm:$0xff]
        %v4223 = vld [vmem:[#allocation9 + $0xb30] sm:$0xff]
        %v4224 = vld [vmem:[#allocation9 + $0xb38] sm:$0xff]
        %v4225 = vld [vmem:[#allocation9 + $0xb40] sm:$0xff]
        %v4226 = vld [vmem:[#allocation9 + $0xb48] sm:$0xff]
        %v4227 = vld [vmem:[#allocation9 + $0xb50] sm:$0xff]
        %v4228 = vld [vmem:[#allocation9 + $0xb58] sm:$0xff]
        %v4229 = vld [vmem:[#allocation9 + $0xb60] sm:$0xff]
        %v4230 = vld [vmem:[#allocation9 + $0xb68] sm:$0xff]
        %v4231 = vld [vmem:[#allocation9 + $0xb70] sm:$0xff]
        %v4232 = vld [vmem:[#allocation9 + $0xb78] sm:$0xff]
        %v4233 = vld [vmem:[#allocation9 + $0xb80] sm:$0xff]
        %v4234 = vld [vmem:[#allocation9 + $0xb88] sm:$0xff]
        %v4235 = vld [vmem:[#allocation9 + $0xb90] sm:$0xff]
        %v4236 = vld [vmem:[#allocation9 + $0xb98] sm:$0xff]
        %v4237 = vld [vmem:[#allocation9 + $0xba0] sm:$0xff]
        %v4238 = vld [vmem:[#allocation9 + $0xba8] sm:$0xff]
        %v4239 = vld [vmem:[#allocation9 + $0xbb0] sm:$0xff]
        %v4240 = vld [vmem:[#allocation9 + $0xbb8] sm:$0xff]
        %v4241 = vld [vmem:[#allocation9 + $0xbc0] sm:$0xff]
        %v4242 = vld [vmem:[#allocation9 + $0xbc8] sm:$0xff]
        %v4243 = vld [vmem:[#allocation9 + $0xbd0] sm:$0xff]
        %v4244 = vld [vmem:[#allocation9 + $0xbd8] sm:$0xff]
        %v4245 = vld [vmem:[#allocation9 + $0xbe0] sm:$0xff]
        %v4246 = vld [vmem:[#allocation9 + $0xbe8] sm:$0xff]
        %v4247 = vld [vmem:[#allocation9 + $0xbf0] sm:$0xff]
        %v4248 = vld [vmem:[#allocation9 + $0xbf8] sm:$0xff]
        %v4249 = vld [vmem:[#allocation9 + $0xc00] sm:$0xff]
        %v4250 = vld [vmem:[#allocation9 + $0xc08] sm:$0xff]
        %v4251 = vld [vmem:[#allocation9 + $0xc10] sm:$0xff]
        %v4252 = vld [vmem:[#allocation9 + $0xc18] sm:$0xff]
        %v4253 = vld [vmem:[#allocation9 + $0xc20] sm:$0xff]
        %v4254 = vld [vmem:[#allocation9 + $0xc28] sm:$0xff]
        %v4255 = vld [vmem:[#allocation9 + $0xc30] sm:$0xff]
        %v4256 = vld [vmem:[#allocation9 + $0xc38] sm:$0xff]
        %v4257 = vld [vmem:[#allocation9 + $0xc40] sm:$0xff]
        %v4258 = vld [vmem:[#allocation9 + $0xc48] sm:$0xff]
        %v4259 = vld [vmem:[#allocation9 + $0xc50] sm:$0xff]
        %v4260 = vld [vmem:[#allocation9 + $0xc58] sm:$0xff]
        %v4261 = vld [vmem:[#allocation9 + $0xc60] sm:$0xff]
        %v4262 = vld [vmem:[#allocation9 + $0xc68] sm:$0xff]
        %v4263 = vld [vmem:[#allocation9 + $0xc70] sm:$0xff]
        %v4264 = vld [vmem:[#allocation9 + $0xc78] sm:$0xff]
        %v4265 = vld [vmem:[#allocation9 + $0xc80] sm:$0xff]
        %v4266 = vld [vmem:[#allocation9 + $0xc88] sm:$0xff]
        %v4267 = vld [vmem:[#allocation9 + $0xc90] sm:$0xff]
        %v4268 = vld [vmem:[#allocation9 + $0xc98] sm:$0xff]
        %v4269 = vld [vmem:[#allocation9 + $0xca0] sm:$0xff]
        %v4270 = vld [vmem:[#allocation9 + $0xca8] sm:$0xff]
        %v4271 = vld [vmem:[#allocation9 + $0xcb0] sm:$0xff]
        %v4272 = vld [vmem:[#allocation9 + $0xcb8] sm:$0xff]
        %v4273 = vld [vmem:[#allocation9 + $0xcc0] sm:$0xff]
        %v4274 = vld [vmem:[#allocation9 + $0xcc8] sm:$0xff]
        %v4275 = vld [vmem:[#allocation9 + $0xcd0] sm:$0xff]
        %v4276 = vld [vmem:[#allocation9 + $0xcd8] sm:$0xff]
        %v4277 = vld [vmem:[#allocation9 + $0xce0] sm:$0xff]
        %v4278 = vld [vmem:[#allocation9 + $0xce8] sm:$0xff]
        %v4279 = vld [vmem:[#allocation9 + $0xcf0] sm:$0xff]
        %v4280 = vld [vmem:[#allocation9 + $0xcf8] sm:$0xff]
        %v4281 = vld [vmem:[#allocation9 + $0xd00] sm:$0xff]
        %v4282 = vld [vmem:[#allocation9 + $0xd08] sm:$0xff]
        %v4283 = vld [vmem:[#allocation9 + $0xd10] sm:$0xff]
        %v4284 = vld [vmem:[#allocation9 + $0xd18] sm:$0xff]
        %v4285 = vld [vmem:[#allocation9 + $0xd20] sm:$0xff]
        %v4286 = vld [vmem:[#allocation9 + $0xd28] sm:$0xff]
        %v4287 = vld [vmem:[#allocation9 + $0xd30] sm:$0xff]
        %v4288 = vld [vmem:[#allocation9 + $0xd38] sm:$0xff]
        %v4289 = vld [vmem:[#allocation9 + $0xd40] sm:$0xff]
        %v4290 = vld [vmem:[#allocation9 + $0xd48] sm:$0xff]
        %v4291 = vld [vmem:[#allocation9 + $0xd50] sm:$0xff]
        %v4292 = vld [vmem:[#allocation9 + $0xd58] sm:$0xff]
        %v4293 = vld [vmem:[#allocation9 + $0xd60] sm:$0xff]
        %v4294 = vld [vmem:[#allocation9 + $0xd68] sm:$0xff]
        %v4295 = vld [vmem:[#allocation9 + $0xd70] sm:$0xff]
        %v4296 = vld [vmem:[#allocation9 + $0xd78] sm:$0xff]
        %v4297 = vld [vmem:[#allocation9 + $0xd80] sm:$0xff]
        %v4298 = vld [vmem:[#allocation9 + $0xd88] sm:$0xff]
        %v4299 = vld [vmem:[#allocation9 + $0xd90] sm:$0xff]
        %v4300 = vld [vmem:[#allocation9 + $0xd98] sm:$0xff]
        %v4301 = vld [vmem:[#allocation9 + $0xda0] sm:$0xff]
        %v4302 = vld [vmem:[#allocation9 + $0xda8] sm:$0xff]
        %v4303 = vld [vmem:[#allocation9 + $0xdb0] sm:$0xff]
        %v4304 = vld [vmem:[#allocation9 + $0xdb8] sm:$0xff]
        %v4305 = vld [vmem:[#allocation9 + $0xdc0] sm:$0xff]
        %v4306 = vld [vmem:[#allocation9 + $0xdc8] sm:$0xff]
        %v4307 = vld [vmem:[#allocation9 + $0xdd0] sm:$0xff]
        %v4308 = vld [vmem:[#allocation9 + $0xdd8] sm:$0xff]
        %v4309 = vld [vmem:[#allocation9 + $0xde0] sm:$0xff]
        %v4310 = vld [vmem:[#allocation9 + $0xde8] sm:$0xff]
        %v4311 = vld [vmem:[#allocation9 + $0xdf0] sm:$0xff]
        %v4312 = vld [vmem:[#allocation9 + $0xdf8] sm:$0xff]
        %v4313 = vld [vmem:[#allocation9 + $0xe00] sm:$0xff]
        %v4314 = vld [vmem:[#allocation9 + $0xe08] sm:$0xff]
        %v4315 = vld [vmem:[#allocation9 + $0xe10] sm:$0xff]
        %v4316 = vld [vmem:[#allocation9 + $0xe18] sm:$0xff]
        %v4317 = vld [vmem:[#allocation9 + $0xe20] sm:$0xff]
        %v4318 = vld [vmem:[#allocation9 + $0xe28] sm:$0xff]
        %v4319 = vld [vmem:[#allocation9 + $0xe30] sm:$0xff]
        %v4320 = vld [vmem:[#allocation9 + $0xe38] sm:$0xff]
        %v4321 = vld [vmem:[#allocation9 + $0xe40] sm:$0xff]
        %v4322 = vld [vmem:[#allocation9 + $0xe48] sm:$0xff]
        %v4323 = vld [vmem:[#allocation9 + $0xe50] sm:$0xff]
        %v4324 = vld [vmem:[#allocation9 + $0xe58] sm:$0xff]
        %v4325 = vld [vmem:[#allocation9 + $0xe60] sm:$0xff]
        %v4326 = vld [vmem:[#allocation9 + $0xe68] sm:$0xff]
        %v4327 = vld [vmem:[#allocation9 + $0xe70] sm:$0xff]
        %v4328 = vld [vmem:[#allocation9 + $0xe78] sm:$0xff]
        %v4329 = vld [vmem:[#allocation9 + $0xe80] sm:$0xff]
        %v4330 = vld [vmem:[#allocation9 + $0xe88] sm:$0xff]
        %v4331 = vld [vmem:[#allocation9 + $0xe90] sm:$0xff]
        %v4332 = vld [vmem:[#allocation9 + $0xe98] sm:$0xff]
        %v4333 = vld [vmem:[#allocation9 + $0xea0] sm:$0xff]
        %v4334 = vld [vmem:[#allocation9 + $0xea8] sm:$0xff]
        %v4335 = vld [vmem:[#allocation9 + $0xeb0] sm:$0xff]
        %v4336 = vld [vmem:[#allocation9 + $0xeb8] sm:$0xff]
        %v4337 = vld [vmem:[#allocation9 + $0xec0] sm:$0xff]
        %v4338 = vld [vmem:[#allocation9 + $0xec8] sm:$0xff]
        %v4339 = vld [vmem:[#allocation9 + $0xed0] sm:$0xff]
        %v4340 = vld [vmem:[#allocation9 + $0xed8] sm:$0xff]
        %v4341 = vld [vmem:[#allocation9 + $0xee0] sm:$0xff]
        %v4342 = vld [vmem:[#allocation9 + $0xee8] sm:$0xff]
        %v4343 = vld [vmem:[#allocation9 + $0xef0] sm:$0xff]
        %v4344 = vld [vmem:[#allocation9 + $0xef8] sm:$0xff]
        %v4345 = vld [vmem:[#allocation9 + $0xf00] sm:$0xff]
        %v4346 = vld [vmem:[#allocation9 + $0xf08] sm:$0xff]
        %v4347 = vld [vmem:[#allocation9 + $0xf10] sm:$0xff]
        %v4348 = vld [vmem:[#allocation9 + $0xf18] sm:$0xff]
        %v4349 = vld [vmem:[#allocation9 + $0xf20] sm:$0xff]
        %v4350 = vld [vmem:[#allocation9 + $0xf28] sm:$0xff]
        %v4351 = vld [vmem:[#allocation9 + $0xf30] sm:$0xff]
        %v4352 = vld [vmem:[#allocation9 + $0xf38] sm:$0xff]
        %v4353 = vld [vmem:[#allocation9 + $0xf40] sm:$0xff]
        %v4354 = vld [vmem:[#allocation9 + $0xf48] sm:$0xff]
        %v4355 = vld [vmem:[#allocation9 + $0xf50] sm:$0xff]
        %v4356 = vld [vmem:[#allocation9 + $0xf58] sm:$0xff]
        %v4357 = vld [vmem:[#allocation9 + $0xf60] sm:$0xff]
        %v4358 = vld [vmem:[#allocation9 + $0xf68] sm:$0xff]
        %v4359 = vld [vmem:[#allocation9 + $0xf70] sm:$0xff]
        %v4360 = vld [vmem:[#allocation9 + $0xf78] sm:$0xff]
        %v4361 = vld [vmem:[#allocation9 + $0xf80] sm:$0xff]
        %v4362 = vld [vmem:[#allocation9 + $0xf88] sm:$0xff]
        %v4363 = vld [vmem:[#allocation9 + $0xf90] sm:$0xff]
        %v4364 = vld [vmem:[#allocation9 + $0xf98] sm:$0xff]
        %v4365 = vld [vmem:[#allocation9 + $0xfa0] sm:$0xff]
        %v4366 = vld [vmem:[#allocation9 + $0xfa8] sm:$0xff]
        %v4367 = vld [vmem:[#allocation9 + $0xfb0] sm:$0xff]
        %v4368 = vld [vmem:[#allocation9 + $0xfb8] sm:$0xff]
        %v4369 = vld [vmem:[#allocation9 + $0xfc0] sm:$0xff]
        %v4370 = vld [vmem:[#allocation9 + $0xfc8] sm:$0xff]
        %v4371 = vld [vmem:[#allocation9 + $0xfd0] sm:$0xff]
        %v4372 = vld [vmem:[#allocation9 + $0xfd8] sm:$0xff]
        %v4373 = vld [vmem:[#allocation9 + $0xfe0] sm:$0xff]
        %v4374 = vld [vmem:[#allocation9 + $0xfe8] sm:$0xff]
        %v4375 = vld [vmem:[#allocation9 + $0xff0] sm:$0xff]
        %v4376 = vld [vmem:[#allocation9 + $0xff8] sm:$0xff]
        %v4377 = vld [vmem:[#allocation11] sm:$0x1]
        %v4382 = vlaneseq
        %v4383 = vshrl.u32 %v4382, 7
        %v4384 = vsub.s32 0, %v4383
        %v4385 = vrot.slane %v3861, %v4384
        %v4386 = vlaneseq
        %v4387 = vshrl.u32 %v4386, 7
        %v4388 = vsub.s32 1, %v4387
        %v4389 = vrot.slane %v3861, %v4388
        %v4390 = vlaneseq
        %v4391 = vshrl.u32 %v4390, 7
        %v4392 = vsub.s32 2, %v4391
        %v4393 = vrot.slane %v3861, %v4392
        %v4394 = vlaneseq
        %v4395 = vshrl.u32 %v4394, 7
        %v4396 = vsub.s32 3, %v4395
        %v4397 = vrot.slane %v3861, %v4396
        %v4398 = vlaneseq
        %v4399 = vshrl.u32 %v4398, 7
        %v4400 = vsub.s32 4, %v4399
        %v4401 = vrot.slane %v3861, %v4400
        %v4402 = vlaneseq
        %v4403 = vshrl.u32 %v4402, 7
        %v4404 = vsub.s32 5, %v4403
        %v4405 = vrot.slane %v3861, %v4404
        %v4406 = vlaneseq
        %v4407 = vshrl.u32 %v4406, 7
        %v4408 = vsub.s32 6, %v4407
        %v4409 = vrot.slane %v3861, %v4408
        %v4410 = vlaneseq
        %v4411 = vshrl.u32 %v4410, 7
        %v4412 = vsub.s32 7, %v4411
        %v4413 = vrot.slane %v3861, %v4412
        %v4414 = vlaneseq
        %v4415 = vshrl.u32 %v4414, 7
        %v4416 = vsub.s32 0, %v4415
        %v4417 = vrot.slane %v3862, %v4416
        %v4418 = vlaneseq
        %v4419 = vshrl.u32 %v4418, 7
        %v4420 = vsub.s32 1, %v4419
        %v4421 = vrot.slane %v3862, %v4420
        %v4422 = vlaneseq
        %v4423 = vshrl.u32 %v4422, 7
        %v4424 = vsub.s32 2, %v4423
        %v4425 = vrot.slane %v3862, %v4424
        %v4426 = vlaneseq
        %v4427 = vshrl.u32 %v4426, 7
        %v4428 = vsub.s32 3, %v4427
        %v4429 = vrot.slane %v3862, %v4428
        %v4430 = vlaneseq
        %v4431 = vshrl.u32 %v4430, 7
        %v4432 = vsub.s32 4, %v4431
        %v4433 = vrot.slane %v3862, %v4432
        %v4434 = vlaneseq
        %v4435 = vshrl.u32 %v4434, 7
        %v4436 = vsub.s32 5, %v4435
        %v4437 = vrot.slane %v3862, %v4436
        %v4438 = vlaneseq
        %v4439 = vshrl.u32 %v4438, 7
        %v4440 = vsub.s32 6, %v4439
        %v4441 = vrot.slane %v3862, %v4440
        %v4442 = vlaneseq
        %v4443 = vshrl.u32 %v4442, 7
        %v4444 = vsub.s32 7, %v4443
        %v4445 = vrot.slane %v3862, %v4444
        %v4446 = vlaneseq
        %v4447 = vshrl.u32 %v4446, 7
        %v4448 = vsub.s32 0, %v4447
        %v4449 = vrot.slane %v3863, %v4448
        %v4450 = vlaneseq
        %v4451 = vshrl.u32 %v4450, 7
        %v4452 = vsub.s32 1, %v4451
        %v4453 = vrot.slane %v3863, %v4452
        %v4454 = vlaneseq
        %v4455 = vshrl.u32 %v4454, 7
        %v4456 = vsub.s32 2, %v4455
        %v4457 = vrot.slane %v3863, %v4456
        %v4458 = vlaneseq
        %v4459 = vshrl.u32 %v4458, 7
        %v4460 = vsub.s32 3, %v4459
        %v4461 = vrot.slane %v3863, %v4460
        %v4462 = vlaneseq
        %v4463 = vshrl.u32 %v4462, 7
        %v4464 = vsub.s32 4, %v4463
        %v4465 = vrot.slane %v3863, %v4464
        %v4466 = vlaneseq
        %v4467 = vshrl.u32 %v4466, 7
        %v4468 = vsub.s32 5, %v4467
        %v4469 = vrot.slane %v3863, %v4468
        %v4470 = vlaneseq
        %v4471 = vshrl.u32 %v4470, 7
        %v4472 = vsub.s32 6, %v4471
        %v4473 = vrot.slane %v3863, %v4472
        %v4474 = vlaneseq
        %v4475 = vshrl.u32 %v4474, 7
        %v4476 = vsub.s32 7, %v4475
        %v4477 = vrot.slane %v3863, %v4476
        %v4478 = vlaneseq
        %v4479 = vshrl.u32 %v4478, 7
        %v4480 = vsub.s32 0, %v4479
        %v4481 = vrot.slane %v3864, %v4480
        %v4482 = vlaneseq
        %v4483 = vshrl.u32 %v4482, 7
        %v4484 = vsub.s32 1, %v4483
        %v4485 = vrot.slane %v3864, %v4484
        %v4486 = vlaneseq
        %v4487 = vshrl.u32 %v4486, 7
        %v4488 = vsub.s32 2, %v4487
        %v4489 = vrot.slane %v3864, %v4488
        %v4490 = vlaneseq
        %v4491 = vshrl.u32 %v4490, 7
        %v4492 = vsub.s32 3, %v4491
        %v4493 = vrot.slane %v3864, %v4492
        %v4494 = vlaneseq
        %v4495 = vshrl.u32 %v4494, 7
        %v4496 = vsub.s32 4, %v4495
        %v4497 = vrot.slane %v3864, %v4496
        %v4498 = vlaneseq
        %v4499 = vshrl.u32 %v4498, 7
        %v4500 = vsub.s32 5, %v4499
        %v4501 = vrot.slane %v3864, %v4500
        %v4502 = vlaneseq
        %v4503 = vshrl.u32 %v4502, 7
        %v4504 = vsub.s32 6, %v4503
        %v4505 = vrot.slane %v3864, %v4504
        %v4506 = vlaneseq
        %v4507 = vshrl.u32 %v4506, 7
        %v4508 = vsub.s32 7, %v4507
        %v4509 = vrot.slane %v3864, %v4508
        %4542 = vmatprep.subr.mxu0 0.0
        %4543 = vmatpush1.msra.mxu0 %v3865
        %4544 = vmatprep.subr.mxu0 0.0
        %4545 = vmatpush1.msra.mxu0 %v3866
        %4546 = vmatprep.subr.mxu0 0.0
        %4547 = vmatpush1.msra.mxu0 %v3867
        %4548 = vmatprep.subr.mxu0 0.0
        %4549 = vmatpush1.msra.mxu0 %v3868
        %4550 = vmatprep.subr.mxu0 0.0
        %4551 = vmatpush1.msra.mxu0 %v3869
        %4552 = vmatprep.subr.mxu0 0.0
        %4553 = vmatpush1.msra.mxu0 %v3870
        %4554 = vmatprep.subr.mxu0 0.0
        %4555 = vmatpush1.msra.mxu0 %v3871
        %4556 = vmatprep.subr.mxu0 0.0
        %4557 = vmatpush1.msra.mxu0 %v3872
        %4558 = vmatprep.subr.mxu0 0.0
        %4559 = vmatpush1.msra.mxu0 %v3873
        %4560 = vmatprep.subr.mxu0 0.0
        %4561 = vmatpush1.msra.mxu0 %v3874
        %4562 = vmatprep.subr.mxu0 0.0
        %4563 = vmatpush1.msra.mxu0 %v3875
        %4564 = vmatprep.subr.mxu0 0.0
        %4565 = vmatpush1.msra.mxu0 %v3876
        %4566 = vmatprep.subr.mxu0 0.0
        %4567 = vmatpush1.msra.mxu0 %v3877
        %4568 = vmatprep.subr.mxu0 0.0
        %4569 = vmatpush1.msra.mxu0 %v3878
        %4570 = vmatprep.subr.mxu0 0.0
        %4571 = vmatpush1.msra.mxu0 %v3879
        %4572 = vmatprep.subr.mxu0 0.0
        %4573 = vmatpush1.msra.mxu0 %v3880
        %4574 = vmatprep.subr.mxu0 0.0
        %4575 = vmatpush1.msra.mxu0 %v3881
        %4576 = vmatprep.subr.mxu0 0.0
        %4577 = vmatpush1.msra.mxu0 %v3882
        %4578 = vmatprep.subr.mxu0 0.0
        %4579 = vmatpush1.msra.mxu0 %v3883
        %4580 = vmatprep.subr.mxu0 0.0
        %4581 = vmatpush1.msra.mxu0 %v3884
        %4582 = vmatprep.subr.mxu0 0.0
        %4583 = vmatpush1.msra.mxu0 %v3885
        %4584 = vmatprep.subr.mxu0 0.0
        %4585 = vmatpush1.msra.mxu0 %v3886
        %4586 = vmatprep.subr.mxu0 0.0
        %4587 = vmatpush1.msra.mxu0 %v3887
        %4588 = vmatprep.subr.mxu0 0.0
        %4589 = vmatpush1.msra.mxu0 %v3888
        %4590 = vmatprep.subr.mxu0 0.0
        %4591 = vmatpush1.msra.mxu0 %v3889
        %4592 = vmatprep.subr.mxu0 0.0
        %4593 = vmatpush1.msra.mxu0 %v3890
        %4594 = vmatprep.subr.mxu0 0.0
        %4595 = vmatpush1.msra.mxu0 %v3891
        %4596 = vmatprep.subr.mxu0 0.0
        %4597 = vmatpush1.msra.mxu0 %v3892
        %4598 = vmatprep.subr.mxu0 0.0
        %4599 = vmatpush1.msra.mxu0 %v3893
        %4600 = vmatprep.subr.mxu0 0.0
        %4601 = vmatpush1.msra.mxu0 %v3894
        %4602 = vmatprep.subr.mxu0 0.0
        %4603 = vmatpush1.msra.mxu0 %v3895
        %4604 = vmatprep.subr.mxu0 0.0
        %4605 = vmatpush1.msra.mxu0 %v3896
        %4606 = vmatprep.mubr.f32.mxu0 %v4389
        %4607 = vmatmul.mubr.f32.gmra.mrb[0].mxu0 %v4385
        %v4608 = vpop.f32.mrb[0].mxu0
        %v4609 = vadd.f32 %v4377, %v4608
        %v4610 = vpop.f32.mrb[0].mxu0
        %4611 = vdwg.mxu0
        %4612 = vmatprep.subr.mxu0 0.0
        %4613 = vmatpush1.msra.mxu0 %v3897
        %4614 = vmatprep.subr.mxu0 0.0
        %4615 = vmatpush1.msra.mxu0 %v3898
        %4616 = vmatprep.subr.mxu0 0.0
        %4617 = vmatpush1.msra.mxu0 %v3899
        %4618 = vmatprep.subr.mxu0 0.0
        %4619 = vmatpush1.msra.mxu0 %v3900
        %4620 = vmatprep.subr.mxu0 0.0
        %4621 = vmatpush1.msra.mxu0 %v3901
        %4622 = vmatprep.subr.mxu0 0.0
        %4623 = vmatpush1.msra.mxu0 %v3902
        %4624 = vmatprep.subr.mxu0 0.0
        %4625 = vmatpush1.msra.mxu0 %v3903
        %4626 = vmatprep.subr.mxu0 0.0
        %4627 = vmatpush1.msra.mxu0 %v3904
        %4628 = vmatprep.subr.mxu0 0.0
        %4629 = vmatpush1.msra.mxu0 %v3905
        %4630 = vmatprep.subr.mxu0 0.0
        %4631 = vmatpush1.msra.mxu0 %v3906
        %4632 = vmatprep.subr.mxu0 0.0
        %4633 = vmatpush1.msra.mxu0 %v3907
        %4634 = vmatprep.subr.mxu0 0.0
        %4635 = vmatpush1.msra.mxu0 %v3908
        %4636 = vmatprep.subr.mxu0 0.0
        %4637 = vmatpush1.msra.mxu0 %v3909
        %4638 = vmatprep.subr.mxu0 0.0
        %4639 = vmatpush1.msra.mxu0 %v3910
        %4640 = vmatprep.subr.mxu0 0.0
        %4641 = vmatpush1.msra.mxu0 %v3911
        %4642 = vmatprep.subr.mxu0 0.0
        %4643 = vmatpush1.msra.mxu0 %v3912
        %4644 = vmatprep.subr.mxu0 0.0
        %4645 = vmatpush1.msra.mxu0 %v3913
        %4646 = vmatprep.subr.mxu0 0.0
        %4647 = vmatpush1.msra.mxu0 %v3914
        %4648 = vmatprep.subr.mxu0 0.0
        %4649 = vmatpush1.msra.mxu0 %v3915
        %4650 = vmatprep.subr.mxu0 0.0
        %4651 = vmatpush1.msra.mxu0 %v3916
        %4652 = vmatprep.subr.mxu0 0.0
        %4653 = vmatpush1.msra.mxu0 %v3917
        %4654 = vmatprep.subr.mxu0 0.0
        %4655 = vmatpush1.msra.mxu0 %v3918
        %4656 = vmatprep.subr.mxu0 0.0
        %4657 = vmatpush1.msra.mxu0 %v3919
        %4658 = vmatprep.subr.mxu0 0.0
        %4659 = vmatpush1.msra.mxu0 %v3920
        %4660 = vmatprep.subr.mxu0 0.0
        %4661 = vmatpush1.msra.mxu0 %v3921
        %4662 = vmatprep.subr.mxu0 0.0
        %4663 = vmatpush1.msra.mxu0 %v3922
        %4664 = vmatprep.subr.mxu0 0.0
        %4665 = vmatpush1.msra.mxu0 %v3923
        %4666 = vmatprep.subr.mxu0 0.0
        %4667 = vmatpush1.msra.mxu0 %v3924
        %4668 = vmatprep.subr.mxu0 0.0
        %4669 = vmatpush1.msra.mxu0 %v3925
        %4670 = vmatprep.subr.mxu0 0.0
        %4671 = vmatpush1.msra.mxu0 %v3926
        %4672 = vmatprep.subr.mxu0 0.0
        %4673 = vmatpush1.msra.mxu0 %v3927
        %4674 = vmatprep.subr.mxu0 0.0
        %4675 = vmatpush1.msra.mxu0 %v3928
        %4676 = vmatprep.mubr.f32.mxu0 %v4397
        %4677 = vmatmul.mubr.f32.gmra.mrb[0].mxu0 %v4393
        %v4678 = vpop.f32.mrb[0].mxu0
        %v4679 = vadd.f32 %v4609, %v4678
        %v4680 = vpop.f32.mrb[0].mxu0
        %4681 = vdwg.mxu0
        %4682 = vmatprep.subr.mxu0 0.0
        %4683 = vmatpush1.msra.mxu0 %v3929
        %4684 = vmatprep.subr.mxu0 0.0
        %4685 = vmatpush1.msra.mxu0 %v3930
        %4686 = vmatprep.subr.mxu0 0.0
        %4687 = vmatpush1.msra.mxu0 %v3931
        %4688 = vmatprep.subr.mxu0 0.0
        %4689 = vmatpush1.msra.mxu0 %v3932
        %4690 = vmatprep.subr.mxu0 0.0
        %4691 = vmatpush1.msra.mxu0 %v3933
        %4692 = vmatprep.subr.mxu0 0.0
        %4693 = vmatpush1.msra.mxu0 %v3934
        %4694 = vmatprep.subr.mxu0 0.0
        %4695 = vmatpush1.msra.mxu0 %v3935
        %4696 = vmatprep.subr.mxu0 0.0
        %4697 = vmatpush1.msra.mxu0 %v3936
        %4698 = vmatprep.subr.mxu0 0.0
        %4699 = vmatpush1.msra.mxu0 %v3937
        %4700 = vmatprep.subr.mxu0 0.0
        %4701 = vmatpush1.msra.mxu0 %v3938
        %4702 = vmatprep.subr.mxu0 0.0
        %4703 = vmatpush1.msra.mxu0 %v3939
        %4704 = vmatprep.subr.mxu0 0.0
        %4705 = vmatpush1.msra.mxu0 %v3940
        %4706 = vmatprep.subr.mxu0 0.0
        %4707 = vmatpush1.msra.mxu0 %v3941
        %4708 = vmatprep.subr.mxu0 0.0
        %4709 = vmatpush1.msra.mxu0 %v3942
        %4710 = vmatprep.subr.mxu0 0.0
        %4711 = vmatpush1.msra.mxu0 %v3943
        %4712 = vmatprep.subr.mxu0 0.0
        %4713 = vmatpush1.msra.mxu0 %v3944
        %4714 = vmatprep.subr.mxu0 0.0
        %4715 = vmatpush1.msra.mxu0 %v3945
        %4716 = vmatprep.subr.mxu0 0.0
        %4717 = vmatpush1.msra.mxu0 %v3946
        %4718 = vmatprep.subr.mxu0 0.0
        %4719 = vmatpush1.msra.mxu0 %v3947
        %4720 = vmatprep.subr.mxu0 0.0
        %4721 = vmatpush1.msra.mxu0 %v3948
        %4722 = vmatprep.subr.mxu0 0.0
        %4723 = vmatpush1.msra.mxu0 %v3949
        %4724 = vmatprep.subr.mxu0 0.0
        %4725 = vmatpush1.msra.mxu0 %v3950
        %4726 = vmatprep.subr.mxu0 0.0
        %4727 = vmatpush1.msra.mxu0 %v3951
        %4728 = vmatprep.subr.mxu0 0.0
        %4729 = vmatpush1.msra.mxu0 %v3952
        %4730 = vmatprep.subr.mxu0 0.0
        %4731 = vmatpush1.msra.mxu0 %v3953
        %4732 = vmatprep.subr.mxu0 0.0
        %4733 = vmatpush1.msra.mxu0 %v3954
        %4734 = vmatprep.subr.mxu0 0.0
        %4735 = vmatpush1.msra.mxu0 %v3955
        %4736 = vmatprep.subr.mxu0 0.0
        %4737 = vmatpush1.msra.mxu0 %v3956
        %4738 = vmatprep.subr.mxu0 0.0
        %4739 = vmatpush1.msra.mxu0 %v3957
        %4740 = vmatprep.subr.mxu0 0.0
        %4741 = vmatpush1.msra.mxu0 %v3958
        %4742 = vmatprep.subr.mxu0 0.0
        %4743 = vmatpush1.msra.mxu0 %v3959
        %4744 = vmatprep.subr.mxu0 0.0
        %4745 = vmatpush1.msra.mxu0 %v3960
        %4746 = vmatprep.mubr.f32.mxu0 %v4405
        %4747 = vmatmul.mubr.f32.gmra.mrb[0].mxu0 %v4401
        %v4748 = vpop.f32.mrb[0].mxu0
        %v4749 = vadd.f32 %v4679, %v4748
        %v4750 = vpop.f32.mrb[0].mxu0
        %4751 = vdwg.mxu0
        %4752 = vmatprep.subr.mxu0 0.0
        %4753 = vmatpush1.msra.mxu0 %v3961
        %4754 = vmatprep.subr.mxu0 0.0
        %4755 = vmatpush1.msra.mxu0 %v3962
        %4756 = vmatprep.subr.mxu0 0.0
        %4757 = vmatpush1.msra.mxu0 %v3963
        %4758 = vmatprep.subr.mxu0 0.0
        %4759 = vmatpush1.msra.mxu0 %v3964
        %4760 = vmatprep.subr.mxu0 0.0
        %4761 = vmatpush1.msra.mxu0 %v3965
        %4762 = vmatprep.subr.mxu0 0.0
        %4763 = vmatpush1.msra.mxu0 %v3966
        %4764 = vmatprep.subr.mxu0 0.0
        %4765 = vmatpush1.msra.mxu0 %v3967
        %4766 = vmatprep.subr.mxu0 0.0
        %4767 = vmatpush1.msra.mxu0 %v3968
        %4768 = vmatprep.subr.mxu0 0.0
        %4769 = vmatpush1.msra.mxu0 %v3969
        %4770 = vmatprep.subr.mxu0 0.0
        %4771 = vmatpush1.msra.mxu0 %v3970
        %4772 = vmatprep.subr.mxu0 0.0
        %4773 = vmatpush1.msra.mxu0 %v3971
        %4774 = vmatprep.subr.mxu0 0.0
        %4775 = vmatpush1.msra.mxu0 %v3972
        %4776 = vmatprep.subr.mxu0 0.0
        %4777 = vmatpush1.msra.mxu0 %v3973
        %4778 = vmatprep.subr.mxu0 0.0
        %4779 = vmatpush1.msra.mxu0 %v3974
        %4780 = vmatprep.subr.mxu0 0.0
        %4781 = vmatpush1.msra.mxu0 %v3975
        %4782 = vmatprep.subr.mxu0 0.0
        %4783 = vmatpush1.msra.mxu0 %v3976
        %4784 = vmatprep.subr.mxu0 0.0
        %4785 = vmatpush1.msra.mxu0 %v3977
        %4786 = vmatprep.subr.mxu0 0.0
        %4787 = vmatpush1.msra.mxu0 %v3978
        %4788 = vmatprep.subr.mxu0 0.0
        %4789 = vmatpush1.msra.mxu0 %v3979
        %4790 = vmatprep.subr.mxu0 0.0
        %4791 = vmatpush1.msra.mxu0 %v3980
        %4792 = vmatprep.subr.mxu0 0.0
        %4793 = vmatpush1.msra.mxu0 %v3981
        %4794 = vmatprep.subr.mxu0 0.0
        %4795 = vmatpush1.msra.mxu0 %v3982
        %4796 = vmatprep.subr.mxu0 0.0
        %4797 = vmatpush1.msra.mxu0 %v3983
        %4798 = vmatprep.subr.mxu0 0.0
        %4799 = vmatpush1.msra.mxu0 %v3984
        %4800 = vmatprep.subr.mxu0 0.0
        %4801 = vmatpush1.msra.mxu0 %v3985
        %4802 = vmatprep.subr.mxu0 0.0
        %4803 = vmatpush1.msra.mxu0 %v3986
        %4804 = vmatprep.subr.mxu0 0.0
        %4805 = vmatpush1.msra.mxu0 %v3987
        %4806 = vmatprep.subr.mxu0 0.0
        %4807 = vmatpush1.msra.mxu0 %v3988
        %4808 = vmatprep.subr.mxu0 0.0
        %4809 = vmatpush1.msra.mxu0 %v3989
        %4810 = vmatprep.subr.mxu0 0.0
        %4811 = vmatpush1.msra.mxu0 %v3990
        %4812 = vmatprep.subr.mxu0 0.0
        %4813 = vmatpush1.msra.mxu0 %v3991
        %4814 = vmatprep.subr.mxu0 0.0
        %4815 = vmatpush1.msra.mxu0 %v3992
        %4816 = vmatprep.mubr.f32.mxu0 %v4413
        %4817 = vmatmul.mubr.f32.gmra.mrb[0].mxu0 %v4409
        %v4818 = vpop.f32.mrb[0].mxu0
        %v4819 = vadd.f32 %v4749, %v4818
        %v4820 = vpop.f32.mrb[0].mxu0
        %4821 = vdwg.mxu0
        %4822 = vmatprep.subr.mxu0 0.0
        %4823 = vmatpush1.msra.mxu0 %v3993
        %4824 = vmatprep.subr.mxu0 0.0
        %4825 = vmatpush1.msra.mxu0 %v3994
        %4826 = vmatprep.subr.mxu0 0.0
        %4827 = vmatpush1.msra.mxu0 %v3995
        %4828 = vmatprep.subr.mxu0 0.0
        %4829 = vmatpush1.msra.mxu0 %v3996
        %4830 = vmatprep.subr.mxu0 0.0
        %4831 = vmatpush1.msra.mxu0 %v3997
        %4832 = vmatprep.subr.mxu0 0.0
        %4833 = vmatpush1.msra.mxu0 %v3998
        %4834 = vmatprep.subr.mxu0 0.0
        %4835 = vmatpush1.msra.mxu0 %v3999
        %4836 = vmatprep.subr.mxu0 0.0
        %4837 = vmatpush1.msra.mxu0 %v4000
        %4838 = vmatprep.subr.mxu0 0.0
        %4839 = vmatpush1.msra.mxu0 %v4001
        %4840 = vmatprep.subr.mxu0 0.0
        %4841 = vmatpush1.msra.mxu0 %v4002
        %4842 = vmatprep.subr.mxu0 0.0
        %4843 = vmatpush1.msra.mxu0 %v4003
        %4844 = vmatprep.subr.mxu0 0.0
        %4845 = vmatpush1.msra.mxu0 %v4004
        %4846 = vmatprep.subr.mxu0 0.0
        %4847 = vmatpush1.msra.mxu0 %v4005
        %4848 = vmatprep.subr.mxu0 0.0
        %4849 = vmatpush1.msra.mxu0 %v4006
        %4850 = vmatprep.subr.mxu0 0.0
        %4851 = vmatpush1.msra.mxu0 %v4007
        %4852 = vmatprep.subr.mxu0 0.0
        %4853 = vmatpush1.msra.mxu0 %v4008
        %4854 = vmatprep.subr.mxu0 0.0
        %4855 = vmatpush1.msra.mxu0 %v4009
        %4856 = vmatprep.subr.mxu0 0.0
        %4857 = vmatpush1.msra.mxu0 %v4010
        %4858 = vmatprep.subr.mxu0 0.0
        %4859 = vmatpush1.msra.mxu0 %v4011
        %4860 = vmatprep.subr.mxu0 0.0
        %4861 = vmatpush1.msra.mxu0 %v4012
        %4862 = vmatprep.subr.mxu0 0.0
        %4863 = vmatpush1.msra.mxu0 %v4013
        %4864 = vmatprep.subr.mxu0 0.0
        %4865 = vmatpush1.msra.mxu0 %v4014
        %4866 = vmatprep.subr.mxu0 0.0
        %4867 = vmatpush1.msra.mxu0 %v4015
        %4868 = vmatprep.subr.mxu0 0.0
        %4869 = vmatpush1.msra.mxu0 %v4016
        %4870 = vmatprep.subr.mxu0 0.0
        %4871 = vmatpush1.msra.mxu0 %v4017
        %4872 = vmatprep.subr.mxu0 0.0
        %4873 = vmatpush1.msra.mxu0 %v4018
        %4874 = vmatprep.subr.mxu0 0.0
        %4875 = vmatpush1.msra.mxu0 %v4019
        %4876 = vmatprep.subr.mxu0 0.0
        %4877 = vmatpush1.msra.mxu0 %v4020
        %4878 = vmatprep.subr.mxu0 0.0
        %4879 = vmatpush1.msra.mxu0 %v4021
        %4880 = vmatprep.subr.mxu0 0.0
        %4881 = vmatpush1.msra.mxu0 %v4022
        %4882 = vmatprep.subr.mxu0 0.0
        %4883 = vmatpush1.msra.mxu0 %v4023
        %4884 = vmatprep.subr.mxu0 0.0
        %4885 = vmatpush1.msra.mxu0 %v4024
        %4886 = vmatprep.mubr.f32.mxu0 %v4421
        %4887 = vmatmul.mubr.f32.gmra.mrb[0].mxu0 %v4417
        %v4888 = vpop.f32.mrb[0].mxu0
        %v4889 = vadd.f32 %v4819, %v4888
        %v4890 = vpop.f32.mrb[0].mxu0
        %4891 = vdwg.mxu0
        %4892 = vmatprep.subr.mxu0 0.0
        %4893 = vmatpush1.msra.mxu0 %v4025
        %4894 = vmatprep.subr.mxu0 0.0
        %4895 = vmatpush1.msra.mxu0 %v4026
        %4896 = vmatprep.subr.mxu0 0.0
        %4897 = vmatpush1.msra.mxu0 %v4027
        %4898 = vmatprep.subr.mxu0 0.0
        %4899 = vmatpush1.msra.mxu0 %v4028
        %4900 = vmatprep.subr.mxu0 0.0
        %4901 = vmatpush1.msra.mxu0 %v4029
        %4902 = vmatprep.subr.mxu0 0.0
        %4903 = vmatpush1.msra.mxu0 %v4030
        %4904 = vmatprep.subr.mxu0 0.0
        %4905 = vmatpush1.msra.mxu0 %v4031
        %4906 = vmatprep.subr.mxu0 0.0
        %4907 = vmatpush1.msra.mxu0 %v4032
        %4908 = vmatprep.subr.mxu0 0.0
        %4909 = vmatpush1.msra.mxu0 %v4033
        %4910 = vmatprep.subr.mxu0 0.0
        %4911 = vmatpush1.msra.mxu0 %v4034
        %4912 = vmatprep.subr.mxu0 0.0
        %4913 = vmatpush1.msra.mxu0 %v4035
        %4914 = vmatprep.subr.mxu0 0.0
        %4915 = vmatpush1.msra.mxu0 %v4036
        %4916 = vmatprep.subr.mxu0 0.0
        %4917 = vmatpush1.msra.mxu0 %v4037
        %4918 = vmatprep.subr.mxu0 0.0
        %4919 = vmatpush1.msra.mxu0 %v4038
        %4920 = vmatprep.subr.mxu0 0.0
        %4921 = vmatpush1.msra.mxu0 %v4039
        %4922 = vmatprep.subr.mxu0 0.0
        %4923 = vmatpush1.msra.mxu0 %v4040
        %4924 = vmatprep.subr.mxu0 0.0
        %4925 = vmatpush1.msra.mxu0 %v4041
        %4926 = vmatprep.subr.mxu0 0.0
        %4927 = vmatpush1.msra.mxu0 %v4042
        %4928 = vmatprep.subr.mxu0 0.0
        %4929 = vmatpush1.msra.mxu0 %v4043
        %4930 = vmatprep.subr.mxu0 0.0
        %4931 = vmatpush1.msra.mxu0 %v4044
        %4932 = vmatprep.subr.mxu0 0.0
        %4933 = vmatpush1.msra.mxu0 %v4045
        %4934 = vmatprep.subr.mxu0 0.0
        %4935 = vmatpush1.msra.mxu0 %v4046
        %4936 = vmatprep.subr.mxu0 0.0
        %4937 = vmatpush1.msra.mxu0 %v4047
        %4938 = vmatprep.subr.mxu0 0.0
        %4939 = vmatpush1.msra.mxu0 %v4048
        %4940 = vmatprep.subr.mxu0 0.0
        %4941 = vmatpush1.msra.mxu0 %v4049
        %4942 = vmatprep.subr.mxu0 0.0
        %4943 = vmatpush1.msra.mxu0 %v4050
        %4944 = vmatprep.subr.mxu0 0.0
        %4945 = vmatpush1.msra.mxu0 %v4051
        %4946 = vmatprep.subr.mxu0 0.0
        %4947 = vmatpush1.msra.mxu0 %v4052
        %4948 = vmatprep.subr.mxu0 0.0
        %4949 = vmatpush1.msra.mxu0 %v4053
        %4950 = vmatprep.subr.mxu0 0.0
        %4951 = vmatpush1.msra.mxu0 %v4054
        %4952 = vmatprep.subr.mxu0 0.0
        %4953 = vmatpush1.msra.mxu0 %v4055
        %4954 = vmatprep.subr.mxu0 0.0
        %4955 = vmatpush1.msra.mxu0 %v4056
        %4956 = vmatprep.mubr.f32.mxu0 %v4429
        %4957 = vmatmul.mubr.f32.gmra.mrb[0].mxu0 %v4425
        %v4958 = vpop.f32.mrb[0].mxu0
        %v4959 = vadd.f32 %v4889, %v4958
        %v4960 = vpop.f32.mrb[0].mxu0
        %4961 = vdwg.mxu0
        %4962 = vmatprep.subr.mxu0 0.0
        %4963 = vmatpush1.msra.mxu0 %v4057
        %4964 = vmatprep.subr.mxu0 0.0
        %4965 = vmatpush1.msra.mxu0 %v4058
        %4966 = vmatprep.subr.mxu0 0.0
        %4967 = vmatpush1.msra.mxu0 %v4059
        %4968 = vmatprep.subr.mxu0 0.0
        %4969 = vmatpush1.msra.mxu0 %v4060
        %4970 = vmatprep.subr.mxu0 0.0
        %4971 = vmatpush1.msra.mxu0 %v4061
        %4972 = vmatprep.subr.mxu0 0.0
        %4973 = vmatpush1.msra.mxu0 %v4062
        %4974 = vmatprep.subr.mxu0 0.0
        %4975 = vmatpush1.msra.mxu0 %v4063
        %4976 = vmatprep.subr.mxu0 0.0
        %4977 = vmatpush1.msra.mxu0 %v4064
        %4978 = vmatprep.subr.mxu0 0.0
        %4979 = vmatpush1.msra.mxu0 %v4065
        %4980 = vmatprep.subr.mxu0 0.0
        %4981 = vmatpush1.msra.mxu0 %v4066
        %4982 = vmatprep.subr.mxu0 0.0
        %4983 = vmatpush1.msra.mxu0 %v4067
        %4984 = vmatprep.subr.mxu0 0.0
        %4985 = vmatpush1.msra.mxu0 %v4068
        %4986 = vmatprep.subr.mxu0 0.0
        %4987 = vmatpush1.msra.mxu0 %v4069
        %4988 = vmatprep.subr.mxu0 0.0
        %4989 = vmatpush1.msra.mxu0 %v4070
        %4990 = vmatprep.subr.mxu0 0.0
        %4991 = vmatpush1.msra.mxu0 %v4071
        %4992 = vmatprep.subr.mxu0 0.0
        %4993 = vmatpush1.msra.mxu0 %v4072
        %4994 = vmatprep.subr.mxu0 0.0
        %4995 = vmatpush1.msra.mxu0 %v4073
        %4996 = vmatprep.subr.mxu0 0.0
        %4997 = vmatpush1.msra.mxu0 %v4074
        %4998 = vmatprep.subr.mxu0 0.0
        %4999 = vmatpush1.msra.mxu0 %v4075
        %5000 = vmatprep.subr.mxu0 0.0
        %5001 = vmatpush1.msra.mxu0 %v4076
        %5002 = vmatprep.subr.mxu0 0.0
        %5003 = vmatpush1.msra.mxu0 %v4077
        %5004 = vmatprep.subr.mxu0 0.0
        %5005 = vmatpush1.msra.mxu0 %v4078
        %5006 = vmatprep.subr.mxu0 0.0
        %5007 = vmatpush1.msra.mxu0 %v4079
        %5008 = vmatprep.subr.mxu0 0.0
        %5009 = vmatpush1.msra.mxu0 %v4080
        %5010 = vmatprep.subr.mxu0 0.0
        %5011 = vmatpush1.msra.mxu0 %v4081
        %5012 = vmatprep.subr.mxu0 0.0
        %5013 = vmatpush1.msra.mxu0 %v4082
        %5014 = vmatprep.subr.mxu0 0.0
        %5015 = vmatpush1.msra.mxu0 %v4083
        %5016 = vmatprep.subr.mxu0 0.0
        %5017 = vmatpush1.msra.mxu0 %v4084
        %5018 = vmatprep.subr.mxu0 0.0
        %5019 = vmatpush1.msra.mxu0 %v4085
        %5020 = vmatprep.subr.mxu0 0.0
        %5021 = vmatpush1.msra.mxu0 %v4086
        %5022 = vmatprep.subr.mxu0 0.0
        %5023 = vmatpush1.msra.mxu0 %v4087
        %5024 = vmatprep.subr.mxu0 0.0
        %5025 = vmatpush1.msra.mxu0 %v4088
        %5026 = vmatprep.mubr.f32.mxu0 %v4437
        %5027 = vmatmul.mubr.f32.gmra.mrb[0].mxu0 %v4433
        %v5028 = vpop.f32.mrb[0].mxu0
        %v5029 = vadd.f32 %v4959, %v5028
        %v5030 = vpop.f32.mrb[0].mxu0
        %5031 = vdwg.mxu0
        %5032 = vmatprep.subr.mxu0 0.0
        %5033 = vmatpush1.msra.mxu0 %v4089
        %5034 = vmatprep.subr.mxu0 0.0
        %5035 = vmatpush1.msra.mxu0 %v4090
        %5036 = vmatprep.subr.mxu0 0.0
        %5037 = vmatpush1.msra.mxu0 %v4091
        %5038 = vmatprep.subr.mxu0 0.0
        %5039 = vmatpush1.msra.mxu0 %v4092
        %5040 = vmatprep.subr.mxu0 0.0
        %5041 = vmatpush1.msra.mxu0 %v4093
        %5042 = vmatprep.subr.mxu0 0.0
        %5043 = vmatpush1.msra.mxu0 %v4094
        %5044 = vmatprep.subr.mxu0 0.0
        %5045 = vmatpush1.msra.mxu0 %v4095
        %5046 = vmatprep.subr.mxu0 0.0
        %5047 = vmatpush1.msra.mxu0 %v4096
        %5048 = vmatprep.subr.mxu0 0.0
        %5049 = vmatpush1.msra.mxu0 %v4097
        %5050 = vmatprep.subr.mxu0 0.0
        %5051 = vmatpush1.msra.mxu0 %v4098
        %5052 = vmatprep.subr.mxu0 0.0
        %5053 = vmatpush1.msra.mxu0 %v4099
        %5054 = vmatprep.subr.mxu0 0.0
        %5055 = vmatpush1.msra.mxu0 %v4100
        %5056 = vmatprep.subr.mxu0 0.0
        %5057 = vmatpush1.msra.mxu0 %v4101
        %5058 = vmatprep.subr.mxu0 0.0
        %5059 = vmatpush1.msra.mxu0 %v4102
        %5060 = vmatprep.subr.mxu0 0.0
        %5061 = vmatpush1.msra.mxu0 %v4103
        %5062 = vmatprep.subr.mxu0 0.0
        %5063 = vmatpush1.msra.mxu0 %v4104
        %5064 = vmatprep.subr.mxu0 0.0
        %5065 = vmatpush1.msra.mxu0 %v4105
        %5066 = vmatprep.subr.mxu0 0.0
        %5067 = vmatpush1.msra.mxu0 %v4106
        %5068 = vmatprep.subr.mxu0 0.0
        %5069 = vmatpush1.msra.mxu0 %v4107
        %5070 = vmatprep.subr.mxu0 0.0
        %5071 = vmatpush1.msra.mxu0 %v4108
        %5072 = vmatprep.subr.mxu0 0.0
        %5073 = vmatpush1.msra.mxu0 %v4109
        %5074 = vmatprep.subr.mxu0 0.0
        %5075 = vmatpush1.msra.mxu0 %v4110
        %5076 = vmatprep.subr.mxu0 0.0
        %5077 = vmatpush1.msra.mxu0 %v4111
        %5078 = vmatprep.subr.mxu0 0.0
        %5079 = vmatpush1.msra.mxu0 %v4112
        %5080 = vmatprep.subr.mxu0 0.0
        %5081 = vmatpush1.msra.mxu0 %v4113
        %5082 = vmatprep.subr.mxu0 0.0
        %5083 = vmatpush1.msra.mxu0 %v4114
        %5084 = vmatprep.subr.mxu0 0.0
        %5085 = vmatpush1.msra.mxu0 %v4115
        %5086 = vmatprep.subr.mxu0 0.0
        %5087 = vmatpush1.msra.mxu0 %v4116
        %5088 = vmatprep.subr.mxu0 0.0
        %5089 = vmatpush1.msra.mxu0 %v4117
        %5090 = vmatprep.subr.mxu0 0.0
        %5091 = vmatpush1.msra.mxu0 %v4118
        %5092 = vmatprep.subr.mxu0 0.0
        %5093 = vmatpush1.msra.mxu0 %v4119
        %5094 = vmatprep.subr.mxu0 0.0
        %5095 = vmatpush1.msra.mxu0 %v4120
        %5096 = vmatprep.mubr.f32.mxu0 %v4445
        %5097 = vmatmul.mubr.f32.gmra.mrb[0].mxu0 %v4441
        %v5098 = vpop.f32.mrb[0].mxu0
        %v5099 = vadd.f32 %v5029, %v5098
        %v5100 = vpop.f32.mrb[0].mxu0
        %5101 = vdwg.mxu0
        %5102 = vmatprep.subr.mxu0 0.0
        %5103 = vmatpush1.msra.mxu0 %v4121
        %5104 = vmatprep.subr.mxu0 0.0
        %5105 = vmatpush1.msra.mxu0 %v4122
        %5106 = vmatprep.subr.mxu0 0.0
        %5107 = vmatpush1.msra.mxu0 %v4123
        %5108 = vmatprep.subr.mxu0 0.0
        %5109 = vmatpush1.msra.mxu0 %v4124
        %5110 = vmatprep.subr.mxu0 0.0
        %5111 = vmatpush1.msra.mxu0 %v4125
        %5112 = vmatprep.subr.mxu0 0.0
        %5113 = vmatpush1.msra.mxu0 %v4126
        %5114 = vmatprep.subr.mxu0 0.0
        %5115 = vmatpush1.msra.mxu0 %v4127
        %5116 = vmatprep.subr.mxu0 0.0
        %5117 = vmatpush1.msra.mxu0 %v4128
        %5118 = vmatprep.subr.mxu0 0.0
        %5119 = vmatpush1.msra.mxu0 %v4129
        %5120 = vmatprep.subr.mxu0 0.0
        %5121 = vmatpush1.msra.mxu0 %v4130
        %5122 = vmatprep.subr.mxu0 0.0
        %5123 = vmatpush1.msra.mxu0 %v4131
        %5124 = vmatprep.subr.mxu0 0.0
        %5125 = vmatpush1.msra.mxu0 %v4132
        %5126 = vmatprep.subr.mxu0 0.0
        %5127 = vmatpush1.msra.mxu0 %v4133
        %5128 = vmatprep.subr.mxu0 0.0
        %5129 = vmatpush1.msra.mxu0 %v4134
        %5130 = vmatprep.subr.mxu0 0.0
        %5131 = vmatpush1.msra.mxu0 %v4135
        %5132 = vmatprep.subr.mxu0 0.0
        %5133 = vmatpush1.msra.mxu0 %v4136
        %5134 = vmatprep.subr.mxu0 0.0
        %5135 = vmatpush1.msra.mxu0 %v4137
        %5136 = vmatprep.subr.mxu0 0.0
        %5137 = vmatpush1.msra.mxu0 %v4138
        %5138 = vmatprep.subr.mxu0 0.0
        %5139 = vmatpush1.msra.mxu0 %v4139
        %5140 = vmatprep.subr.mxu0 0.0
        %5141 = vmatpush1.msra.mxu0 %v4140
        %5142 = vmatprep.subr.mxu0 0.0
        %5143 = vmatpush1.msra.mxu0 %v4141
        %5144 = vmatprep.subr.mxu0 0.0
        %5145 = vmatpush1.msra.mxu0 %v4142
        %5146 = vmatprep.subr.mxu0 0.0
        %5147 = vmatpush1.msra.mxu0 %v4143
        %5148 = vmatprep.subr.mxu0 0.0
        %5149 = vmatpush1.msra.mxu0 %v4144
        %5150 = vmatprep.subr.mxu0 0.0
        %5151 = vmatpush1.msra.mxu0 %v4145
        %5152 = vmatprep.subr.mxu0 0.0
        %5153 = vmatpush1.msra.mxu0 %v4146
        %5154 = vmatprep.subr.mxu0 0.0
        %5155 = vmatpush1.msra.mxu0 %v4147
        %5156 = vmatprep.subr.mxu0 0.0
        %5157 = vmatpush1.msra.mxu0 %v4148
        %5158 = vmatprep.subr.mxu0 0.0
        %5159 = vmatpush1.msra.mxu0 %v4149
        %5160 = vmatprep.subr.mxu0 0.0
        %5161 = vmatpush1.msra.mxu0 %v4150
        %5162 = vmatprep.subr.mxu0 0.0
        %5163 = vmatpush1.msra.mxu0 %v4151
        %5164 = vmatprep.subr.mxu0 0.0
        %5165 = vmatpush1.msra.mxu0 %v4152
        %5166 = vmatprep.mubr.f32.mxu0 %v4453
        %5167 = vmatmul.mubr.f32.gmra.mrb[0].mxu0 %v4449
        %v5168 = vpop.f32.mrb[0].mxu0
        %v5169 = vadd.f32 %v5099, %v5168
        %v5170 = vpop.f32.mrb[0].mxu0
        %5171 = vdwg.mxu0
        %5172 = vmatprep.subr.mxu0 0.0
        %5173 = vmatpush1.msra.mxu0 %v4153
        %5174 = vmatprep.subr.mxu0 0.0
        %5175 = vmatpush1.msra.mxu0 %v4154
        %5176 = vmatprep.subr.mxu0 0.0
        %5177 = vmatpush1.msra.mxu0 %v4155
        %5178 = vmatprep.subr.mxu0 0.0
        %5179 = vmatpush1.msra.mxu0 %v4156
        %5180 = vmatprep.subr.mxu0 0.0
        %5181 = vmatpush1.msra.mxu0 %v4157
        %5182 = vmatprep.subr.mxu0 0.0
        %5183 = vmatpush1.msra.mxu0 %v4158
        %5184 = vmatprep.subr.mxu0 0.0
        %5185 = vmatpush1.msra.mxu0 %v4159
        %5186 = vmatprep.subr.mxu0 0.0
        %5187 = vmatpush1.msra.mxu0 %v4160
        %5188 = vmatprep.subr.mxu0 0.0
        %5189 = vmatpush1.msra.mxu0 %v4161
        %5190 = vmatprep.subr.mxu0 0.0
        %5191 = vmatpush1.msra.mxu0 %v4162
        %5192 = vmatprep.subr.mxu0 0.0
        %5193 = vmatpush1.msra.mxu0 %v4163
        %5194 = vmatprep.subr.mxu0 0.0
        %5195 = vmatpush1.msra.mxu0 %v4164
        %5196 = vmatprep.subr.mxu0 0.0
        %5197 = vmatpush1.msra.mxu0 %v4165
        %5198 = vmatprep.subr.mxu0 0.0
        %5199 = vmatpush1.msra.mxu0 %v4166
        %5200 = vmatprep.subr.mxu0 0.0
        %5201 = vmatpush1.msra.mxu0 %v4167
        %5202 = vmatprep.subr.mxu0 0.0
        %5203 = vmatpush1.msra.mxu0 %v4168
        %5204 = vmatprep.subr.mxu0 0.0
        %5205 = vmatpush1.msra.mxu0 %v4169
        %5206 = vmatprep.subr.mxu0 0.0
        %5207 = vmatpush1.msra.mxu0 %v4170
        %5208 = vmatprep.subr.mxu0 0.0
        %5209 = vmatpush1.msra.mxu0 %v4171
        %5210 = vmatprep.subr.mxu0 0.0
        %5211 = vmatpush1.msra.mxu0 %v4172
        %5212 = vmatprep.subr.mxu0 0.0
        %5213 = vmatpush1.msra.mxu0 %v4173
        %5214 = vmatprep.subr.mxu0 0.0
        %5215 = vmatpush1.msra.mxu0 %v4174
        %5216 = vmatprep.subr.mxu0 0.0
        %5217 = vmatpush1.msra.mxu0 %v4175
        %5218 = vmatprep.subr.mxu0 0.0
        %5219 = vmatpush1.msra.mxu0 %v4176
        %5220 = vmatprep.subr.mxu0 0.0
        %5221 = vmatpush1.msra.mxu0 %v4177
        %5222 = vmatprep.subr.mxu0 0.0
        %5223 = vmatpush1.msra.mxu0 %v4178
        %5224 = vmatprep.subr.mxu0 0.0
        %5225 = vmatpush1.msra.mxu0 %v4179
        %5226 = vmatprep.subr.mxu0 0.0
        %5227 = vmatpush1.msra.mxu0 %v4180
        %5228 = vmatprep.subr.mxu0 0.0
        %5229 = vmatpush1.msra.mxu0 %v4181
        %5230 = vmatprep.subr.mxu0 0.0
        %5231 = vmatpush1.msra.mxu0 %v4182
        %5232 = vmatprep.subr.mxu0 0.0
        %5233 = vmatpush1.msra.mxu0 %v4183
        %5234 = vmatprep.subr.mxu0 0.0
        %5235 = vmatpush1.msra.mxu0 %v4184
        %5236 = vmatprep.mubr.f32.mxu0 %v4461
        %5237 = vmatmul.mubr.f32.gmra.mrb[0].mxu0 %v4457
        %v5238 = vpop.f32.mrb[0].mxu0
        %v5239 = vadd.f32 %v5169, %v5238
        %v5240 = vpop.f32.mrb[0].mxu0
        %5241 = vdwg.mxu0
        %5242 = vmatprep.subr.mxu0 0.0
        %5243 = vmatpush1.msra.mxu0 %v4185
        %5244 = vmatprep.subr.mxu0 0.0
        %5245 = vmatpush1.msra.mxu0 %v4186
        %5246 = vmatprep.subr.mxu0 0.0
        %5247 = vmatpush1.msra.mxu0 %v4187
        %5248 = vmatprep.subr.mxu0 0.0
        %5249 = vmatpush1.msra.mxu0 %v4188
        %5250 = vmatprep.subr.mxu0 0.0
        %5251 = vmatpush1.msra.mxu0 %v4189
        %5252 = vmatprep.subr.mxu0 0.0
        %5253 = vmatpush1.msra.mxu0 %v4190
        %5254 = vmatprep.subr.mxu0 0.0
        %5255 = vmatpush1.msra.mxu0 %v4191
        %5256 = vmatprep.subr.mxu0 0.0
        %5257 = vmatpush1.msra.mxu0 %v4192
        %5258 = vmatprep.subr.mxu0 0.0
        %5259 = vmatpush1.msra.mxu0 %v4193
        %5260 = vmatprep.subr.mxu0 0.0
        %5261 = vmatpush1.msra.mxu0 %v4194
        %5262 = vmatprep.subr.mxu0 0.0
        %5263 = vmatpush1.msra.mxu0 %v4195
        %5264 = vmatprep.subr.mxu0 0.0
        %5265 = vmatpush1.msra.mxu0 %v4196
        %5266 = vmatprep.subr.mxu0 0.0
        %5267 = vmatpush1.msra.mxu0 %v4197
        %5268 = vmatprep.subr.mxu0 0.0
        %5269 = vmatpush1.msra.mxu0 %v4198
        %5270 = vmatprep.subr.mxu0 0.0
        %5271 = vmatpush1.msra.mxu0 %v4199
        %5272 = vmatprep.subr.mxu0 0.0
        %5273 = vmatpush1.msra.mxu0 %v4200
        %5274 = vmatprep.subr.mxu0 0.0
        %5275 = vmatpush1.msra.mxu0 %v4201
        %5276 = vmatprep.subr.mxu0 0.0
        %5277 = vmatpush1.msra.mxu0 %v4202
        %5278 = vmatprep.subr.mxu0 0.0
        %5279 = vmatpush1.msra.mxu0 %v4203
        %5280 = vmatprep.subr.mxu0 0.0
        %5281 = vmatpush1.msra.mxu0 %v4204
        %5282 = vmatprep.subr.mxu0 0.0
        %5283 = vmatpush1.msra.mxu0 %v4205
        %5284 = vmatprep.subr.mxu0 0.0
        %5285 = vmatpush1.msra.mxu0 %v4206
        %5286 = vmatprep.subr.mxu0 0.0
        %5287 = vmatpush1.msra.mxu0 %v4207
        %5288 = vmatprep.subr.mxu0 0.0
        %5289 = vmatpush1.msra.mxu0 %v4208
        %5290 = vmatprep.subr.mxu0 0.0
        %5291 = vmatpush1.msra.mxu0 %v4209
        %5292 = vmatprep.subr.mxu0 0.0
        %5293 = vmatpush1.msra.mxu0 %v4210
        %5294 = vmatprep.subr.mxu0 0.0
        %5295 = vmatpush1.msra.mxu0 %v4211
        %5296 = vmatprep.subr.mxu0 0.0
        %5297 = vmatpush1.msra.mxu0 %v4212
        %5298 = vmatprep.subr.mxu0 0.0
        %5299 = vmatpush1.msra.mxu0 %v4213
        %5300 = vmatprep.subr.mxu0 0.0
        %5301 = vmatpush1.msra.mxu0 %v4214
        %5302 = vmatprep.subr.mxu0 0.0
        %5303 = vmatpush1.msra.mxu0 %v4215
        %5304 = vmatprep.subr.mxu0 0.0
        %5305 = vmatpush1.msra.mxu0 %v4216
        %5306 = vmatprep.mubr.f32.mxu0 %v4469
        %5307 = vmatmul.mubr.f32.gmra.mrb[0].mxu0 %v4465
        %v5308 = vpop.f32.mrb[0].mxu0
        %v5309 = vadd.f32 %v5239, %v5308
        %v5310 = vpop.f32.mrb[0].mxu0
        %5311 = vdwg.mxu0
        %5312 = vmatprep.subr.mxu0 0.0
        %5313 = vmatpush1.msra.mxu0 %v4217
        %5314 = vmatprep.subr.mxu0 0.0
        %5315 = vmatpush1.msra.mxu0 %v4218
        %5316 = vmatprep.subr.mxu0 0.0
        %5317 = vmatpush1.msra.mxu0 %v4219
        %5318 = vmatprep.subr.mxu0 0.0
        %5319 = vmatpush1.msra.mxu0 %v4220
        %5320 = vmatprep.subr.mxu0 0.0
        %5321 = vmatpush1.msra.mxu0 %v4221
        %5322 = vmatprep.subr.mxu0 0.0
        %5323 = vmatpush1.msra.mxu0 %v4222
        %5324 = vmatprep.subr.mxu0 0.0
        %5325 = vmatpush1.msra.mxu0 %v4223
        %5326 = vmatprep.subr.mxu0 0.0
        %5327 = vmatpush1.msra.mxu0 %v4224
        %5328 = vmatprep.subr.mxu0 0.0
        %5329 = vmatpush1.msra.mxu0 %v4225
        %5330 = vmatprep.subr.mxu0 0.0
        %5331 = vmatpush1.msra.mxu0 %v4226
        %5332 = vmatprep.subr.mxu0 0.0
        %5333 = vmatpush1.msra.mxu0 %v4227
        %5334 = vmatprep.subr.mxu0 0.0
        %5335 = vmatpush1.msra.mxu0 %v4228
        %5336 = vmatprep.subr.mxu0 0.0
        %5337 = vmatpush1.msra.mxu0 %v4229
        %5338 = vmatprep.subr.mxu0 0.0
        %5339 = vmatpush1.msra.mxu0 %v4230
        %5340 = vmatprep.subr.mxu0 0.0
        %5341 = vmatpush1.msra.mxu0 %v4231
        %5342 = vmatprep.subr.mxu0 0.0
        %5343 = vmatpush1.msra.mxu0 %v4232
        %5344 = vmatprep.subr.mxu0 0.0
        %5345 = vmatpush1.msra.mxu0 %v4233
        %5346 = vmatprep.subr.mxu0 0.0
        %5347 = vmatpush1.msra.mxu0 %v4234
        %5348 = vmatprep.subr.mxu0 0.0
        %5349 = vmatpush1.msra.mxu0 %v4235
        %5350 = vmatprep.subr.mxu0 0.0
        %5351 = vmatpush1.msra.mxu0 %v4236
        %5352 = vmatprep.subr.mxu0 0.0
        %5353 = vmatpush1.msra.mxu0 %v4237
        %5354 = vmatprep.subr.mxu0 0.0
        %5355 = vmatpush1.msra.mxu0 %v4238
        %5356 = vmatprep.subr.mxu0 0.0
        %5357 = vmatpush1.msra.mxu0 %v4239
        %5358 = vmatprep.subr.mxu0 0.0
        %5359 = vmatpush1.msra.mxu0 %v4240
        %5360 = vmatprep.subr.mxu0 0.0
        %5361 = vmatpush1.msra.mxu0 %v4241
        %5362 = vmatprep.subr.mxu0 0.0
        %5363 = vmatpush1.msra.mxu0 %v4242
        %5364 = vmatprep.subr.mxu0 0.0
        %5365 = vmatpush1.msra.mxu0 %v4243
        %5366 = vmatprep.subr.mxu0 0.0
        %5367 = vmatpush1.msra.mxu0 %v4244
        %5368 = vmatprep.subr.mxu0 0.0
        %5369 = vmatpush1.msra.mxu0 %v4245
        %5370 = vmatprep.subr.mxu0 0.0
        %5371 = vmatpush1.msra.mxu0 %v4246
        %5372 = vmatprep.subr.mxu0 0.0
        %5373 = vmatpush1.msra.mxu0 %v4247
        %5374 = vmatprep.subr.mxu0 0.0
        %5375 = vmatpush1.msra.mxu0 %v4248
        %5376 = vmatprep.mubr.f32.mxu0 %v4477
        %5377 = vmatmul.mubr.f32.gmra.mrb[0].mxu0 %v4473
        %v5378 = vpop.f32.mrb[0].mxu0
        %v5379 = vadd.f32 %v5309, %v5378
        %v5380 = vpop.f32.mrb[0].mxu0
        %5381 = vdwg.mxu0
        %5382 = vmatprep.subr.mxu0 0.0
        %5383 = vmatpush1.msra.mxu0 %v4249
        %5384 = vmatprep.subr.mxu0 0.0
        %5385 = vmatpush1.msra.mxu0 %v4250
        %5386 = vmatprep.subr.mxu0 0.0
        %5387 = vmatpush1.msra.mxu0 %v4251
        %5388 = vmatprep.subr.mxu0 0.0
        %5389 = vmatpush1.msra.mxu0 %v4252
        %5390 = vmatprep.subr.mxu0 0.0
        %5391 = vmatpush1.msra.mxu0 %v4253
        %5392 = vmatprep.subr.mxu0 0.0
        %5393 = vmatpush1.msra.mxu0 %v4254
        %5394 = vmatprep.subr.mxu0 0.0
        %5395 = vmatpush1.msra.mxu0 %v4255
        %5396 = vmatprep.subr.mxu0 0.0
        %5397 = vmatpush1.msra.mxu0 %v4256
        %5398 = vmatprep.subr.mxu0 0.0
        %5399 = vmatpush1.msra.mxu0 %v4257
        %5400 = vmatprep.subr.mxu0 0.0
        %5401 = vmatpush1.msra.mxu0 %v4258
        %5402 = vmatprep.subr.mxu0 0.0
        %5403 = vmatpush1.msra.mxu0 %v4259
        %5404 = vmatprep.subr.mxu0 0.0
        %5405 = vmatpush1.msra.mxu0 %v4260
        %5406 = vmatprep.subr.mxu0 0.0
        %5407 = vmatpush1.msra.mxu0 %v4261
        %5408 = vmatprep.subr.mxu0 0.0
        %5409 = vmatpush1.msra.mxu0 %v4262
        %5410 = vmatprep.subr.mxu0 0.0
        %5411 = vmatpush1.msra.mxu0 %v4263
        %5412 = vmatprep.subr.mxu0 0.0
        %5413 = vmatpush1.msra.mxu0 %v4264
        %5414 = vmatprep.subr.mxu0 0.0
        %5415 = vmatpush1.msra.mxu0 %v4265
        %5416 = vmatprep.subr.mxu0 0.0
        %5417 = vmatpush1.msra.mxu0 %v4266
        %5418 = vmatprep.subr.mxu0 0.0
        %5419 = vmatpush1.msra.mxu0 %v4267
        %5420 = vmatprep.subr.mxu0 0.0
        %5421 = vmatpush1.msra.mxu0 %v4268
        %5422 = vmatprep.subr.mxu0 0.0
        %5423 = vmatpush1.msra.mxu0 %v4269
        %5424 = vmatprep.subr.mxu0 0.0
        %5425 = vmatpush1.msra.mxu0 %v4270
        %5426 = vmatprep.subr.mxu0 0.0
        %5427 = vmatpush1.msra.mxu0 %v4271
        %5428 = vmatprep.subr.mxu0 0.0
        %5429 = vmatpush1.msra.mxu0 %v4272
        %5430 = vmatprep.subr.mxu0 0.0
        %5431 = vmatpush1.msra.mxu0 %v4273
        %5432 = vmatprep.subr.mxu0 0.0
        %5433 = vmatpush1.msra.mxu0 %v4274
        %5434 = vmatprep.subr.mxu0 0.0
        %5435 = vmatpush1.msra.mxu0 %v4275
        %5436 = vmatprep.subr.mxu0 0.0
        %5437 = vmatpush1.msra.mxu0 %v4276
        %5438 = vmatprep.subr.mxu0 0.0
        %5439 = vmatpush1.msra.mxu0 %v4277
        %5440 = vmatprep.subr.mxu0 0.0
        %5441 = vmatpush1.msra.mxu0 %v4278
        %5442 = vmatprep.subr.mxu0 0.0
        %5443 = vmatpush1.msra.mxu0 %v4279
        %5444 = vmatprep.subr.mxu0 0.0
        %5445 = vmatpush1.msra.mxu0 %v4280
        %5446 = vmatprep.mubr.f32.mxu0 %v4485
        %5447 = vmatmul.mubr.f32.gmra.mrb[0].mxu0 %v4481
        %v5448 = vpop.f32.mrb[0].mxu0
        %v5449 = vadd.f32 %v5379, %v5448
        %v5450 = vpop.f32.mrb[0].mxu0
        %5451 = vdwg.mxu0
        %5452 = vmatprep.subr.mxu0 0.0
        %5453 = vmatpush1.msra.mxu0 %v4281
        %5454 = vmatprep.subr.mxu0 0.0
        %5455 = vmatpush1.msra.mxu0 %v4282
        %5456 = vmatprep.subr.mxu0 0.0
        %5457 = vmatpush1.msra.mxu0 %v4283
        %5458 = vmatprep.subr.mxu0 0.0
        %5459 = vmatpush1.msra.mxu0 %v4284
        %5460 = vmatprep.subr.mxu0 0.0
        %5461 = vmatpush1.msra.mxu0 %v4285
        %5462 = vmatprep.subr.mxu0 0.0
        %5463 = vmatpush1.msra.mxu0 %v4286
        %5464 = vmatprep.subr.mxu0 0.0
        %5465 = vmatpush1.msra.mxu0 %v4287
        %5466 = vmatprep.subr.mxu0 0.0
        %5467 = vmatpush1.msra.mxu0 %v4288
        %5468 = vmatprep.subr.mxu0 0.0
        %5469 = vmatpush1.msra.mxu0 %v4289
        %5470 = vmatprep.subr.mxu0 0.0
        %5471 = vmatpush1.msra.mxu0 %v4290
        %5472 = vmatprep.subr.mxu0 0.0
        %5473 = vmatpush1.msra.mxu0 %v4291
        %5474 = vmatprep.subr.mxu0 0.0
        %5475 = vmatpush1.msra.mxu0 %v4292
        %5476 = vmatprep.subr.mxu0 0.0
        %5477 = vmatpush1.msra.mxu0 %v4293
        %5478 = vmatprep.subr.mxu0 0.0
        %5479 = vmatpush1.msra.mxu0 %v4294
        %5480 = vmatprep.subr.mxu0 0.0
        %5481 = vmatpush1.msra.mxu0 %v4295
        %5482 = vmatprep.subr.mxu0 0.0
        %5483 = vmatpush1.msra.mxu0 %v4296
        %5484 = vmatprep.subr.mxu0 0.0
        %5485 = vmatpush1.msra.mxu0 %v4297
        %5486 = vmatprep.subr.mxu0 0.0
        %5487 = vmatpush1.msra.mxu0 %v4298
        %5488 = vmatprep.subr.mxu0 0.0
        %5489 = vmatpush1.msra.mxu0 %v4299
        %5490 = vmatprep.subr.mxu0 0.0
        %5491 = vmatpush1.msra.mxu0 %v4300
        %5492 = vmatprep.subr.mxu0 0.0
        %5493 = vmatpush1.msra.mxu0 %v4301
        %5494 = vmatprep.subr.mxu0 0.0
        %5495 = vmatpush1.msra.mxu0 %v4302
        %5496 = vmatprep.subr.mxu0 0.0
        %5497 = vmatpush1.msra.mxu0 %v4303
        %5498 = vmatprep.subr.mxu0 0.0
        %5499 = vmatpush1.msra.mxu0 %v4304
        %5500 = vmatprep.subr.mxu0 0.0
        %5501 = vmatpush1.msra.mxu0 %v4305
        %5502 = vmatprep.subr.mxu0 0.0
        %5503 = vmatpush1.msra.mxu0 %v4306
        %5504 = vmatprep.subr.mxu0 0.0
        %5505 = vmatpush1.msra.mxu0 %v4307
        %5506 = vmatprep.subr.mxu0 0.0
        %5507 = vmatpush1.msra.mxu0 %v4308
        %5508 = vmatprep.subr.mxu0 0.0
        %5509 = vmatpush1.msra.mxu0 %v4309
        %5510 = vmatprep.subr.mxu0 0.0
        %5511 = vmatpush1.msra.mxu0 %v4310
        %5512 = vmatprep.subr.mxu0 0.0
        %5513 = vmatpush1.msra.mxu0 %v4311
        %5514 = vmatprep.subr.mxu0 0.0
        %5515 = vmatpush1.msra.mxu0 %v4312
        %5516 = vmatprep.mubr.f32.mxu0 %v4493
        %5517 = vmatmul.mubr.f32.gmra.mrb[0].mxu0 %v4489
        %v5518 = vpop.f32.mrb[0].mxu0
        %v5519 = vadd.f32 %v5449, %v5518
        %v5520 = vpop.f32.mrb[0].mxu0
        %5521 = vdwg.mxu0
        %5522 = vmatprep.subr.mxu0 0.0
        %5523 = vmatpush1.msra.mxu0 %v4313
        %5524 = vmatprep.subr.mxu0 0.0
        %5525 = vmatpush1.msra.mxu0 %v4314
        %5526 = vmatprep.subr.mxu0 0.0
        %5527 = vmatpush1.msra.mxu0 %v4315
        %5528 = vmatprep.subr.mxu0 0.0
        %5529 = vmatpush1.msra.mxu0 %v4316
        %5530 = vmatprep.subr.mxu0 0.0
        %5531 = vmatpush1.msra.mxu0 %v4317
        %5532 = vmatprep.subr.mxu0 0.0
        %5533 = vmatpush1.msra.mxu0 %v4318
        %5534 = vmatprep.subr.mxu0 0.0
        %5535 = vmatpush1.msra.mxu0 %v4319
        %5536 = vmatprep.subr.mxu0 0.0
        %5537 = vmatpush1.msra.mxu0 %v4320
        %5538 = vmatprep.subr.mxu0 0.0
        %5539 = vmatpush1.msra.mxu0 %v4321
        %5540 = vmatprep.subr.mxu0 0.0
        %5541 = vmatpush1.msra.mxu0 %v4322
        %5542 = vmatprep.subr.mxu0 0.0
        %5543 = vmatpush1.msra.mxu0 %v4323
        %5544 = vmatprep.subr.mxu0 0.0
        %5545 = vmatpush1.msra.mxu0 %v4324
        %5546 = vmatprep.subr.mxu0 0.0
        %5547 = vmatpush1.msra.mxu0 %v4325
        %5548 = vmatprep.subr.mxu0 0.0
        %5549 = vmatpush1.msra.mxu0 %v4326
        %5550 = vmatprep.subr.mxu0 0.0
        %5551 = vmatpush1.msra.mxu0 %v4327
        %5552 = vmatprep.subr.mxu0 0.0
        %5553 = vmatpush1.msra.mxu0 %v4328
        %5554 = vmatprep.subr.mxu0 0.0
        %5555 = vmatpush1.msra.mxu0 %v4329
        %5556 = vmatprep.subr.mxu0 0.0
        %5557 = vmatpush1.msra.mxu0 %v4330
        %5558 = vmatprep.subr.mxu0 0.0
        %5559 = vmatpush1.msra.mxu0 %v4331
        %5560 = vmatprep.subr.mxu0 0.0
        %5561 = vmatpush1.msra.mxu0 %v4332
        %5562 = vmatprep.subr.mxu0 0.0
        %5563 = vmatpush1.msra.mxu0 %v4333
        %5564 = vmatprep.subr.mxu0 0.0
        %5565 = vmatpush1.msra.mxu0 %v4334
        %5566 = vmatprep.subr.mxu0 0.0
        %5567 = vmatpush1.msra.mxu0 %v4335
        %5568 = vmatprep.subr.mxu0 0.0
        %5569 = vmatpush1.msra.mxu0 %v4336
        %5570 = vmatprep.subr.mxu0 0.0
        %5571 = vmatpush1.msra.mxu0 %v4337
        %5572 = vmatprep.subr.mxu0 0.0
        %5573 = vmatpush1.msra.mxu0 %v4338
        %5574 = vmatprep.subr.mxu0 0.0
        %5575 = vmatpush1.msra.mxu0 %v4339
        %5576 = vmatprep.subr.mxu0 0.0
        %5577 = vmatpush1.msra.mxu0 %v4340
        %5578 = vmatprep.subr.mxu0 0.0
        %5579 = vmatpush1.msra.mxu0 %v4341
        %5580 = vmatprep.subr.mxu0 0.0
        %5581 = vmatpush1.msra.mxu0 %v4342
        %5582 = vmatprep.subr.mxu0 0.0
        %5583 = vmatpush1.msra.mxu0 %v4343
        %5584 = vmatprep.subr.mxu0 0.0
        %5585 = vmatpush1.msra.mxu0 %v4344
        %5586 = vmatprep.mubr.f32.mxu0 %v4501
        %5587 = vmatmul.mubr.f32.gmra.mrb[0].mxu0 %v4497
        %v5588 = vpop.f32.mrb[0].mxu0
        %v5589 = vadd.f32 %v5519, %v5588
        %v5590 = vpop.f32.mrb[0].mxu0
        %5591 = vdwg.mxu0
        %5592 = vmatprep.subr.mxu0 0.0
        %5593 = vmatpush1.msra.mxu0 %v4345
        %5594 = vmatprep.subr.mxu0 0.0
        %5595 = vmatpush1.msra.mxu0 %v4346
        %5596 = vmatprep.subr.mxu0 0.0
        %5597 = vmatpush1.msra.mxu0 %v4347
        %5598 = vmatprep.subr.mxu0 0.0
        %5599 = vmatpush1.msra.mxu0 %v4348
        %5600 = vmatprep.subr.mxu0 0.0
        %5601 = vmatpush1.msra.mxu0 %v4349
        %5602 = vmatprep.subr.mxu0 0.0
        %5603 = vmatpush1.msra.mxu0 %v4350
        %5604 = vmatprep.subr.mxu0 0.0
        %5605 = vmatpush1.msra.mxu0 %v4351
        %5606 = vmatprep.subr.mxu0 0.0
        %5607 = vmatpush1.msra.mxu0 %v4352
        %5608 = vmatprep.subr.mxu0 0.0
        %5609 = vmatpush1.msra.mxu0 %v4353
        %5610 = vmatprep.subr.mxu0 0.0
        %5611 = vmatpush1.msra.mxu0 %v4354
        %5612 = vmatprep.subr.mxu0 0.0
        %5613 = vmatpush1.msra.mxu0 %v4355
        %5614 = vmatprep.subr.mxu0 0.0
        %5615 = vmatpush1.msra.mxu0 %v4356
        %5616 = vmatprep.subr.mxu0 0.0
        %5617 = vmatpush1.msra.mxu0 %v4357
        %5618 = vmatprep.subr.mxu0 0.0
        %5619 = vmatpush1.msra.mxu0 %v4358
        %5620 = vmatprep.subr.mxu0 0.0
        %5621 = vmatpush1.msra.mxu0 %v4359
        %5622 = vmatprep.subr.mxu0 0.0
        %5623 = vmatpush1.msra.mxu0 %v4360
        %5624 = vmatprep.subr.mxu0 0.0
        %5625 = vmatpush1.msra.mxu0 %v4361
        %5626 = vmatprep.subr.mxu0 0.0
        %5627 = vmatpush1.msra.mxu0 %v4362
        %5628 = vmatprep.subr.mxu0 0.0
        %5629 = vmatpush1.msra.mxu0 %v4363
        %5630 = vmatprep.subr.mxu0 0.0
        %5631 = vmatpush1.msra.mxu0 %v4364
        %5632 = vmatprep.subr.mxu0 0.0
        %5633 = vmatpush1.msra.mxu0 %v4365
        %5634 = vmatprep.subr.mxu0 0.0
        %5635 = vmatpush1.msra.mxu0 %v4366
        %5636 = vmatprep.subr.mxu0 0.0
        %5637 = vmatpush1.msra.mxu0 %v4367
        %5638 = vmatprep.subr.mxu0 0.0
        %5639 = vmatpush1.msra.mxu0 %v4368
        %5640 = vmatprep.subr.mxu0 0.0
        %5641 = vmatpush1.msra.mxu0 %v4369
        %5642 = vmatprep.subr.mxu0 0.0
        %5643 = vmatpush1.msra.mxu0 %v4370
        %5644 = vmatprep.subr.mxu0 0.0
        %5645 = vmatpush1.msra.mxu0 %v4371
        %5646 = vmatprep.subr.mxu0 0.0
        %5647 = vmatpush1.msra.mxu0 %v4372
        %5648 = vmatprep.subr.mxu0 0.0
        %5649 = vmatpush1.msra.mxu0 %v4373
        %5650 = vmatprep.subr.mxu0 0.0
        %5651 = vmatpush1.msra.mxu0 %v4374
        %5652 = vmatprep.subr.mxu0 0.0
        %5653 = vmatpush1.msra.mxu0 %v4375
        %5654 = vmatprep.subr.mxu0 0.0
        %5655 = vmatpush1.msra.mxu0 %v4376
        %5656 = vmatprep.mubr.f32.mxu0 %v4509
        %5657 = vmatmul.mubr.f32.gmra.mrb[0].mxu0 %v4505
        %v5658 = vpop.f32.mrb[0].mxu0
        %v5659 = vadd.f32 %v5589, %v5658
        %v5660 = vpop.f32.mrb[0].mxu0
        %5661 = vdwg.mxu0
        %v5662 = vmax.f32 %v5659, 0.0
        %v5663 = vld [vmem:[%s9] sm:$0xff]
        %v5664 = vld [vmem:[%s9 + $0x8] sm:$0xff]
        %v5665 = vld [vmem:[%s9 + $0x10] sm:$0xff]
        %v5666 = vld [vmem:[%s9 + $0x18] sm:$0xff]
        %v5667 = vld [vmem:[%s9 + $0x20] sm:$0xff]
        %v5668 = vld [vmem:[%s9 + $0x28] sm:$0xff]
        %v5669 = vld [vmem:[%s9 + $0x30] sm:$0xff]
        %v5670 = vld [vmem:[%s9 + $0x38] sm:$0xff]
        %v5671 = vld [vmem:[%s9 + $0x40] sm:$0xff]
        %v5672 = vld [vmem:[%s9 + $0x48] sm:$0xff]
        %v5673 = vld [vmem:[%s9 + $0x50] sm:$0xff]
        %v5674 = vld [vmem:[%s9 + $0x58] sm:$0xff]
        %v5675 = vld [vmem:[%s9 + $0x60] sm:$0xff]
        %v5676 = vld [vmem:[%s9 + $0x68] sm:$0xff]
        %v5677 = vld [vmem:[%s9 + $0x70] sm:$0xff]
        %v5678 = vld [vmem:[%s9 + $0x78] sm:$0xff]
        %v5679 = vld [vmem:[#allocation12] sm:$0x1]
        %5680 = vmatprep.subr.mxu0 0.0
        %5681 = vmatpush1.msra.mxu0 %v5663
        %5682 = vmatprep.subr.mxu0 0.0
        %5683 = vmatpush1.msra.mxu0 %v5664
        %5684 = vmatprep.subr.mxu0 0.0
        %5685 = vmatpush1.msra.mxu0 %v5665
        %5686 = vmatprep.subr.mxu0 0.0
        %5687 = vmatpush1.msra.mxu0 %v5666
        %5688 = vmatprep.subr.mxu0 0.0
        %5689 = vmatpush1.msra.mxu0 %v5667
        %5690 = vmatprep.subr.mxu0 0.0
        %5691 = vmatpush1.msra.mxu0 %v5668
        %5692 = vmatprep.subr.mxu0 0.0
        %5693 = vmatpush1.msra.mxu0 %v5669
        %5694 = vmatprep.subr.mxu0 0.0
        %5695 = vmatpush1.msra.mxu0 %v5670
        %5696 = vmatprep.subr.mxu0 0.0
        %5697 = vmatpush1.msra.mxu0 %v5671
        %5698 = vmatprep.subr.mxu0 0.0
        %5699 = vmatpush1.msra.mxu0 %v5672
        %5700 = vmatprep.subr.mxu0 0.0
        %5701 = vmatpush1.msra.mxu0 %v5673
        %5702 = vmatprep.subr.mxu0 0.0
        %5703 = vmatpush1.msra.mxu0 %v5674
        %5704 = vmatprep.subr.mxu0 0.0
        %5705 = vmatpush1.msra.mxu0 %v5675
        %5706 = vmatprep.subr.mxu0 0.0
        %5707 = vmatpush1.msra.mxu0 %v5676
        %5708 = vmatprep.subr.mxu0 0.0
        %5709 = vmatpush1.msra.mxu0 %v5677
        %5710 = vmatprep.subr.mxu0 0.0
        %5711 = vmatpush1.msra.mxu0 %v5678
        %5712 = vmatprep.subr.mxu0 0.0
        %5713 = vmatpush1.msra.mxu0 0.0
        %5714 = vmatprep.subr.mxu0 0.0
        %5715 = vmatpush1.msra.mxu0 0.0
        %5716 = vmatprep.subr.mxu0 0.0
        %5717 = vmatpush1.msra.mxu0 0.0
        %5718 = vmatprep.subr.mxu0 0.0
        %5719 = vmatpush1.msra.mxu0 0.0
        %5720 = vmatprep.subr.mxu0 0.0
        %5721 = vmatpush1.msra.mxu0 0.0
        %5722 = vmatprep.subr.mxu0 0.0
        %5723 = vmatpush1.msra.mxu0 0.0
        %5724 = vmatprep.subr.mxu0 0.0
        %5725 = vmatpush1.msra.mxu0 0.0
        %5726 = vmatprep.subr.mxu0 0.0
        %5727 = vmatpush1.msra.mxu0 0.0
        %5728 = vmatprep.subr.mxu0 0.0
        %5729 = vmatpush1.msra.mxu0 0.0
        %5730 = vmatprep.subr.mxu0 0.0
        %5731 = vmatpush1.msra.mxu0 0.0
        %5732 = vmatprep.subr.mxu0 0.0
        %5733 = vmatpush1.msra.mxu0 0.0
        %5734 = vmatprep.subr.mxu0 0.0
        %5735 = vmatpush1.msra.mxu0 0.0
        %5736 = vmatprep.subr.mxu0 0.0
        %5737 = vmatpush1.msra.mxu0 0.0
        %5738 = vmatprep.subr.mxu0 0.0
        %5739 = vmatpush1.msra.mxu0 0.0
        %5740 = vmatprep.subr.mxu0 0.0
        %5741 = vmatpush1.msra.mxu0 0.0
        %5742 = vmatprep.subr.mxu0 0.0
        %5743 = vmatpush1.msra.mxu0 0.0
        %5744 = vmatprep.mubr.f32.mxu0 0.0
        %5745 = vmatmul.mubr.f32.gmra.mrb[0].mxu0 %v5662
        %v5746 = vpop.f32.mrb[0].mxu0
        %v5747 = vadd.f32 %v5679, %v5746
        %v5748 = vpop.f32.mrb[0].mxu0
        %5749 = vdwg.mxu0
        %vm5750 = vcmask 73728
        %5751 = vst.msk [vmem:[%s460] sm:$0x1] %vm5750, %v5747
        %s5752 = sand.u32 %s273, 1
        %s5753 = scalar_lea.sflag [#allocation5], %s5752
        %s5754 = sand.u32 %s273, 1
        %s5755 = scalar_lea.vmem [#allocation14], %s5754
        // Predicated region
        $region89: #{small_cnn_forward.1} parent=63 // pred_check
          %p5756 = pneg %p283
        $region90: #{small_cnn_forward.1} parent=63 // pred_check_branch
          %5758 = sbr.rel (%p5756) target = $region92
        $region91: #{small_cnn_forward.1} parent=63 // pred_region
          %s5760 = ssub.s32 16, 16
          %5761 = vsyncadd %s5753, %s5760
          %s5762 = smul.addr %s29, 16
          %s5763 = scalar_lea.hbm %s11, %s5762
          %s5765 = sshll.u32 %s5755, 4
          %s5766 = int_to_ptr.vmem [resolvable:$true] %s5765
          %5768 = dma.vmem_to_hbm [thread:$0]  %s5766, 16, %s5763, %s5753
        $region92: #{small_cnn_forward.1} parent=63 // pred_fallthru
          _
      $region64: #{small_cnn_forward.1} parent=5 // pred_fallthru
        _
      %p5769 = scmp.le.s32.totalorder 2, %s24
      // Predicated region
      $region93: #{small_cnn_forward.1} parent=5 // pred_check
        %p5770 = pneg %p5769
      $region94: #{small_cnn_forward.1} parent=5 // pred_check_branch
        %5772 = sbr.rel (%p5770) target = $region96
      $region95: #{small_cnn_forward.1} parent=5 // pred_region
        %s5773 = ssub.s32 %s24, 2
        // Predicated region
        $region97: #{small_cnn_forward.1} parent=95 // pred_check
          %p5774 = pneg %p289
        $region98: #{small_cnn_forward.1} parent=95 // pred_check_branch
          %5776 = sbr.rel (%p5774) target = $region100
        $region99: #{small_cnn_forward.1} parent=95 // pred_region
          %s5777 = sand.u32 %s274, 1
          %s5778 = scalar_lea.sflag [#allocation5], %s5777
          %s5779 = sand.u32 %s274, 1
          %s5780 = scalar_lea.vmem [#allocation14], %s5779
          %5781 = dma.done %s5778, 16
        $region100: #{small_cnn_forward.1} parent=95 // pred_fallthru
          _
      $region96: #{small_cnn_forward.1} parent=5 // pred_fallthru
        _
    $region6: #{small_cnn_forward.1} parent=1 // loop_footer
      %s28 = sadd.s32 1, %s24
    $region7: #{small_cnn_forward.1} parent=1 // loop_footer_branch
      %23 = sbr.rel target = $region3
    $region8: #{small_cnn_forward.1} parent=1 // loop_exit
      _
    %5782 = vsyncpa [#allocation4], 1
    %s5783 = scalar_lea.sflag [#allocation4], 1
    %5784 = vsyncpa %s5783, 1
    %5785 = vsyncpa [#allocation7], 1
    %5786 = vsyncpa [#allocation10], 1
    %5787 = vsyncpa [#allocation13], 1
    %5788 = vsyncpa [#allocation5], 1
    %s5789 = scalar_lea.sflag [#allocation5], 1
    %5790 = vsyncpa %s5789, 1

</llo_original>
